<compile_context>
chip_gen: v5e
topology: v5e:2x2
jax: 0.10.0
libtpu: 0.0.40
codegen_flags: <defaults>
</compile_context>

<pallas_src>
import jax
import jax.numpy as jnp
from jax import lax
from jax.experimental import pallas as pl
from jax.experimental.pallas import tpu as pltpu

# ----------------------------- configuration -----------------------------
HIDDEN      = 32          # GRU hidden_size
EMBED       = 32          # embed_size (== HIDDEN so per-layer GRU inputs stack)
N_LAYER     = 2           # GRU n_layer
VOCAB       = 16          # GRU "input_size" (embedding vocab & output dim)
S2H_IN      = 8           # SizeToHidden input_size
HIDDEN_DIMS = (16, 32)    # SizeToHidden hidden_dims
BATCH       = 4
B_PAD       = 8           # batch padded to the f32 sublane tile
SEQ         = 8
BN_EPS      = 1e-5

assert EMBED == HIDDEN, "stacked per-layer GRU weights require embed == hidden"


# ----------------------------- fused kernel -------------------------------
def fused_kernel(size_ref, ids_ref, *refs):
    """One program: s2h MLP -> h0; one-hot embedding; N_LAYER GRU with a single
    fused (H,3H) recurrent matmul per step; ReLU -> h2o -> log-softmax."""
    n_hidden = len(HIDDEN_DIMS)
    gi_scr = refs[-2]          # (SEQ*Bp, 3H) hoisted input projections
    x_scr = refs[-1]           # (SEQ*Bp, H)  per-layer output sequence
    out_ref = refs[-3]
    (wo_ref, bo_ref, emb_ref,
     wih_ref, whh_ref, bih_ref, bhn_ref,
     wh2o_ref, bh2o_ref) = refs[4 * n_hidden: 4 * n_hidden + 9]

    H = HIDDEN

    # validity mask: BN statistics use only the BATCH real rows of the padded batch
    row = lax.broadcasted_iota(jnp.int32, (B_PAD, 1), 0)
    valid = (row < BATCH).astype(jnp.float32)
    inv_b = 1.0 / BATCH

    # ---- SizeToHidden: (Linear -> BatchNorm1d(train) -> ReLU) x n -> Linear
    h = size_ref[...]                                              # (Bp, S2H_IN)
    for i in range(n_hidden):
        w_r, b_r, g_r, be_r = refs[4 * i: 4 * i + 4]
        h = jnp.dot(h, w_r[...], preferred_element_type=jnp.float32) + b_r[...]
        mean = jnp.sum(h * valid, axis=0, keepdims=True) * inv_b
        cen = (h - mean) * valid
        var = jnp.sum(cen * cen, axis=0, keepdims=True) * inv_b    # biased (train mode)
        h = (h - mean) * lax.rsqrt(var + BN_EPS) * g_r[...] + be_r[...]
        h = jnp.maximum(h, 0.0)                                    # ReLU
    # initial hidden state, shared by every GRU layer (unsqueeze+repeat fused away)
    h0 = jnp.dot(h, wo_ref[...], preferred_element_type=jnp.float32) + bo_ref[...]  # (Bp, H)

    # ---- embedding as one-hot matmul; rows time-major (row = t*Bp + b) ----
    ids = ids_ref[...]                                             # (SEQ*Bp, 1) int32
    iota = lax.broadcasted_iota(jnp.int32, (SEQ * B_PAD, VOCAB), 1)
    onehot = (ids == iota).astype(jnp.float32)                     # (SEQ*Bp, VOCAB)
    x_in = jnp.dot(onehot, emb_ref[...],
                   preferred_element_type=jnp.float32)             # (SEQ*Bp, E)

    # ---- multi-layer GRU: layer-major, fused gate matmuls ----
    for l in range(N_LAYER):
        # hoisted input projections for all timesteps; b_ih + [b_hr|b_hz|0] folded in
        gi_scr[...] = (jnp.dot(x_in, wih_ref[l],
                               preferred_element_type=jnp.float32) + bih_ref[l])
        whh_l = whh_ref[l]                                         # (H, 3H) fused W_hr|W_hz|W_hn
        b_hn = jnp.broadcast_to(bhn_ref[l], (B_PAD, H))            # pre-broadcast once / layer

        def step(t, h_t):
            off = pl.multiple_of(t * B_PAD, B_PAD)
            gi_t = gi_scr[pl.ds(off, B_PAD), :]                    # tile-aligned (Bp, 3H)
            gh = jnp.dot(h_t, whh_l, preferred_element_type=jnp.float32)  # ONE matmul / step
            r = jax.nn.sigmoid(gi_t[:, :H] + gh[:, :H])
            z = jax.nn.sigmoid(gi_t[:, H:2 * H] + gh[:, H:2 * H])
            n = jnp.tanh(gi_t[:, 2 * H:] + r * (gh[:, 2 * H:] + b_hn))
            h_new = (1.0 - z) * n + z * h_t
            x_scr[pl.ds(off, B_PAD), :] = h_new                    # tile-aligned store
            return h_new

        lax.fori_loop(0, SEQ, step, h0, unroll=True)
        x_in = x_scr[...]                                          # next layer's input

    # ---- h2o(F.relu(out)) + LogSoftmax(dim=-1), single store ----
    y = jnp.dot(jnp.maximum(x_in, 0.0), wh2o_ref[...],
                preferred_element_type=jnp.float32) + bh2o_ref[...]  # (SEQ*Bp, VOCAB)
    m = jnp.max(y, axis=-1, keepdims=True)
    lse = m + jnp.log(jnp.sum(jnp.exp(y - m), axis=-1, keepdims=True))
    out_ref[...] = y - lse


# ----------------------------- wrapper ------------------------------------
def forward(seq_tensor, size_interval, params):
    # time-major token ids, batch padded to B_PAD (pad ids = 0, dropped later)
    seq_tm = jnp.transpose(seq_tensor, (1, 0))                       # (SEQ, B)
    seq_tm = jnp.pad(seq_tm, ((0, 0), (0, B_PAD - BATCH)))           # (SEQ, Bp)
    ids = seq_tm.reshape(SEQ * B_PAD, 1).astype(jnp.int32)
    size_pad = jnp.pad(size_interval, ((0, B_PAD - BATCH), (0, 0)))  # (Bp, S2H_IN)

    args = [size_pad, ids]
    for (w, b, g, be) in params["s2h_layers"]:
        args += [w, b, g, be]
    args += [params["s2h_wo"], params["s2h_bo"], params["embedding"],
             params["wih_s"], params["whh_s"], params["bih_c"], params["bhn"],
             params["wh2oT"], params["bh2o"]]

    out2d = pl.pallas_call(
        fused_kernel,
        out_shape=jax.ShapeDtypeStruct((SEQ * B_PAD, VOCAB), jnp.float32),
        scratch_shapes=[pltpu.VMEM((SEQ * B_PAD, 3 * HIDDEN), jnp.float32),
                        pltpu.VMEM((SEQ * B_PAD, HIDDEN), jnp.float32)],
    )(*args)
    return out2d.reshape(SEQ, B_PAD, VOCAB)[:, :BATCH, :]


# ----------------------------- pure-JAX reference -------------------------
def reference(seq_tensor, size_interval, params):
    h = size_interval
    for (w, b, g, be) in params["s2h_layers"]:
        h = h @ w + b
        mean = h.mean(0, keepdims=True)
        var = ((h - mean) ** 2).mean(0, keepdims=True)
        h = (h - mean) / jnp.sqrt(var + BN_EPS) * g + be
        h = jnp.maximum(h, 0.0)
    hb = h @ params["s2h_wo"] + params["s2h_bo"]
    hidden = [hb for _ in range(N_LAYER)]

    emb = params["embedding"][seq_tensor]                        # (B, S, E)
    xs = jnp.transpose(emb, (1, 0, 2))                           # (S, B, E)
    outs = []
    for t in range(SEQ):
        inp = xs[t]
        for l in range(N_LAYER):
            wih, whh = params["w_ih"][l], params["w_hh"][l]
            bih, bhh = params["b_ih"][l], params["b_hh"][l]
            r = jax.nn.sigmoid(inp @ wih[0] + bih[0] + hidden[l] @ whh[0] + bhh[0])
            z = jax.nn.sigmoid(inp @ wih[1] + bih[1] + hidden[l] @ whh[1] + bhh[1])
            n = jnp.tanh(inp @ wih[2] + bih[2] + r * (hidden[l] @ whh[2] + bhh[2]))
            hidden[l] = (1.0 - z) * n + z * hidden[l]
            inp = hidden[l]
        y = jnp.maximum(inp, 0.0) @ params["wh2oT"] + params["bh2o"]
        outs.append(jax.nn.log_softmax(y, axis=-1))
    return jnp.stack(outs, 0)


# ----------------------------- parameters ---------------------------------
def init_params(key):
    def u(key, shape, scale=0.1):
        return jax.random.uniform(key, shape, jnp.float32, -scale, scale)

    keys = iter(jax.random.split(key, 32))
    params = {}

    # SizeToHidden: Linear(in->h) + BN(h) per hidden dim, then Linear(->HIDDEN)
    s2h_layers = []
    in_dim = S2H_IN
    for h_dim in HIDDEN_DIMS:
        w = u(next(keys), (in_dim, h_dim))          # pre-transposed (in, out)
        b = u(next(keys), (1, h_dim))
        g = jnp.ones((1, h_dim), jnp.float32)       # BN weight
        be = jnp.zeros((1, h_dim), jnp.float32)     # BN bias
        s2h_layers.append((w, b, g, be))
        in_dim = h_dim
    params["s2h_layers"] = s2h_layers
    params["s2h_wo"] = u(next(keys), (in_dim, HIDDEN))
    params["s2h_bo"] = u(next(keys), (1, HIDDEN))

    # GRU weights, per-gate (r, z, n), pre-transposed (in, out) — reference layout
    params["w_ih"] = u(next(keys), (N_LAYER, 3, EMBED, HIDDEN))
    params["w_hh"] = u(next(keys), (N_LAYER, 3, HIDDEN, HIDDEN))
    params["b_ih"] = u(next(keys), (N_LAYER, 3, 1, HIDDEN))
    params["b_hh"] = u(next(keys), (N_LAYER, 3, 1, HIDDEN))

    # Kernel layout: gates stacked along the output dim (one fused matmul each)
    w_ih, w_hh, b_ih, b_hh = (params["w_ih"], params["w_hh"],
                              params["b_ih"], params["b_hh"])
    params["wih_s"] = jnp.concatenate([w_ih[:, 0], w_ih[:, 1], w_ih[:, 2]], axis=-1)  # (L, E, 3H)
    params["whh_s"] = jnp.concatenate([w_hh[:, 0], w_hh[:, 1], w_hh[:, 2]], axis=-1)  # (L, H, 3H)
    # b_ih + [b_hr | b_hz | 0] folded; b_hn kept separate (multiplied by r)
    params["bih_c"] = jnp.concatenate([b_ih[:, 0] + b_hh[:, 0],
                                       b_ih[:, 1] + b_hh[:, 1],
                                       b_ih[:, 2]], axis=-1)                          # (L, 1, 3H)
    params["bhn"] = b_hh[:, 2]                                                        # (L, 1, H)

    # h2o Linear (hidden -> VOCAB), pre-transposed
    params["wh2oT"] = u(next(keys), (HIDDEN, VOCAB))
    params["bh2o"] = u(next(keys), (1, VOCAB))

    # Embedding table
    params["embedding"] = u(next(keys), (VOCAB, EMBED), scale=1.0)
    return params


# ----------------------------- main ----------------------------------------
if __name__ == "__main__":
    key = jax.random.PRNGKey(0)
    kp, ks, kz = jax.random.split(key, 3)
    params = init_params(kp)

    seq_tensor = jax.random.randint(ks, (BATCH, SEQ), 0, VOCAB, dtype=jnp.int32)
    size_interval = jax.random.uniform(kz, (BATCH, S2H_IN), jnp.float32, -1.0, 1.0)

    out = forward(seq_tensor, size_interval, params)
    out = jax.block_until_ready(out)

    ref = reference(seq_tensor, size_interval, params)
    assert out.shape == (SEQ, BATCH, VOCAB)
    assert jnp.allclose(out, ref, atol=1e-4, rtol=1e-4), float(jnp.max(jnp.abs(out - ref)))

    print("KERNEL_OK")
</pallas_src>

<mosaic_0001>
module attributes {stable_mosaic.version = 11 : i64} {
  func.func @fused_kernel(%arg0: memref<8x8xf32, #tpu.memory_space<vmem>>, %arg1: memref<64x1xi32, #tpu.memory_space<vmem>>, %arg2: memref<8x16xf32, #tpu.memory_space<vmem>>, %arg3: memref<1x16xf32, #tpu.memory_space<vmem>>, %arg4: memref<1x16xf32, #tpu.memory_space<vmem>>, %arg5: memref<1x16xf32, #tpu.memory_space<vmem>>, %arg6: memref<16x32xf32, #tpu.memory_space<vmem>>, %arg7: memref<1x32xf32, #tpu.memory_space<vmem>>, %arg8: memref<1x32xf32, #tpu.memory_space<vmem>>, %arg9: memref<1x32xf32, #tpu.memory_space<vmem>>, %arg10: memref<32x32xf32, #tpu.memory_space<vmem>>, %arg11: memref<1x32xf32, #tpu.memory_space<vmem>>, %arg12: memref<16x32xf32, #tpu.memory_space<vmem>>, %arg13: memref<2x32x96xf32, #tpu.memory_space<vmem>>, %arg14: memref<2x32x96xf32, #tpu.memory_space<vmem>>, %arg15: memref<2x1x96xf32, #tpu.memory_space<vmem>>, %arg16: memref<2x1x32xf32, #tpu.memory_space<vmem>>, %arg17: memref<32x16xf32, #tpu.memory_space<vmem>>, %arg18: memref<1x16xf32, #tpu.memory_space<vmem>>, %arg19: memref<64x16xf32, #tpu.memory_space<vmem>>, %arg20: memref<64x96xf32, #tpu.memory_space<vmem>>, %arg21: memref<64x32xf32, #tpu.memory_space<vmem>>) attributes {dimension_semantics = [], scalar_prefetch = 0 : i64, scratch_operands = 2 : i64, tpu.core_type = #tpu.core_type<tc>} {
    %0 = tpu.iota {dimensions = array<i32: 0>} : vector<8x1xi32>
    %c4_i32 = arith.constant 4 : i32
    %1 = vector.broadcast %c4_i32 : i32 to vector<8x1xi32>
    %2 = arith.cmpi slt, %0, %1 : vector<8x1xi32>
    %3 = arith.extui %2 : vector<8x1xi1> to vector<8x1xi32>
    %4 = arith.sitofp %3 : vector<8x1xi32> to vector<8x1xf32>
    %c0 = arith.constant 0 : index
    %c0_0 = arith.constant 0 : index
    %5 = vector.load %arg0[%c0, %c0_0] : memref<8x8xf32, #tpu.memory_space<vmem>>, vector<8x8xf32>
    %c0_1 = arith.constant 0 : index
    %c0_2 = arith.constant 0 : index
    %6 = vector.load %arg2[%c0_1, %c0_2] : memref<8x16xf32, #tpu.memory_space<vmem>>, vector<8x16xf32>
    %cst = arith.constant dense<0.000000e+00> : vector<8x16xf32>
    %7 = tpu.matmul %5, %6, %cst {dimension_numbers = #tpu.dot_dimension_numbers<[1], [0], [0], [1], [0, 0, 1, 1], [], []>} : vector<8x8xf32>, vector<8x16xf32>, vector<8x16xf32> -> vector<8x16xf32>
    %c0_3 = arith.constant 0 : index
    %c0_4 = arith.constant 0 : index
    %8 = vector.load %arg3[%c0_3, %c0_4] : memref<1x16xf32, #tpu.memory_space<vmem>>, vector<1x16xf32>
    %9 = vector.broadcast %8 : vector<1x16xf32> to vector<8x16xf32>
    %10 = arith.addf %7, %9 : vector<8x16xf32>
    %11 = vector.broadcast %4 : vector<8x1xf32> to vector<8x16xf32>
    %12 = arith.mulf %10, %11 : vector<8x16xf32>
    %cst_5 = arith.constant dense<0.000000e+00> : vector<16xf32>
    %13 = vector.multi_reduction <add>, %12, %cst_5 [0] : vector<8x16xf32> to vector<16xf32>
    %14 = vector.shape_cast %13 : vector<16xf32> to vector<1x16xf32>
    %cst_6 = arith.constant 2.500000e-01 : f32
    %15 = vector.broadcast %cst_6 : f32 to vector<1x16xf32>
    %16 = arith.mulf %14, %15 : vector<1x16xf32>
    %17 = vector.broadcast %16 : vector<1x16xf32> to vector<8x16xf32>
    %18 = arith.subf %10, %17 : vector<8x16xf32>
    %19 = vector.broadcast %4 : vector<8x1xf32> to vector<8x16xf32>
    %20 = arith.mulf %18, %19 : vector<8x16xf32>
    %21 = arith.mulf %20, %20 : vector<8x16xf32>
    %cst_7 = arith.constant dense<0.000000e+00> : vector<16xf32>
    %22 = vector.multi_reduction <add>, %21, %cst_7 [0] : vector<8x16xf32> to vector<16xf32>
    %23 = vector.shape_cast %22 : vector<16xf32> to vector<1x16xf32>
    %cst_8 = arith.constant 2.500000e-01 : f32
    %24 = vector.broadcast %cst_8 : f32 to vector<1x16xf32>
    %25 = arith.mulf %23, %24 : vector<1x16xf32>
    %26 = vector.broadcast %16 : vector<1x16xf32> to vector<8x16xf32>
    %27 = arith.subf %10, %26 : vector<8x16xf32>
    %cst_9 = arith.constant 9.99999974E-6 : f32
    %28 = vector.broadcast %cst_9 : f32 to vector<1x16xf32>
    %29 = arith.addf %25, %28 : vector<1x16xf32>
    %30 = math.rsqrt %29 : vector<1x16xf32>
    %31 = vector.broadcast %30 : vector<1x16xf32> to vector<8x16xf32>
    %32 = arith.mulf %27, %31 : vector<8x16xf32>
    %c0_10 = arith.constant 0 : index
    %c0_11 = arith.constant 0 : index
    %33 = vector.load %arg4[%c0_10, %c0_11] : memref<1x16xf32, #tpu.memory_space<vmem>>, vector<1x16xf32>
    %34 = vector.broadcast %33 : vector<1x16xf32> to vector<8x16xf32>
    %35 = arith.mulf %32, %34 : vector<8x16xf32>
    %c0_12 = arith.constant 0 : index
    %c0_13 = arith.constant 0 : index
    %36 = vector.load %arg5[%c0_12, %c0_13] : memref<1x16xf32, #tpu.memory_space<vmem>>, vector<1x16xf32>
    %37 = vector.broadcast %36 : vector<1x16xf32> to vector<8x16xf32>
    %38 = arith.addf %35, %37 : vector<8x16xf32>
    %cst_14 = arith.constant 0.000000e+00 : f32
    %39 = vector.broadcast %cst_14 : f32 to vector<8x16xf32>
    %40 = arith.maximumf %38, %39 : vector<8x16xf32>
    %c0_15 = arith.constant 0 : index
    %c0_16 = arith.constant 0 : index
    %41 = vector.load %arg6[%c0_15, %c0_16] : memref<16x32xf32, #tpu.memory_space<vmem>>, vector<16x32xf32>
    %cst_17 = arith.constant dense<0.000000e+00> : vector<8x32xf32>
    %42 = tpu.matmul %40, %41, %cst_17 {dimension_numbers = #tpu.dot_dimension_numbers<[1], [0], [0], [1], [0, 0, 1, 1], [], []>} : vector<8x16xf32>, vector<16x32xf32>, vector<8x32xf32> -> vector<8x32xf32>
    %c0_18 = arith.constant 0 : index
    %c0_19 = arith.constant 0 : index
    %43 = vector.load %arg7[%c0_18, %c0_19] : memref<1x32xf32, #tpu.memory_space<vmem>>, vector<1x32xf32>
    %44 = vector.broadcast %43 : vector<1x32xf32> to vector<8x32xf32>
    %45 = arith.addf %42, %44 : vector<8x32xf32>
    %46 = vector.broadcast %4 : vector<8x1xf32> to vector<8x32xf32>
    %47 = arith.mulf %45, %46 : vector<8x32xf32>
    %cst_20 = arith.constant dense<0.000000e+00> : vector<32xf32>
    %48 = vector.multi_reduction <add>, %47, %cst_20 [0] : vector<8x32xf32> to vector<32xf32>
    %49 = vector.shape_cast %48 : vector<32xf32> to vector<1x32xf32>
    %cst_21 = arith.constant 2.500000e-01 : f32
    %50 = vector.broadcast %cst_21 : f32 to vector<1x32xf32>
    %51 = arith.mulf %49, %50 : vector<1x32xf32>
    %52 = vector.broadcast %51 : vector<1x32xf32> to vector<8x32xf32>
    %53 = arith.subf %45, %52 : vector<8x32xf32>
    %54 = vector.broadcast %4 : vector<8x1xf32> to vector<8x32xf32>
    %55 = arith.mulf %53, %54 : vector<8x32xf32>
    %56 = arith.mulf %55, %55 : vector<8x32xf32>
    %cst_22 = arith.constant dense<0.000000e+00> : vector<32xf32>
    %57 = vector.multi_reduction <add>, %56, %cst_22 [0] : vector<8x32xf32> to vector<32xf32>
    %58 = vector.shape_cast %57 : vector<32xf32> to vector<1x32xf32>
    %cst_23 = arith.constant 2.500000e-01 : f32
    %59 = vector.broadcast %cst_23 : f32 to vector<1x32xf32>
    %60 = arith.mulf %58, %59 : vector<1x32xf32>
    %61 = vector.broadcast %51 : vector<1x32xf32> to vector<8x32xf32>
    %62 = arith.subf %45, %61 : vector<8x32xf32>
    %cst_24 = arith.constant 9.99999974E-6 : f32
    %63 = vector.broadcast %cst_24 : f32 to vector<1x32xf32>
    %64 = arith.addf %60, %63 : vector<1x32xf32>
    %65 = math.rsqrt %64 : vector<1x32xf32>
    %66 = vector.broadcast %65 : vector<1x32xf32> to vector<8x32xf32>
    %67 = arith.mulf %62, %66 : vector<8x32xf32>
    %c0_25 = arith.constant 0 : index
    %c0_26 = arith.constant 0 : index
    %68 = vector.load %arg8[%c0_25, %c0_26] : memref<1x32xf32, #tpu.memory_space<vmem>>, vector<1x32xf32>
    %69 = vector.broadcast %68 : vector<1x32xf32> to vector<8x32xf32>
    %70 = arith.mulf %67, %69 : vector<8x32xf32>
    %c0_27 = arith.constant 0 : index
    %c0_28 = arith.constant 0 : index
    %71 = vector.load %arg9[%c0_27, %c0_28] : memref<1x32xf32, #tpu.memory_space<vmem>>, vector<1x32xf32>
    %72 = vector.broadcast %71 : vector<1x32xf32> to vector<8x32xf32>
    %73 = arith.addf %70, %72 : vector<8x32xf32>
    %cst_29 = arith.constant 0.000000e+00 : f32
    %74 = vector.broadcast %cst_29 : f32 to vector<8x32xf32>
    %75 = arith.maximumf %73, %74 : vector<8x32xf32>
    %c0_30 = arith.constant 0 : index
    %c0_31 = arith.constant 0 : index
    %76 = vector.load %arg10[%c0_30, %c0_31] : memref<32x32xf32, #tpu.memory_space<vmem>>, vector<32x32xf32>
    %cst_32 = arith.constant dense<0.000000e+00> : vector<8x32xf32>
    %77 = tpu.matmul %75, %76, %cst_32 {dimension_numbers = #tpu.dot_dimension_numbers<[1], [0], [0], [1], [0, 0, 1, 1], [], []>} : vector<8x32xf32>, vector<32x32xf32>, vector<8x32xf32> -> vector<8x32xf32>
    %c0_33 = arith.constant 0 : index
    %c0_34 = arith.constant 0 : index
    %78 = vector.load %arg11[%c0_33, %c0_34] : memref<1x32xf32, #tpu.memory_space<vmem>>, vector<1x32xf32>
    %79 = vector.broadcast %78 : vector<1x32xf32> to vector<8x32xf32>
    %80 = arith.addf %77, %79 : vector<8x32xf32>
    %c0_35 = arith.constant 0 : index
    %c0_36 = arith.constant 0 : index
    %81 = vector.load %arg1[%c0_35, %c0_36] : memref<64x1xi32, #tpu.memory_space<vmem>>, vector<64x1xi32>
    %82 = tpu.iota {dimensions = array<i32: 1>} : vector<64x16xi32>
    %83 = vector.broadcast %81 : vector<64x1xi32> to vector<64x16xi32>
    %84 = arith.cmpi eq, %83, %82 : vector<64x16xi32>
    %85 = arith.extui %84 : vector<64x16xi1> to vector<64x16xi32>
    %86 = arith.sitofp %85 : vector<64x16xi32> to vector<64x16xf32>
    %c0_37 = arith.constant 0 : index
    %c0_38 = arith.constant 0 : index
    %87 = vector.load %arg12[%c0_37, %c0_38] : memref<16x32xf32, #tpu.memory_space<vmem>>, vector<16x32xf32>
    %cst_39 = arith.constant dense<0.000000e+00> : vector<64x32xf32>
    %88 = tpu.matmul %86, %87, %cst_39 {dimension_numbers = #tpu.dot_dimension_numbers<[1], [0], [0], [1], [0, 0, 1, 1], [], []>} : vector<64x16xf32>, vector<16x32xf32>, vector<64x32xf32> -> vector<64x32xf32>
    %c0_40 = arith.constant 0 : index
    %c0_41 = arith.constant 0 : index
    %c0_42 = arith.constant 0 : index
    %89 = vector.load %arg13[%c0_40, %c0_41, %c0_42] : memref<2x32x96xf32, #tpu.memory_space<vmem>>, vector<1x32x96xf32>
    %90 = vector.shape_cast %89 : vector<1x32x96xf32> to vector<32x96xf32>
    %cst_43 = arith.constant dense<0.000000e+00> : vector<64x96xf32>
    %91 = tpu.matmul %88, %90, %cst_43 {dimension_numbers = #tpu.dot_dimension_numbers<[1], [0], [0], [1], [0, 0, 1, 1], [], []>} : vector<64x32xf32>, vector<32x96xf32>, vector<64x96xf32> -> vector<64x96xf32>
    %c0_44 = arith.constant 0 : index
    %c0_45 = arith.constant 0 : index
    %c0_46 = arith.constant 0 : index
    %92 = vector.load %arg15[%c0_44, %c0_45, %c0_46] : memref<2x1x96xf32, #tpu.memory_space<vmem>>, vector<1x1x96xf32>
    %93 = vector.shape_cast %92 : vector<1x1x96xf32> to vector<1x96xf32>
    %94 = vector.broadcast %93 : vector<1x96xf32> to vector<64x96xf32>
    %95 = arith.addf %91, %94 : vector<64x96xf32>
    %c0_47 = arith.constant 0 : index
    %c0_48 = arith.constant 0 : index
    %96 = vector.load %arg20[%c0_47, %c0_48] : memref<64x96xf32, #tpu.memory_space<vmem>>, vector<64x96xf32>
    tpu.vector_store %arg20[%c0_47, %c0_48], %95 {strides = array<i32>} : memref<64x96xf32, #tpu.memory_space<vmem>>, vector<64x96xf32>,
    %c0_49 = arith.constant 0 : index
    %c0_50 = arith.constant 0 : index
    %c0_51 = arith.constant 0 : index
    %97 = vector.load %arg14[%c0_49, %c0_50, %c0_51] : memref<2x32x96xf32, #tpu.memory_space<vmem>>, vector<1x32x96xf32>
    %98 = vector.shape_cast %97 : vector<1x32x96xf32> to vector<32x96xf32>
    %c0_52 = arith.constant 0 : index
    %c0_53 = arith.constant 0 : index
    %c0_54 = arith.constant 0 : index
    %99 = vector.load %arg16[%c0_52, %c0_53, %c0_54] : memref<2x1x32xf32, #tpu.memory_space<vmem>>, vector<1x1x32xf32>
    %100 = vector.shape_cast %99 : vector<1x1x32xf32> to vector<1x32xf32>
    %101 = vector.shape_cast %100 : vector<1x32xf32> to vector<1x32xf32>
    %102 = vector.broadcast %101 : vector<1x32xf32> to vector<8x32xf32>
    %c0_i32 = arith.constant 0 : i32
    %c8_i32 = arith.constant 8 : i32
    %103 = arith.muli %c0_i32, %c8_i32 : i32
    %104 = tpu.assume_multiple %103, 8 : i32
    %105 = arith.index_cast %104 : i32 to index
    %c0_55 = arith.constant 0 : index
    %106 = vector.load %arg20[%105, %c0_55] : memref<64x96xf32, #tpu.memory_space<vmem>>, vector<8x96xf32>
    %cst_56 = arith.constant dense<0.000000e+00> : vector<8x96xf32>
    %107 = tpu.matmul %80, %98, %cst_56 {dimension_numbers = #tpu.dot_dimension_numbers<[1], [0], [0], [1], [0, 0, 1, 1], [], []>} : vector<8x32xf32>, vector<32x96xf32>, vector<8x96xf32> -> vector<8x96xf32>
    %108 = vector.extract_strided_slice %106 {offsets = [0, 0], sizes = [8, 32], strides = [1, 1]} : vector<8x96xf32> to vector<8x32xf32>
    %109 = vector.extract_strided_slice %107 {offsets = [0, 0], sizes = [8, 32], strides = [1, 1]} : vector<8x96xf32> to vector<8x32xf32>
    %110 = arith.addf %108, %109 : vector<8x32xf32>
    %111 = arith.negf %110 : vector<8x32xf32>
    %112 = math.exp %111 : vector<8x32xf32>
    %cst_57 = arith.constant 1.000000e+00 : f32
    %113 = vector.broadcast %cst_57 : f32 to vector<8x32xf32>
    %114 = arith.addf %113, %112 : vector<8x32xf32>
    %115 = arith.divf %113, %114 : vector<8x32xf32>
    %116 = vector.extract_strided_slice %106 {offsets = [0, 32], sizes = [8, 32], strides = [1, 1]} : vector<8x96xf32> to vector<8x32xf32>
    %117 = vector.extract_strided_slice %107 {offsets = [0, 32], sizes = [8, 32], strides = [1, 1]} : vector<8x96xf32> to vector<8x32xf32>
    %118 = arith.addf %116, %117 : vector<8x32xf32>
    %119 = arith.negf %118 : vector<8x32xf32>
    %120 = math.exp %119 : vector<8x32xf32>
    %cst_58 = arith.constant 1.000000e+00 : f32
    %121 = vector.broadcast %cst_58 : f32 to vector<8x32xf32>
    %122 = arith.addf %121, %120 : vector<8x32xf32>
    %123 = arith.divf %121, %122 : vector<8x32xf32>
    %124 = vector.extract_strided_slice %106 {offsets = [0, 64], sizes = [8, 32], strides = [1, 1]} : vector<8x96xf32> to vector<8x32xf32>
    %125 = vector.extract_strided_slice %107 {offsets = [0, 64], sizes = [8, 32], strides = [1, 1]} : vector<8x96xf32> to vector<8x32xf32>
    %126 = arith.addf %125, %102 : vector<8x32xf32>
    %127 = arith.mulf %115, %126 : vector<8x32xf32>
    %128 = arith.addf %124, %127 : vector<8x32xf32>
    %129 = math.tanh %128 : vector<8x32xf32>
    %cst_59 = arith.constant 1.000000e+00 : f32
    %130 = vector.broadcast %cst_59 : f32 to vector<8x32xf32>
    %131 = arith.subf %130, %123 : vector<8x32xf32>
    %132 = arith.mulf %131, %129 : vector<8x32xf32>
    %133 = arith.mulf %123, %80 : vector<8x32xf32>
    %134 = arith.addf %132, %133 : vector<8x32xf32>
    %135 = arith.index_cast %104 : i32 to index
    %c0_60 = arith.constant 0 : index
    %136 = vector.load %arg21[%135, %c0_60] : memref<64x32xf32, #tpu.memory_space<vmem>>, vector<8x32xf32>
    tpu.vector_store %arg21[%135, %c0_60], %134 {strides = array<i32>} : memref<64x32xf32, #tpu.memory_space<vmem>>, vector<8x32xf32>,
    %c1_i32 = arith.constant 1 : i32
    %c8_i32_61 = arith.constant 8 : i32
    %137 = arith.muli %c1_i32, %c8_i32_61 : i32
    %138 = tpu.assume_multiple %137, 8 : i32
    %139 = arith.index_cast %138 : i32 to index
    %c0_62 = arith.constant 0 : index
    %140 = vector.load %arg20[%139, %c0_62] : memref<64x96xf32, #tpu.memory_space<vmem>>, vector<8x96xf32>
    %cst_63 = arith.constant dense<0.000000e+00> : vector<8x96xf32>
    %141 = tpu.matmul %134, %98, %cst_63 {dimension_numbers = #tpu.dot_dimension_numbers<[1], [0], [0], [1], [0, 0, 1, 1], [], []>} : vector<8x32xf32>, vector<32x96xf32>, vector<8x96xf32> -> vector<8x96xf32>
    %142 = vector.extract_strided_slice %140 {offsets = [0, 0], sizes = [8, 32], strides = [1, 1]} : vector<8x96xf32> to vector<8x32xf32>
    %143 = vector.extract_strided_slice %141 {offsets = [0, 0], sizes = [8, 32], strides = [1, 1]} : vector<8x96xf32> to vector<8x32xf32>
    %144 = arith.addf %142, %143 : vector<8x32xf32>
    %145 = arith.negf %144 : vector<8x32xf32>
    %146 = math.exp %145 : vector<8x32xf32>
    %cst_64 = arith.constant 1.000000e+00 : f32
    %147 = vector.broadcast %cst_64 : f32 to vector<8x32xf32>
    %148 = arith.addf %147, %146 : vector<8x32xf32>
    %149 = arith.divf %147, %148 : vector<8x32xf32>
    %150 = vector.extract_strided_slice %140 {offsets = [0, 32], sizes = [8, 32], strides = [1, 1]} : vector<8x96xf32> to vector<8x32xf32>
    %151 = vector.extract_strided_slice %141 {offsets = [0, 32], sizes = [8, 32], strides = [1, 1]} : vector<8x96xf32> to vector<8x32xf32>
    %152 = arith.addf %150, %151 : vector<8x32xf32>
    %153 = arith.negf %152 : vector<8x32xf32>
    %154 = math.exp %153 : vector<8x32xf32>
    %cst_65 = arith.constant 1.000000e+00 : f32
    %155 = vector.broadcast %cst_65 : f32 to vector<8x32xf32>
    %156 = arith.addf %155, %154 : vector<8x32xf32>
    %157 = arith.divf %155, %156 : vector<8x32xf32>
    %158 = vector.extract_strided_slice %140 {offsets = [0, 64], sizes = [8, 32], strides = [1, 1]} : vector<8x96xf32> to vector<8x32xf32>
    %159 = vector.extract_strided_slice %141 {offsets = [0, 64], sizes = [8, 32], strides = [1, 1]} : vector<8x96xf32> to vector<8x32xf32>
    %160 = arith.addf %159, %102 : vector<8x32xf32>
    %161 = arith.mulf %149, %160 : vector<8x32xf32>
    %162 = arith.addf %158, %161 : vector<8x32xf32>
    %163 = math.tanh %162 : vector<8x32xf32>
    %cst_66 = arith.constant 1.000000e+00 : f32
    %164 = vector.broadcast %cst_66 : f32 to vector<8x32xf32>
    %165 = arith.subf %164, %157 : vector<8x32xf32>
    %166 = arith.mulf %165, %163 : vector<8x32xf32>
    %167 = arith.mulf %157, %134 : vector<8x32xf32>
    %168 = arith.addf %166, %167 : vector<8x32xf32>
    %169 = arith.index_cast %138 : i32 to index
    %c0_67 = arith.constant 0 : index
    %170 = vector.load %arg21[%169, %c0_67] : memref<64x32xf32, #tpu.memory_space<vmem>>, vector<8x32xf32>
    tpu.vector_store %arg21[%169, %c0_67], %168 {strides = array<i32>} : memref<64x32xf32, #tpu.memory_space<vmem>>, vector<8x32xf32>,
    %c2_i32 = arith.constant 2 : i32
    %c8_i32_68 = arith.constant 8 : i32
    %171 = arith.muli %c2_i32, %c8_i32_68 : i32
    %172 = tpu.assume_multiple %171, 8 : i32
    %173 = arith.index_cast %172 : i32 to index
    %c0_69 = arith.constant 0 : index
    %174 = vector.load %arg20[%173, %c0_69] : memref<64x96xf32, #tpu.memory_space<vmem>>, vector<8x96xf32>
    %cst_70 = arith.constant dense<0.000000e+00> : vector<8x96xf32>
    %175 = tpu.matmul %168, %98, %cst_70 {dimension_numbers = #tpu.dot_dimension_numbers<[1], [0], [0], [1], [0, 0, 1, 1], [], []>} : vector<8x32xf32>, vector<32x96xf32>, vector<8x96xf32> -> vector<8x96xf32>
    %176 = vector.extract_strided_slice %174 {offsets = [0, 0], sizes = [8, 32], strides = [1, 1]} : vector<8x96xf32> to vector<8x32xf32>
    %177 = vector.extract_strided_slice %175 {offsets = [0, 0], sizes = [8, 32], strides = [1, 1]} : vector<8x96xf32> to vector<8x32xf32>
    %178 = arith.addf %176, %177 : vector<8x32xf32>
    %179 = arith.negf %178 : vector<8x32xf32>
    %180 = math.exp %179 : vector<8x32xf32>
    %cst_71 = arith.constant 1.000000e+00 : f32
    %181 = vector.broadcast %cst_71 : f32 to vector<8x32xf32>
    %182 = arith.addf %181, %180 : vector<8x32xf32>
    %183 = arith.divf %181, %182 : vector<8x32xf32>
    %184 = vector.extract_strided_slice %174 {offsets = [0, 32], sizes = [8, 32], strides = [1, 1]} : vector<8x96xf32> to vector<8x32xf32>
    %185 = vector.extract_strided_slice %175 {offsets = [0, 32], sizes = [8, 32], strides = [1, 1]} : vector<8x96xf32> to vector<8x32xf32>
    %186 = arith.addf %184, %185 : vector<8x32xf32>
    %187 = arith.negf %186 : vector<8x32xf32>
    %188 = math.exp %187 : vector<8x32xf32>
    %cst_72 = arith.constant 1.000000e+00 : f32
    %189 = vector.broadcast %cst_72 : f32 to vector<8x32xf32>
    %190 = arith.addf %189, %188 : vector<8x32xf32>
    %191 = arith.divf %189, %190 : vector<8x32xf32>
    %192 = vector.extract_strided_slice %174 {offsets = [0, 64], sizes = [8, 32], strides = [1, 1]} : vector<8x96xf32> to vector<8x32xf32>
    %193 = vector.extract_strided_slice %175 {offsets = [0, 64], sizes = [8, 32], strides = [1, 1]} : vector<8x96xf32> to vector<8x32xf32>
    %194 = arith.addf %193, %102 : vector<8x32xf32>
    %195 = arith.mulf %183, %194 : vector<8x32xf32>
    %196 = arith.addf %192, %195 : vector<8x32xf32>
    %197 = math.tanh %196 : vector<8x32xf32>
    %cst_73 = arith.constant 1.000000e+00 : f32
    %198 = vector.broadcast %cst_73 : f32 to vector<8x32xf32>
    %199 = arith.subf %198, %191 : vector<8x32xf32>
    %200 = arith.mulf %199, %197 : vector<8x32xf32>
    %201 = arith.mulf %191, %168 : vector<8x32xf32>
    %202 = arith.addf %200, %201 : vector<8x32xf32>
    %203 = arith.index_cast %172 : i32 to index
    %c0_74 = arith.constant 0 : index
    %204 = vector.load %arg21[%203, %c0_74] : memref<64x32xf32, #tpu.memory_space<vmem>>, vector<8x32xf32>
    tpu.vector_store %arg21[%203, %c0_74], %202 {strides = array<i32>} : memref<64x32xf32, #tpu.memory_space<vmem>>, vector<8x32xf32>,
    %c3_i32 = arith.constant 3 : i32
    %c8_i32_75 = arith.constant 8 : i32
    %205 = arith.muli %c3_i32, %c8_i32_75 : i32
    %206 = tpu.assume_multiple %205, 8 : i32
    %207 = arith.index_cast %206 : i32 to index
    %c0_76 = arith.constant 0 : index
    %208 = vector.load %arg20[%207, %c0_76] : memref<64x96xf32, #tpu.memory_space<vmem>>, vector<8x96xf32>
    %cst_77 = arith.constant dense<0.000000e+00> : vector<8x96xf32>
    %209 = tpu.matmul %202, %98, %cst_77 {dimension_numbers = #tpu.dot_dimension_numbers<[1], [0], [0], [1], [0, 0, 1, 1], [], []>} : vector<8x32xf32>, vector<32x96xf32>, vector<8x96xf32> -> vector<8x96xf32>
    %210 = vector.extract_strided_slice %208 {offsets = [0, 0], sizes = [8, 32], strides = [1, 1]} : vector<8x96xf32> to vector<8x32xf32>
    %211 = vector.extract_strided_slice %209 {offsets = [0, 0], sizes = [8, 32], strides = [1, 1]} : vector<8x96xf32> to vector<8x32xf32>
    %212 = arith.addf %210, %211 : vector<8x32xf32>
    %213 = arith.negf %212 : vector<8x32xf32>
    %214 = math.exp %213 : vector<8x32xf32>
    %cst_78 = arith.constant 1.000000e+00 : f32
    %215 = vector.broadcast %cst_78 : f32 to vector<8x32xf32>
    %216 = arith.addf %215, %214 : vector<8x32xf32>
    %217 = arith.divf %215, %216 : vector<8x32xf32>
    %218 = vector.extract_strided_slice %208 {offsets = [0, 32], sizes = [8, 32], strides = [1, 1]} : vector<8x96xf32> to vector<8x32xf32>
    %219 = vector.extract_strided_slice %209 {offsets = [0, 32], sizes = [8, 32], strides = [1, 1]} : vector<8x96xf32> to vector<8x32xf32>
    %220 = arith.addf %218, %219 : vector<8x32xf32>
    %221 = arith.negf %220 : vector<8x32xf32>
    %222 = math.exp %221 : vector<8x32xf32>
    %cst_79 = arith.constant 1.000000e+00 : f32
    %223 = vector.broadcast %cst_79 : f32 to vector<8x32xf32>
    %224 = arith.addf %223, %222 : vector<8x32xf32>
    %225 = arith.divf %223, %224 : vector<8x32xf32>
    %226 = vector.extract_strided_slice %208 {offsets = [0, 64], sizes = [8, 32], strides = [1, 1]} : vector<8x96xf32> to vector<8x32xf32>
    %227 = vector.extract_strided_slice %209 {offsets = [0, 64], sizes = [8, 32], strides = [1, 1]} : vector<8x96xf32> to vector<8x32xf32>
    %228 = arith.addf %227, %102 : vector<8x32xf32>
    %229 = arith.mulf %217, %228 : vector<8x32xf32>
    %230 = arith.addf %226, %229 : vector<8x32xf32>
    %231 = math.tanh %230 : vector<8x32xf32>
    %cst_80 = arith.constant 1.000000e+00 : f32
    %232 = vector.broadcast %cst_80 : f32 to vector<8x32xf32>
    %233 = arith.subf %232, %225 : vector<8x32xf32>
    %234 = arith.mulf %233, %231 : vector<8x32xf32>
    %235 = arith.mulf %225, %202 : vector<8x32xf32>
    %236 = arith.addf %234, %235 : vector<8x32xf32>
    %237 = arith.index_cast %206 : i32 to index
    %c0_81 = arith.constant 0 : index
    %238 = vector.load %arg21[%237, %c0_81] : memref<64x32xf32, #tpu.memory_space<vmem>>, vector<8x32xf32>
    tpu.vector_store %arg21[%237, %c0_81], %236 {strides = array<i32>} : memref<64x32xf32, #tpu.memory_space<vmem>>, vector<8x32xf32>,
    %c4_i32_82 = arith.constant 4 : i32
    %c8_i32_83 = arith.constant 8 : i32
    %239 = arith.muli %c4_i32_82, %c8_i32_83 : i32
    %240 = tpu.assume_multiple %239, 8 : i32
    %241 = arith.index_cast %240 : i32 to index
    %c0_84 = arith.constant 0 : index
    %242 = vector.load %arg20[%241, %c0_84] : memref<64x96xf32, #tpu.memory_space<vmem>>, vector<8x96xf32>
    %cst_85 = arith.constant dense<0.000000e+00> : vector<8x96xf32>
    %243 = tpu.matmul %236, %98, %cst_85 {dimension_numbers = #tpu.dot_dimension_numbers<[1], [0], [0], [1], [0, 0, 1, 1], [], []>} : vector<8x32xf32>, vector<32x96xf32>, vector<8x96xf32> -> vector<8x96xf32>
    %244 = vector.extract_strided_slice %242 {offsets = [0, 0], sizes = [8, 32], strides = [1, 1]} : vector<8x96xf32> to vector<8x32xf32>
    %245 = vector.extract_strided_slice %243 {offsets = [0, 0], sizes = [8, 32], strides = [1, 1]} : vector<8x96xf32> to vector<8x32xf32>
    %246 = arith.addf %244, %245 : vector<8x32xf32>
    %247 = arith.negf %246 : vector<8x32xf32>
    %248 = math.exp %247 : vector<8x32xf32>
    %cst_86 = arith.constant 1.000000e+00 : f32
    %249 = vector.broadcast %cst_86 : f32 to vector<8x32xf32>
    %250 = arith.addf %249, %248 : vector<8x32xf32>
    %251 = arith.divf %249, %250 : vector<8x32xf32>
    %252 = vector.extract_strided_slice %242 {offsets = [0, 32], sizes = [8, 32], strides = [1, 1]} : vector<8x96xf32> to vector<8x32xf32>
    %253 = vector.extract_strided_slice %243 {offsets = [0, 32], sizes = [8, 32], strides = [1, 1]} : vector<8x96xf32> to vector<8x32xf32>
    %254 = arith.addf %252, %253 : vector<8x32xf32>
    %255 = arith.negf %254 : vector<8x32xf32>
    %256 = math.exp %255 : vector<8x32xf32>
    %cst_87 = arith.constant 1.000000e+00 : f32
    %257 = vector.broadcast %cst_87 : f32 to vector<8x32xf32>
    %258 = arith.addf %257, %256 : vector<8x32xf32>
    %259 = arith.divf %257, %258 : vector<8x32xf32>
    %260 = vector.extract_strided_slice %242 {offsets = [0, 64], sizes = [8, 32], strides = [1, 1]} : vector<8x96xf32> to vector<8x32xf32>
    %261 = vector.extract_strided_slice %243 {offsets = [0, 64], sizes = [8, 32], strides = [1, 1]} : vector<8x96xf32> to vector<8x32xf32>
    %262 = arith.addf %261, %102 : vector<8x32xf32>
    %263 = arith.mulf %251, %262 : vector<8x32xf32>
    %264 = arith.addf %260, %263 : vector<8x32xf32>
    %265 = math.tanh %264 : vector<8x32xf32>
    %cst_88 = arith.constant 1.000000e+00 : f32
    %266 = vector.broadcast %cst_88 : f32 to vector<8x32xf32>
    %267 = arith.subf %266, %259 : vector<8x32xf32>
    %268 = arith.mulf %267, %265 : vector<8x32xf32>
    %269 = arith.mulf %259, %236 : vector<8x32xf32>
    %270 = arith.addf %268, %269 : vector<8x32xf32>
    %271 = arith.index_cast %240 : i32 to index
    %c0_89 = arith.constant 0 : index
    %272 = vector.load %arg21[%271, %c0_89] : memref<64x32xf32, #tpu.memory_space<vmem>>, vector<8x32xf32>
    tpu.vector_store %arg21[%271, %c0_89], %270 {strides = array<i32>} : memref<64x32xf32, #tpu.memory_space<vmem>>, vector<8x32xf32>,
    %c5_i32 = arith.constant 5 : i32
    %c8_i32_90 = arith.constant 8 : i32
    %273 = arith.muli %c5_i32, %c8_i32_90 : i32
    %274 = tpu.assume_multiple %273, 8 : i32
    %275 = arith.index_cast %274 : i32 to index
    %c0_91 = arith.constant 0 : index
    %276 = vector.load %arg20[%275, %c0_91] : memref<64x96xf32, #tpu.memory_space<vmem>>, vector<8x96xf32>
    %cst_92 = arith.constant dense<0.000000e+00> : vector<8x96xf32>
    %277 = tpu.matmul %270, %98, %cst_92 {dimension_numbers = #tpu.dot_dimension_numbers<[1], [0], [0], [1], [0, 0, 1, 1], [], []>} : vector<8x32xf32>, vector<32x96xf32>, vector<8x96xf32> -> vector<8x96xf32>
    %278 = vector.extract_strided_slice %276 {offsets = [0, 0], sizes = [8, 32], strides = [1, 1]} : vector<8x96xf32> to vector<8x32xf32>
    %279 = vector.extract_strided_slice %277 {offsets = [0, 0], sizes = [8, 32], strides = [1, 1]} : vector<8x96xf32> to vector<8x32xf32>
    %280 = arith.addf %278, %279 : vector<8x32xf32>
    %281 = arith.negf %280 : vector<8x32xf32>
    %282 = math.exp %281 : vector<8x32xf32>
    %cst_93 = arith.constant 1.000000e+00 : f32
    %283 = vector.broadcast %cst_93 : f32 to vector<8x32xf32>
    %284 = arith.addf %283, %282 : vector<8x32xf32>
    %285 = arith.divf %283, %284 : vector<8x32xf32>
    %286 = vector.extract_strided_slice %276 {offsets = [0, 32], sizes = [8, 32], strides = [1, 1]} : vector<8x96xf32> to vector<8x32xf32>
    %287 = vector.extract_strided_slice %277 {offsets = [0, 32], sizes = [8, 32], strides = [1, 1]} : vector<8x96xf32> to vector<8x32xf32>
    %288 = arith.addf %286, %287 : vector<8x32xf32>
    %289 = arith.negf %288 : vector<8x32xf32>
    %290 = math.exp %289 : vector<8x32xf32>
    %cst_94 = arith.constant 1.000000e+00 : f32
    %291 = vector.broadcast %cst_94 : f32 to vector<8x32xf32>
    %292 = arith.addf %291, %290 : vector<8x32xf32>
    %293 = arith.divf %291, %292 : vector<8x32xf32>
    %294 = vector.extract_strided_slice %276 {offsets = [0, 64], sizes = [8, 32], strides = [1, 1]} : vector<8x96xf32> to vector<8x32xf32>
    %295 = vector.extract_strided_slice %277 {offsets = [0, 64], sizes = [8, 32], strides = [1, 1]} : vector<8x96xf32> to vector<8x32xf32>
    %296 = arith.addf %295, %102 : vector<8x32xf32>
    %297 = arith.mulf %285, %296 : vector<8x32xf32>
    %298 = arith.addf %294, %297 : vector<8x32xf32>
    %299 = math.tanh %298 : vector<8x32xf32>
    %cst_95 = arith.constant 1.000000e+00 : f32
    %300 = vector.broadcast %cst_95 : f32 to vector<8x32xf32>
    %301 = arith.subf %300, %293 : vector<8x32xf32>
    %302 = arith.mulf %301, %299 : vector<8x32xf32>
    %303 = arith.mulf %293, %270 : vector<8x32xf32>
    %304 = arith.addf %302, %303 : vector<8x32xf32>
    %305 = arith.index_cast %274 : i32 to index
    %c0_96 = arith.constant 0 : index
    %306 = vector.load %arg21[%305, %c0_96] : memref<64x32xf32, #tpu.memory_space<vmem>>, vector<8x32xf32>
    tpu.vector_store %arg21[%305, %c0_96], %304 {strides = array<i32>} : memref<64x32xf32, #tpu.memory_space<vmem>>, vector<8x32xf32>,
    %c6_i32 = arith.constant 6 : i32
    %c8_i32_97 = arith.constant 8 : i32
    %307 = arith.muli %c6_i32, %c8_i32_97 : i32
    %308 = tpu.assume_multiple %307, 8 : i32
    %309 = arith.index_cast %308 : i32 to index
    %c0_98 = arith.constant 0 : index
    %310 = vector.load %arg20[%309, %c0_98] : memref<64x96xf32, #tpu.memory_space<vmem>>, vector<8x96xf32>
    %cst_99 = arith.constant dense<0.000000e+00> : vector<8x96xf32>
    %311 = tpu.matmul %304, %98, %cst_99 {dimension_numbers = #tpu.dot_dimension_numbers<[1], [0], [0], [1], [0, 0, 1, 1], [], []>} : vector<8x32xf32>, vector<32x96xf32>, vector<8x96xf32> -> vector<8x96xf32>
    %312 = vector.extract_strided_slice %310 {offsets = [0, 0], sizes = [8, 32], strides = [1, 1]} : vector<8x96xf32> to vector<8x32xf32>
    %313 = vector.extract_strided_slice %311 {offsets = [0, 0], sizes = [8, 32], strides = [1, 1]} : vector<8x96xf32> to vector<8x32xf32>
    %314 = arith.addf %312, %313 : vector<8x32xf32>
    %315 = arith.negf %314 : vector<8x32xf32>
    %316 = math.exp %315 : vector<8x32xf32>
    %cst_100 = arith.constant 1.000000e+00 : f32
    %317 = vector.broadcast %cst_100 : f32 to vector<8x32xf32>
    %318 = arith.addf %317, %316 : vector<8x32xf32>
    %319 = arith.divf %317, %318 : vector<8x32xf32>
    %320 = vector.extract_strided_slice %310 {offsets = [0, 32], sizes = [8, 32], strides = [1, 1]} : vector<8x96xf32> to vector<8x32xf32>
    %321 = vector.extract_strided_slice %311 {offsets = [0, 32], sizes = [8, 32], strides = [1, 1]} : vector<8x96xf32> to vector<8x32xf32>
    %322 = arith.addf %320, %321 : vector<8x32xf32>
    %323 = arith.negf %322 : vector<8x32xf32>
    %324 = math.exp %323 : vector<8x32xf32>
    %cst_101 = arith.constant 1.000000e+00 : f32
    %325 = vector.broadcast %cst_101 : f32 to vector<8x32xf32>
    %326 = arith.addf %325, %324 : vector<8x32xf32>
    %327 = arith.divf %325, %326 : vector<8x32xf32>
    %328 = vector.extract_strided_slice %310 {offsets = [0, 64], sizes = [8, 32], strides = [1, 1]} : vector<8x96xf32> to vector<8x32xf32>
    %329 = vector.extract_strided_slice %311 {offsets = [0, 64], sizes = [8, 32], strides = [1, 1]} : vector<8x96xf32> to vector<8x32xf32>
    %330 = arith.addf %329, %102 : vector<8x32xf32>
    %331 = arith.mulf %319, %330 : vector<8x32xf32>
    %332 = arith.addf %328, %331 : vector<8x32xf32>
    %333 = math.tanh %332 : vector<8x32xf32>
    %cst_102 = arith.constant 1.000000e+00 : f32
    %334 = vector.broadcast %cst_102 : f32 to vector<8x32xf32>
    %335 = arith.subf %334, %327 : vector<8x32xf32>
    %336 = arith.mulf %335, %333 : vector<8x32xf32>
    %337 = arith.mulf %327, %304 : vector<8x32xf32>
    %338 = arith.addf %336, %337 : vector<8x32xf32>
    %339 = arith.index_cast %308 : i32 to index
    %c0_103 = arith.constant 0 : index
    %340 = vector.load %arg21[%339, %c0_103] : memref<64x32xf32, #tpu.memory_space<vmem>>, vector<8x32xf32>
    tpu.vector_store %arg21[%339, %c0_103], %338 {strides = array<i32>} : memref<64x32xf32, #tpu.memory_space<vmem>>, vector<8x32xf32>,
    %c7_i32 = arith.constant 7 : i32
    %c8_i32_104 = arith.constant 8 : i32
    %341 = arith.muli %c7_i32, %c8_i32_104 : i32
    %342 = tpu.assume_multiple %341, 8 : i32
    %343 = arith.index_cast %342 : i32 to index
    %c0_105 = arith.constant 0 : index
    %344 = vector.load %arg20[%343, %c0_105] : memref<64x96xf32, #tpu.memory_space<vmem>>, vector<8x96xf32>
    %cst_106 = arith.constant dense<0.000000e+00> : vector<8x96xf32>
    %345 = tpu.matmul %338, %98, %cst_106 {dimension_numbers = #tpu.dot_dimension_numbers<[1], [0], [0], [1], [0, 0, 1, 1], [], []>} : vector<8x32xf32>, vector<32x96xf32>, vector<8x96xf32> -> vector<8x96xf32>
    %346 = vector.extract_strided_slice %344 {offsets = [0, 0], sizes = [8, 32], strides = [1, 1]} : vector<8x96xf32> to vector<8x32xf32>
    %347 = vector.extract_strided_slice %345 {offsets = [0, 0], sizes = [8, 32], strides = [1, 1]} : vector<8x96xf32> to vector<8x32xf32>
    %348 = arith.addf %346, %347 : vector<8x32xf32>
    %349 = arith.negf %348 : vector<8x32xf32>
    %350 = math.exp %349 : vector<8x32xf32>
    %cst_107 = arith.constant 1.000000e+00 : f32
    %351 = vector.broadcast %cst_107 : f32 to vector<8x32xf32>
    %352 = arith.addf %351, %350 : vector<8x32xf32>
    %353 = arith.divf %351, %352 : vector<8x32xf32>
    %354 = vector.extract_strided_slice %344 {offsets = [0, 32], sizes = [8, 32], strides = [1, 1]} : vector<8x96xf32> to vector<8x32xf32>
    %355 = vector.extract_strided_slice %345 {offsets = [0, 32], sizes = [8, 32], strides = [1, 1]} : vector<8x96xf32> to vector<8x32xf32>
    %356 = arith.addf %354, %355 : vector<8x32xf32>
    %357 = arith.negf %356 : vector<8x32xf32>
    %358 = math.exp %357 : vector<8x32xf32>
    %cst_108 = arith.constant 1.000000e+00 : f32
    %359 = vector.broadcast %cst_108 : f32 to vector<8x32xf32>
    %360 = arith.addf %359, %358 : vector<8x32xf32>
    %361 = arith.divf %359, %360 : vector<8x32xf32>
    %362 = vector.extract_strided_slice %344 {offsets = [0, 64], sizes = [8, 32], strides = [1, 1]} : vector<8x96xf32> to vector<8x32xf32>
    %363 = vector.extract_strided_slice %345 {offsets = [0, 64], sizes = [8, 32], strides = [1, 1]} : vector<8x96xf32> to vector<8x32xf32>
    %364 = arith.addf %363, %102 : vector<8x32xf32>
    %365 = arith.mulf %353, %364 : vector<8x32xf32>
    %366 = arith.addf %362, %365 : vector<8x32xf32>
    %367 = math.tanh %366 : vector<8x32xf32>
    %cst_109 = arith.constant 1.000000e+00 : f32
    %368 = vector.broadcast %cst_109 : f32 to vector<8x32xf32>
    %369 = arith.subf %368, %361 : vector<8x32xf32>
    %370 = arith.mulf %369, %367 : vector<8x32xf32>
    %371 = arith.mulf %361, %338 : vector<8x32xf32>
    %372 = arith.addf %370, %371 : vector<8x32xf32>
    %373 = arith.index_cast %342 : i32 to index
    %c0_110 = arith.constant 0 : index
    %374 = vector.load %arg21[%373, %c0_110] : memref<64x32xf32, #tpu.memory_space<vmem>>, vector<8x32xf32>
    tpu.vector_store %arg21[%373, %c0_110], %372 {strides = array<i32>} : memref<64x32xf32, #tpu.memory_space<vmem>>, vector<8x32xf32>,
    %c8_i32_111 = arith.constant 8 : i32
    %c0_112 = arith.constant 0 : index
    %c0_113 = arith.constant 0 : index
    %375 = vector.load %arg21[%c0_112, %c0_113] : memref<64x32xf32, #tpu.memory_space<vmem>>, vector<64x32xf32>
    %c1 = arith.constant 1 : index
    %c0_114 = arith.constant 0 : index
    %c0_115 = arith.constant 0 : index
    %376 = vector.load %arg13[%c1, %c0_114, %c0_115] : memref<2x32x96xf32, #tpu.memory_space<vmem>>, vector<1x32x96xf32>
    %377 = vector.shape_cast %376 : vector<1x32x96xf32> to vector<32x96xf32>
    %cst_116 = arith.constant dense<0.000000e+00> : vector<64x96xf32>
    %378 = tpu.matmul %375, %377, %cst_116 {dimension_numbers = #tpu.dot_dimension_numbers<[1], [0], [0], [1], [0, 0, 1, 1], [], []>} : vector<64x32xf32>, vector<32x96xf32>, vector<64x96xf32> -> vector<64x96xf32>
    %c1_117 = arith.constant 1 : index
    %c0_118 = arith.constant 0 : index
    %c0_119 = arith.constant 0 : index
    %379 = vector.load %arg15[%c1_117, %c0_118, %c0_119] : memref<2x1x96xf32, #tpu.memory_space<vmem>>, vector<1x1x96xf32>
    %380 = vector.shape_cast %379 : vector<1x1x96xf32> to vector<1x96xf32>
    %381 = vector.broadcast %380 : vector<1x96xf32> to vector<64x96xf32>
    %382 = arith.addf %378, %381 : vector<64x96xf32>
    %c0_120 = arith.constant 0 : index
    %c0_121 = arith.constant 0 : index
    %383 = vector.load %arg20[%c0_120, %c0_121] : memref<64x96xf32, #tpu.memory_space<vmem>>, vector<64x96xf32>
    tpu.vector_store %arg20[%c0_120, %c0_121], %382 {strides = array<i32>} : memref<64x96xf32, #tpu.memory_space<vmem>>, vector<64x96xf32>,
    %c1_122 = arith.constant 1 : index
    %c0_123 = arith.constant 0 : index
    %c0_124 = arith.constant 0 : index
    %384 = vector.load %arg14[%c1_122, %c0_123, %c0_124] : memref<2x32x96xf32, #tpu.memory_space<vmem>>, vector<1x32x96xf32>
    %385 = vector.shape_cast %384 : vector<1x32x96xf32> to vector<32x96xf32>
    %c1_125 = arith.constant 1 : index
    %c0_126 = arith.constant 0 : index
    %c0_127 = arith.constant 0 : index
    %386 = vector.load %arg16[%c1_125, %c0_126, %c0_127] : memref<2x1x32xf32, #tpu.memory_space<vmem>>, vector<1x1x32xf32>
    %387 = vector.shape_cast %386 : vector<1x1x32xf32> to vector<1x32xf32>
    %388 = vector.shape_cast %387 : vector<1x32xf32> to vector<1x32xf32>
    %389 = vector.broadcast %388 : vector<1x32xf32> to vector<8x32xf32>
    %c0_i32_128 = arith.constant 0 : i32
    %c8_i32_129 = arith.constant 8 : i32
    %390 = arith.muli %c0_i32_128, %c8_i32_129 : i32
    %391 = tpu.assume_multiple %390, 8 : i32
    %392 = arith.index_cast %391 : i32 to index
    %c0_130 = arith.constant 0 : index
    %393 = vector.load %arg20[%392, %c0_130] : memref<64x96xf32, #tpu.memory_space<vmem>>, vector<8x96xf32>
    %cst_131 = arith.constant dense<0.000000e+00> : vector<8x96xf32>
    %394 = tpu.matmul %80, %385, %cst_131 {dimension_numbers = #tpu.dot_dimension_numbers<[1], [0], [0], [1], [0, 0, 1, 1], [], []>} : vector<8x32xf32>, vector<32x96xf32>, vector<8x96xf32> -> vector<8x96xf32>
    %395 = vector.extract_strided_slice %393 {offsets = [0, 0], sizes = [8, 32], strides = [1, 1]} : vector<8x96xf32> to vector<8x32xf32>
    %396 = vector.extract_strided_slice %394 {offsets = [0, 0], sizes = [8, 32], strides = [1, 1]} : vector<8x96xf32> to vector<8x32xf32>
    %397 = arith.addf %395, %396 : vector<8x32xf32>
    %398 = arith.negf %397 : vector<8x32xf32>
    %399 = math.exp %398 : vector<8x32xf32>
    %cst_132 = arith.constant 1.000000e+00 : f32
    %400 = vector.broadcast %cst_132 : f32 to vector<8x32xf32>
    %401 = arith.addf %400, %399 : vector<8x32xf32>
    %402 = arith.divf %400, %401 : vector<8x32xf32>
    %403 = vector.extract_strided_slice %393 {offsets = [0, 32], sizes = [8, 32], strides = [1, 1]} : vector<8x96xf32> to vector<8x32xf32>
    %404 = vector.extract_strided_slice %394 {offsets = [0, 32], sizes = [8, 32], strides = [1, 1]} : vector<8x96xf32> to vector<8x32xf32>
    %405 = arith.addf %403, %404 : vector<8x32xf32>
    %406 = arith.negf %405 : vector<8x32xf32>
    %407 = math.exp %406 : vector<8x32xf32>
    %cst_133 = arith.constant 1.000000e+00 : f32
    %408 = vector.broadcast %cst_133 : f32 to vector<8x32xf32>
    %409 = arith.addf %408, %407 : vector<8x32xf32>
    %410 = arith.divf %408, %409 : vector<8x32xf32>
    %411 = vector.extract_strided_slice %393 {offsets = [0, 64], sizes = [8, 32], strides = [1, 1]} : vector<8x96xf32> to vector<8x32xf32>
    %412 = vector.extract_strided_slice %394 {offsets = [0, 64], sizes = [8, 32], strides = [1, 1]} : vector<8x96xf32> to vector<8x32xf32>
    %413 = arith.addf %412, %389 : vector<8x32xf32>
    %414 = arith.mulf %402, %413 : vector<8x32xf32>
    %415 = arith.addf %411, %414 : vector<8x32xf32>
    %416 = math.tanh %415 : vector<8x32xf32>
    %cst_134 = arith.constant 1.000000e+00 : f32
    %417 = vector.broadcast %cst_134 : f32 to vector<8x32xf32>
    %418 = arith.subf %417, %410 : vector<8x32xf32>
    %419 = arith.mulf %418, %416 : vector<8x32xf32>
    %420 = arith.mulf %410, %80 : vector<8x32xf32>
    %421 = arith.addf %419, %420 : vector<8x32xf32>
    %422 = arith.index_cast %391 : i32 to index
    %c0_135 = arith.constant 0 : index
    %423 = vector.load %arg21[%422, %c0_135] : memref<64x32xf32, #tpu.memory_space<vmem>>, vector<8x32xf32>
    tpu.vector_store %arg21[%422, %c0_135], %421 {strides = array<i32>} : memref<64x32xf32, #tpu.memory_space<vmem>>, vector<8x32xf32>,
    %c1_i32_136 = arith.constant 1 : i32
    %c8_i32_137 = arith.constant 8 : i32
    %424 = arith.muli %c1_i32_136, %c8_i32_137 : i32
    %425 = tpu.assume_multiple %424, 8 : i32
    %426 = arith.index_cast %425 : i32 to index
    %c0_138 = arith.constant 0 : index
    %427 = vector.load %arg20[%426, %c0_138] : memref<64x96xf32, #tpu.memory_space<vmem>>, vector<8x96xf32>
    %cst_139 = arith.constant dense<0.000000e+00> : vector<8x96xf32>
    %428 = tpu.matmul %421, %385, %cst_139 {dimension_numbers = #tpu.dot_dimension_numbers<[1], [0], [0], [1], [0, 0, 1, 1], [], []>} : vector<8x32xf32>, vector<32x96xf32>, vector<8x96xf32> -> vector<8x96xf32>
    %429 = vector.extract_strided_slice %427 {offsets = [0, 0], sizes = [8, 32], strides = [1, 1]} : vector<8x96xf32> to vector<8x32xf32>
    %430 = vector.extract_strided_slice %428 {offsets = [0, 0], sizes = [8, 32], strides = [1, 1]} : vector<8x96xf32> to vector<8x32xf32>
    %431 = arith.addf %429, %430 : vector<8x32xf32>
    %432 = arith.negf %431 : vector<8x32xf32>
    %433 = math.exp %432 : vector<8x32xf32>
    %cst_140 = arith.constant 1.000000e+00 : f32
    %434 = vector.broadcast %cst_140 : f32 to vector<8x32xf32>
    %435 = arith.addf %434, %433 : vector<8x32xf32>
    %436 = arith.divf %434, %435 : vector<8x32xf32>
    %437 = vector.extract_strided_slice %427 {offsets = [0, 32], sizes = [8, 32], strides = [1, 1]} : vector<8x96xf32> to vector<8x32xf32>
    %438 = vector.extract_strided_slice %428 {offsets = [0, 32], sizes = [8, 32], strides = [1, 1]} : vector<8x96xf32> to vector<8x32xf32>
    %439 = arith.addf %437, %438 : vector<8x32xf32>
    %440 = arith.negf %439 : vector<8x32xf32>
    %441 = math.exp %440 : vector<8x32xf32>
    %cst_141 = arith.constant 1.000000e+00 : f32
    %442 = vector.broadcast %cst_141 : f32 to vector<8x32xf32>
    %443 = arith.addf %442, %441 : vector<8x32xf32>
    %444 = arith.divf %442, %443 : vector<8x32xf32>
    %445 = vector.extract_strided_slice %427 {offsets = [0, 64], sizes = [8, 32], strides = [1, 1]} : vector<8x96xf32> to vector<8x32xf32>
    %446 = vector.extract_strided_slice %428 {offsets = [0, 64], sizes = [8, 32], strides = [1, 1]} : vector<8x96xf32> to vector<8x32xf32>
    %447 = arith.addf %446, %389 : vector<8x32xf32>
    %448 = arith.mulf %436, %447 : vector<8x32xf32>
    %449 = arith.addf %445, %448 : vector<8x32xf32>
    %450 = math.tanh %449 : vector<8x32xf32>
    %cst_142 = arith.constant 1.000000e+00 : f32
    %451 = vector.broadcast %cst_142 : f32 to vector<8x32xf32>
    %452 = arith.subf %451, %444 : vector<8x32xf32>
    %453 = arith.mulf %452, %450 : vector<8x32xf32>
    %454 = arith.mulf %444, %421 : vector<8x32xf32>
    %455 = arith.addf %453, %454 : vector<8x32xf32>
    %456 = arith.index_cast %425 : i32 to index
    %c0_143 = arith.constant 0 : index
    %457 = vector.load %arg21[%456, %c0_143] : memref<64x32xf32, #tpu.memory_space<vmem>>, vector<8x32xf32>
    tpu.vector_store %arg21[%456, %c0_143], %455 {strides = array<i32>} : memref<64x32xf32, #tpu.memory_space<vmem>>, vector<8x32xf32>,
    %c2_i32_144 = arith.constant 2 : i32
    %c8_i32_145 = arith.constant 8 : i32
    %458 = arith.muli %c2_i32_144, %c8_i32_145 : i32
    %459 = tpu.assume_multiple %458, 8 : i32
    %460 = arith.index_cast %459 : i32 to index
    %c0_146 = arith.constant 0 : index
    %461 = vector.load %arg20[%460, %c0_146] : memref<64x96xf32, #tpu.memory_space<vmem>>, vector<8x96xf32>
    %cst_147 = arith.constant dense<0.000000e+00> : vector<8x96xf32>
    %462 = tpu.matmul %455, %385, %cst_147 {dimension_numbers = #tpu.dot_dimension_numbers<[1], [0], [0], [1], [0, 0, 1, 1], [], []>} : vector<8x32xf32>, vector<32x96xf32>, vector<8x96xf32> -> vector<8x96xf32>
    %463 = vector.extract_strided_slice %461 {offsets = [0, 0], sizes = [8, 32], strides = [1, 1]} : vector<8x96xf32> to vector<8x32xf32>
    %464 = vector.extract_strided_slice %462 {offsets = [0, 0], sizes = [8, 32], strides = [1, 1]} : vector<8x96xf32> to vector<8x32xf32>
    %465 = arith.addf %463, %464 : vector<8x32xf32>
    %466 = arith.negf %465 : vector<8x32xf32>
    %467 = math.exp %466 : vector<8x32xf32>
    %cst_148 = arith.constant 1.000000e+00 : f32
    %468 = vector.broadcast %cst_148 : f32 to vector<8x32xf32>
    %469 = arith.addf %468, %467 : vector<8x32xf32>
    %470 = arith.divf %468, %469 : vector<8x32xf32>
    %471 = vector.extract_strided_slice %461 {offsets = [0, 32], sizes = [8, 32], strides = [1, 1]} : vector<8x96xf32> to vector<8x32xf32>
    %472 = vector.extract_strided_slice %462 {offsets = [0, 32], sizes = [8, 32], strides = [1, 1]} : vector<8x96xf32> to vector<8x32xf32>
    %473 = arith.addf %471, %472 : vector<8x32xf32>
    %474 = arith.negf %473 : vector<8x32xf32>
    %475 = math.exp %474 : vector<8x32xf32>
    %cst_149 = arith.constant 1.000000e+00 : f32
    %476 = vector.broadcast %cst_149 : f32 to vector<8x32xf32>
    %477 = arith.addf %476, %475 : vector<8x32xf32>
    %478 = arith.divf %476, %477 : vector<8x32xf32>
    %479 = vector.extract_strided_slice %461 {offsets = [0, 64], sizes = [8, 32], strides = [1, 1]} : vector<8x96xf32> to vector<8x32xf32>
    %480 = vector.extract_strided_slice %462 {offsets = [0, 64], sizes = [8, 32], strides = [1, 1]} : vector<8x96xf32> to vector<8x32xf32>
    %481 = arith.addf %480, %389 : vector<8x32xf32>
    %482 = arith.mulf %470, %481 : vector<8x32xf32>
    %483 = arith.addf %479, %482 : vector<8x32xf32>
    %484 = math.tanh %483 : vector<8x32xf32>
    %cst_150 = arith.constant 1.000000e+00 : f32
    %485 = vector.broadcast %cst_150 : f32 to vector<8x32xf32>
    %486 = arith.subf %485, %478 : vector<8x32xf32>
    %487 = arith.mulf %486, %484 : vector<8x32xf32>
    %488 = arith.mulf %478, %455 : vector<8x32xf32>
    %489 = arith.addf %487, %488 : vector<8x32xf32>
    %490 = arith.index_cast %459 : i32 to index
    %c0_151 = arith.constant 0 : index
    %491 = vector.load %arg21[%490, %c0_151] : memref<64x32xf32, #tpu.memory_space<vmem>>, vector<8x32xf32>
    tpu.vector_store %arg21[%490, %c0_151], %489 {strides = array<i32>} : memref<64x32xf32, #tpu.memory_space<vmem>>, vector<8x32xf32>,
    %c3_i32_152 = arith.constant 3 : i32
    %c8_i32_153 = arith.constant 8 : i32
    %492 = arith.muli %c3_i32_152, %c8_i32_153 : i32
    %493 = tpu.assume_multiple %492, 8 : i32
    %494 = arith.index_cast %493 : i32 to index
    %c0_154 = arith.constant 0 : index
    %495 = vector.load %arg20[%494, %c0_154] : memref<64x96xf32, #tpu.memory_space<vmem>>, vector<8x96xf32>
    %cst_155 = arith.constant dense<0.000000e+00> : vector<8x96xf32>
    %496 = tpu.matmul %489, %385, %cst_155 {dimension_numbers = #tpu.dot_dimension_numbers<[1], [0], [0], [1], [0, 0, 1, 1], [], []>} : vector<8x32xf32>, vector<32x96xf32>, vector<8x96xf32> -> vector<8x96xf32>
    %497 = vector.extract_strided_slice %495 {offsets = [0, 0], sizes = [8, 32], strides = [1, 1]} : vector<8x96xf32> to vector<8x32xf32>
    %498 = vector.extract_strided_slice %496 {offsets = [0, 0], sizes = [8, 32], strides = [1, 1]} : vector<8x96xf32> to vector<8x32xf32>
    %499 = arith.addf %497, %498 : vector<8x32xf32>
    %500 = arith.negf %499 : vector<8x32xf32>
    %501 = math.exp %500 : vector<8x32xf32>
    %cst_156 = arith.constant 1.000000e+00 : f32
    %502 = vector.broadcast %cst_156 : f32 to vector<8x32xf32>
    %503 = arith.addf %502, %501 : vector<8x32xf32>
    %504 = arith.divf %502, %503 : vector<8x32xf32>
    %505 = vector.extract_strided_slice %495 {offsets = [0, 32], sizes = [8, 32], strides = [1, 1]} : vector<8x96xf32> to vector<8x32xf32>
    %506 = vector.extract_strided_slice %496 {offsets = [0, 32], sizes = [8, 32], strides = [1, 1]} : vector<8x96xf32> to vector<8x32xf32>
    %507 = arith.addf %505, %506 : vector<8x32xf32>
    %508 = arith.negf %507 : vector<8x32xf32>
    %509 = math.exp %508 : vector<8x32xf32>
    %cst_157 = arith.constant 1.000000e+00 : f32
    %510 = vector.broadcast %cst_157 : f32 to vector<8x32xf32>
    %511 = arith.addf %510, %509 : vector<8x32xf32>
    %512 = arith.divf %510, %511 : vector<8x32xf32>
    %513 = vector.extract_strided_slice %495 {offsets = [0, 64], sizes = [8, 32], strides = [1, 1]} : vector<8x96xf32> to vector<8x32xf32>
    %514 = vector.extract_strided_slice %496 {offsets = [0, 64], sizes = [8, 32], strides = [1, 1]} : vector<8x96xf32> to vector<8x32xf32>
    %515 = arith.addf %514, %389 : vector<8x32xf32>
    %516 = arith.mulf %504, %515 : vector<8x32xf32>
    %517 = arith.addf %513, %516 : vector<8x32xf32>
    %518 = math.tanh %517 : vector<8x32xf32>
    %cst_158 = arith.constant 1.000000e+00 : f32
    %519 = vector.broadcast %cst_158 : f32 to vector<8x32xf32>
    %520 = arith.subf %519, %512 : vector<8x32xf32>
    %521 = arith.mulf %520, %518 : vector<8x32xf32>
    %522 = arith.mulf %512, %489 : vector<8x32xf32>
    %523 = arith.addf %521, %522 : vector<8x32xf32>
    %524 = arith.index_cast %493 : i32 to index
    %c0_159 = arith.constant 0 : index
    %525 = vector.load %arg21[%524, %c0_159] : memref<64x32xf32, #tpu.memory_space<vmem>>, vector<8x32xf32>
    tpu.vector_store %arg21[%524, %c0_159], %523 {strides = array<i32>} : memref<64x32xf32, #tpu.memory_space<vmem>>, vector<8x32xf32>,
    %c4_i32_160 = arith.constant 4 : i32
    %c8_i32_161 = arith.constant 8 : i32
    %526 = arith.muli %c4_i32_160, %c8_i32_161 : i32
    %527 = tpu.assume_multiple %526, 8 : i32
    %528 = arith.index_cast %527 : i32 to index
    %c0_162 = arith.constant 0 : index
    %529 = vector.load %arg20[%528, %c0_162] : memref<64x96xf32, #tpu.memory_space<vmem>>, vector<8x96xf32>
    %cst_163 = arith.constant dense<0.000000e+00> : vector<8x96xf32>
    %530 = tpu.matmul %523, %385, %cst_163 {dimension_numbers = #tpu.dot_dimension_numbers<[1], [0], [0], [1], [0, 0, 1, 1], [], []>} : vector<8x32xf32>, vector<32x96xf32>, vector<8x96xf32> -> vector<8x96xf32>
    %531 = vector.extract_strided_slice %529 {offsets = [0, 0], sizes = [8, 32], strides = [1, 1]} : vector<8x96xf32> to vector<8x32xf32>
    %532 = vector.extract_strided_slice %530 {offsets = [0, 0], sizes = [8, 32], strides = [1, 1]} : vector<8x96xf32> to vector<8x32xf32>
    %533 = arith.addf %531, %532 : vector<8x32xf32>
    %534 = arith.negf %533 : vector<8x32xf32>
    %535 = math.exp %534 : vector<8x32xf32>
    %cst_164 = arith.constant 1.000000e+00 : f32
    %536 = vector.broadcast %cst_164 : f32 to vector<8x32xf32>
    %537 = arith.addf %536, %535 : vector<8x32xf32>
    %538 = arith.divf %536, %537 : vector<8x32xf32>
    %539 = vector.extract_strided_slice %529 {offsets = [0, 32], sizes = [8, 32], strides = [1, 1]} : vector<8x96xf32> to vector<8x32xf32>
    %540 = vector.extract_strided_slice %530 {offsets = [0, 32], sizes = [8, 32], strides = [1, 1]} : vector<8x96xf32> to vector<8x32xf32>
    %541 = arith.addf %539, %540 : vector<8x32xf32>
    %542 = arith.negf %541 : vector<8x32xf32>
    %543 = math.exp %542 : vector<8x32xf32>
    %cst_165 = arith.constant 1.000000e+00 : f32
    %544 = vector.broadcast %cst_165 : f32 to vector<8x32xf32>
    %545 = arith.addf %544, %543 : vector<8x32xf32>
    %546 = arith.divf %544, %545 : vector<8x32xf32>
    %547 = vector.extract_strided_slice %529 {offsets = [0, 64], sizes = [8, 32], strides = [1, 1]} : vector<8x96xf32> to vector<8x32xf32>
    %548 = vector.extract_strided_slice %530 {offsets = [0, 64], sizes = [8, 32], strides = [1, 1]} : vector<8x96xf32> to vector<8x32xf32>
    %549 = arith.addf %548, %389 : vector<8x32xf32>
    %550 = arith.mulf %538, %549 : vector<8x32xf32>
    %551 = arith.addf %547, %550 : vector<8x32xf32>
    %552 = math.tanh %551 : vector<8x32xf32>
    %cst_166 = arith.constant 1.000000e+00 : f32
    %553 = vector.broadcast %cst_166 : f32 to vector<8x32xf32>
    %554 = arith.subf %553, %546 : vector<8x32xf32>
    %555 = arith.mulf %554, %552 : vector<8x32xf32>
    %556 = arith.mulf %546, %523 : vector<8x32xf32>
    %557 = arith.addf %555, %556 : vector<8x32xf32>
    %558 = arith.index_cast %527 : i32 to index
    %c0_167 = arith.constant 0 : index
    %559 = vector.load %arg21[%558, %c0_167] : memref<64x32xf32, #tpu.memory_space<vmem>>, vector<8x32xf32>
    tpu.vector_store %arg21[%558, %c0_167], %557 {strides = array<i32>} : memref<64x32xf32, #tpu.memory_space<vmem>>, vector<8x32xf32>,
    %c5_i32_168 = arith.constant 5 : i32
    %c8_i32_169 = arith.constant 8 : i32
    %560 = arith.muli %c5_i32_168, %c8_i32_169 : i32
    %561 = tpu.assume_multiple %560, 8 : i32
    %562 = arith.index_cast %561 : i32 to index
    %c0_170 = arith.constant 0 : index
    %563 = vector.load %arg20[%562, %c0_170] : memref<64x96xf32, #tpu.memory_space<vmem>>, vector<8x96xf32>
    %cst_171 = arith.constant dense<0.000000e+00> : vector<8x96xf32>
    %564 = tpu.matmul %557, %385, %cst_171 {dimension_numbers = #tpu.dot_dimension_numbers<[1], [0], [0], [1], [0, 0, 1, 1], [], []>} : vector<8x32xf32>, vector<32x96xf32>, vector<8x96xf32> -> vector<8x96xf32>
    %565 = vector.extract_strided_slice %563 {offsets = [0, 0], sizes = [8, 32], strides = [1, 1]} : vector<8x96xf32> to vector<8x32xf32>
    %566 = vector.extract_strided_slice %564 {offsets = [0, 0], sizes = [8, 32], strides = [1, 1]} : vector<8x96xf32> to vector<8x32xf32>
    %567 = arith.addf %565, %566 : vector<8x32xf32>
    %568 = arith.negf %567 : vector<8x32xf32>
    %569 = math.exp %568 : vector<8x32xf32>
    %cst_172 = arith.constant 1.000000e+00 : f32
    %570 = vector.broadcast %cst_172 : f32 to vector<8x32xf32>
    %571 = arith.addf %570, %569 : vector<8x32xf32>
    %572 = arith.divf %570, %571 : vector<8x32xf32>
    %573 = vector.extract_strided_slice %563 {offsets = [0, 32], sizes = [8, 32], strides = [1, 1]} : vector<8x96xf32> to vector<8x32xf32>
    %574 = vector.extract_strided_slice %564 {offsets = [0, 32], sizes = [8, 32], strides = [1, 1]} : vector<8x96xf32> to vector<8x32xf32>
    %575 = arith.addf %573, %574 : vector<8x32xf32>
    %576 = arith.negf %575 : vector<8x32xf32>
    %577 = math.exp %576 : vector<8x32xf32>
    %cst_173 = arith.constant 1.000000e+00 : f32
    %578 = vector.broadcast %cst_173 : f32 to vector<8x32xf32>
    %579 = arith.addf %578, %577 : vector<8x32xf32>
    %580 = arith.divf %578, %579 : vector<8x32xf32>
    %581 = vector.extract_strided_slice %563 {offsets = [0, 64], sizes = [8, 32], strides = [1, 1]} : vector<8x96xf32> to vector<8x32xf32>
    %582 = vector.extract_strided_slice %564 {offsets = [0, 64], sizes = [8, 32], strides = [1, 1]} : vector<8x96xf32> to vector<8x32xf32>
    %583 = arith.addf %582, %389 : vector<8x32xf32>
    %584 = arith.mulf %572, %583 : vector<8x32xf32>
    %585 = arith.addf %581, %584 : vector<8x32xf32>
    %586 = math.tanh %585 : vector<8x32xf32>
    %cst_174 = arith.constant 1.000000e+00 : f32
    %587 = vector.broadcast %cst_174 : f32 to vector<8x32xf32>
    %588 = arith.subf %587, %580 : vector<8x32xf32>
    %589 = arith.mulf %588, %586 : vector<8x32xf32>
    %590 = arith.mulf %580, %557 : vector<8x32xf32>
    %591 = arith.addf %589, %590 : vector<8x32xf32>
    %592 = arith.index_cast %561 : i32 to index
    %c0_175 = arith.constant 0 : index
    %593 = vector.load %arg21[%592, %c0_175] : memref<64x32xf32, #tpu.memory_space<vmem>>, vector<8x32xf32>
    tpu.vector_store %arg21[%592, %c0_175], %591 {strides = array<i32>} : memref<64x32xf32, #tpu.memory_space<vmem>>, vector<8x32xf32>,
    %c6_i32_176 = arith.constant 6 : i32
    %c8_i32_177 = arith.constant 8 : i32
    %594 = arith.muli %c6_i32_176, %c8_i32_177 : i32
    %595 = tpu.assume_multiple %594, 8 : i32
    %596 = arith.index_cast %595 : i32 to index
    %c0_178 = arith.constant 0 : index
    %597 = vector.load %arg20[%596, %c0_178] : memref<64x96xf32, #tpu.memory_space<vmem>>, vector<8x96xf32>
    %cst_179 = arith.constant dense<0.000000e+00> : vector<8x96xf32>
    %598 = tpu.matmul %591, %385, %cst_179 {dimension_numbers = #tpu.dot_dimension_numbers<[1], [0], [0], [1], [0, 0, 1, 1], [], []>} : vector<8x32xf32>, vector<32x96xf32>, vector<8x96xf32> -> vector<8x96xf32>
    %599 = vector.extract_strided_slice %597 {offsets = [0, 0], sizes = [8, 32], strides = [1, 1]} : vector<8x96xf32> to vector<8x32xf32>
    %600 = vector.extract_strided_slice %598 {offsets = [0, 0], sizes = [8, 32], strides = [1, 1]} : vector<8x96xf32> to vector<8x32xf32>
    %601 = arith.addf %599, %600 : vector<8x32xf32>
    %602 = arith.negf %601 : vector<8x32xf32>
    %603 = math.exp %602 : vector<8x32xf32>
    %cst_180 = arith.constant 1.000000e+00 : f32
    %604 = vector.broadcast %cst_180 : f32 to vector<8x32xf32>
    %605 = arith.addf %604, %603 : vector<8x32xf32>
    %606 = arith.divf %604, %605 : vector<8x32xf32>
    %607 = vector.extract_strided_slice %597 {offsets = [0, 32], sizes = [8, 32], strides = [1, 1]} : vector<8x96xf32> to vector<8x32xf32>
    %608 = vector.extract_strided_slice %598 {offsets = [0, 32], sizes = [8, 32], strides = [1, 1]} : vector<8x96xf32> to vector<8x32xf32>
    %609 = arith.addf %607, %608 : vector<8x32xf32>
    %610 = arith.negf %609 : vector<8x32xf32>
    %611 = math.exp %610 : vector<8x32xf32>
    %cst_181 = arith.constant 1.000000e+00 : f32
    %612 = vector.broadcast %cst_181 : f32 to vector<8x32xf32>
    %613 = arith.addf %612, %611 : vector<8x32xf32>
    %614 = arith.divf %612, %613 : vector<8x32xf32>
    %615 = vector.extract_strided_slice %597 {offsets = [0, 64], sizes = [8, 32], strides = [1, 1]} : vector<8x96xf32> to vector<8x32xf32>
    %616 = vector.extract_strided_slice %598 {offsets = [0, 64], sizes = [8, 32], strides = [1, 1]} : vector<8x96xf32> to vector<8x32xf32>
    %617 = arith.addf %616, %389 : vector<8x32xf32>
    %618 = arith.mulf %606, %617 : vector<8x32xf32>
    %619 = arith.addf %615, %618 : vector<8x32xf32>
    %620 = math.tanh %619 : vector<8x32xf32>
    %cst_182 = arith.constant 1.000000e+00 : f32
    %621 = vector.broadcast %cst_182 : f32 to vector<8x32xf32>
    %622 = arith.subf %621, %614 : vector<8x32xf32>
    %623 = arith.mulf %622, %620 : vector<8x32xf32>
    %624 = arith.mulf %614, %591 : vector<8x32xf32>
    %625 = arith.addf %623, %624 : vector<8x32xf32>
    %626 = arith.index_cast %595 : i32 to index
    %c0_183 = arith.constant 0 : index
    %627 = vector.load %arg21[%626, %c0_183] : memref<64x32xf32, #tpu.memory_space<vmem>>, vector<8x32xf32>
    tpu.vector_store %arg21[%626, %c0_183], %625 {strides = array<i32>} : memref<64x32xf32, #tpu.memory_space<vmem>>, vector<8x32xf32>,
    %c7_i32_184 = arith.constant 7 : i32
    %c8_i32_185 = arith.constant 8 : i32
    %628 = arith.muli %c7_i32_184, %c8_i32_185 : i32
    %629 = tpu.assume_multiple %628, 8 : i32
    %630 = arith.index_cast %629 : i32 to index
    %c0_186 = arith.constant 0 : index
    %631 = vector.load %arg20[%630, %c0_186] : memref<64x96xf32, #tpu.memory_space<vmem>>, vector<8x96xf32>
    %cst_187 = arith.constant dense<0.000000e+00> : vector<8x96xf32>
    %632 = tpu.matmul %625, %385, %cst_187 {dimension_numbers = #tpu.dot_dimension_numbers<[1], [0], [0], [1], [0, 0, 1, 1], [], []>} : vector<8x32xf32>, vector<32x96xf32>, vector<8x96xf32> -> vector<8x96xf32>
    %633 = vector.extract_strided_slice %631 {offsets = [0, 0], sizes = [8, 32], strides = [1, 1]} : vector<8x96xf32> to vector<8x32xf32>
    %634 = vector.extract_strided_slice %632 {offsets = [0, 0], sizes = [8, 32], strides = [1, 1]} : vector<8x96xf32> to vector<8x32xf32>
    %635 = arith.addf %633, %634 : vector<8x32xf32>
    %636 = arith.negf %635 : vector<8x32xf32>
    %637 = math.exp %636 : vector<8x32xf32>
    %cst_188 = arith.constant 1.000000e+00 : f32
    %638 = vector.broadcast %cst_188 : f32 to vector<8x32xf32>
    %639 = arith.addf %638, %637 : vector<8x32xf32>
    %640 = arith.divf %638, %639 : vector<8x32xf32>
    %641 = vector.extract_strided_slice %631 {offsets = [0, 32], sizes = [8, 32], strides = [1, 1]} : vector<8x96xf32> to vector<8x32xf32>
    %642 = vector.extract_strided_slice %632 {offsets = [0, 32], sizes = [8, 32], strides = [1, 1]} : vector<8x96xf32> to vector<8x32xf32>
    %643 = arith.addf %641, %642 : vector<8x32xf32>
    %644 = arith.negf %643 : vector<8x32xf32>
    %645 = math.exp %644 : vector<8x32xf32>
    %cst_189 = arith.constant 1.000000e+00 : f32
    %646 = vector.broadcast %cst_189 : f32 to vector<8x32xf32>
    %647 = arith.addf %646, %645 : vector<8x32xf32>
    %648 = arith.divf %646, %647 : vector<8x32xf32>
    %649 = vector.extract_strided_slice %631 {offsets = [0, 64], sizes = [8, 32], strides = [1, 1]} : vector<8x96xf32> to vector<8x32xf32>
    %650 = vector.extract_strided_slice %632 {offsets = [0, 64], sizes = [8, 32], strides = [1, 1]} : vector<8x96xf32> to vector<8x32xf32>
    %651 = arith.addf %650, %389 : vector<8x32xf32>
    %652 = arith.mulf %640, %651 : vector<8x32xf32>
    %653 = arith.addf %649, %652 : vector<8x32xf32>
    %654 = math.tanh %653 : vector<8x32xf32>
    %cst_190 = arith.constant 1.000000e+00 : f32
    %655 = vector.broadcast %cst_190 : f32 to vector<8x32xf32>
    %656 = arith.subf %655, %648 : vector<8x32xf32>
    %657 = arith.mulf %656, %654 : vector<8x32xf32>
    %658 = arith.mulf %648, %625 : vector<8x32xf32>
    %659 = arith.addf %657, %658 : vector<8x32xf32>
    %660 = arith.index_cast %629 : i32 to index
    %c0_191 = arith.constant 0 : index
    %661 = vector.load %arg21[%660, %c0_191] : memref<64x32xf32, #tpu.memory_space<vmem>>, vector<8x32xf32>
    tpu.vector_store %arg21[%660, %c0_191], %659 {strides = array<i32>} : memref<64x32xf32, #tpu.memory_space<vmem>>, vector<8x32xf32>,
    %c8_i32_192 = arith.constant 8 : i32
    %c0_193 = arith.constant 0 : index
    %c0_194 = arith.constant 0 : index
    %662 = vector.load %arg21[%c0_193, %c0_194] : memref<64x32xf32, #tpu.memory_space<vmem>>, vector<64x32xf32>
    %cst_195 = arith.constant 0.000000e+00 : f32
    %663 = vector.broadcast %cst_195 : f32 to vector<64x32xf32>
    %664 = arith.maximumf %662, %663 : vector<64x32xf32>
    %c0_196 = arith.constant 0 : index
    %c0_197 = arith.constant 0 : index
    %665 = vector.load %arg17[%c0_196, %c0_197] : memref<32x16xf32, #tpu.memory_space<vmem>>, vector<32x16xf32>
    %cst_198 = arith.constant dense<0.000000e+00> : vector<64x16xf32>
    %666 = tpu.matmul %664, %665, %cst_198 {dimension_numbers = #tpu.dot_dimension_numbers<[1], [0], [0], [1], [0, 0, 1, 1], [], []>} : vector<64x32xf32>, vector<32x16xf32>, vector<64x16xf32> -> vector<64x16xf32>
    %c0_199 = arith.constant 0 : index
    %c0_200 = arith.constant 0 : index
    %667 = vector.load %arg18[%c0_199, %c0_200] : memref<1x16xf32, #tpu.memory_space<vmem>>, vector<1x16xf32>
    %668 = vector.broadcast %667 : vector<1x16xf32> to vector<64x16xf32>
    %669 = arith.addf %666, %668 : vector<64x16xf32>
    %cst_201 = arith.constant dense<0xFF800000> : vector<64xf32>
    %670 = vector.multi_reduction <maximumf>, %669, %cst_201 [1] : vector<64x16xf32> to vector<64xf32>
    %671 = vector.shape_cast %670 : vector<64xf32> to vector<64x1xf32>
    %672 = vector.broadcast %671 : vector<64x1xf32> to vector<64x16xf32>
    %673 = arith.subf %669, %672 : vector<64x16xf32>
    %674 = math.exp %673 : vector<64x16xf32>
    %cst_202 = arith.constant dense<0.000000e+00> : vector<64xf32>
    %675 = vector.multi_reduction <add>, %674, %cst_202 [1] : vector<64x16xf32> to vector<64xf32>
    %676 = vector.shape_cast %675 : vector<64xf32> to vector<64x1xf32>
    %677 = math.log %676 : vector<64x1xf32>
    %678 = arith.addf %671, %677 : vector<64x1xf32>
    %679 = vector.broadcast %678 : vector<64x1xf32> to vector<64x16xf32>
    %680 = arith.subf %669, %679 : vector<64x16xf32>
    %c0_203 = arith.constant 0 : index
    %c0_204 = arith.constant 0 : index
    %681 = vector.load %arg19[%c0_203, %c0_204] : memref<64x16xf32, #tpu.memory_space<vmem>>, vector<64x16xf32>
    tpu.vector_store %arg19[%c0_203, %c0_204], %680 {strides = array<i32>} : memref<64x16xf32, #tpu.memory_space<vmem>>, vector<64x16xf32>,
    return
  }
}

</mosaic_0001>

<llo_original>
// kernel: tpu_custom_call.1
$region0: #{tpu_custom_call.1}
  #allocation0 [shape = 'u32[]', space=smem, size = 0x4, offset = 0x4, fixed_abs, tag = 'smem constant byte address 0x4 - core index']
  #allocation1 [shape = 'u32[72,128]{1,0:T(1,128)}', space=vmem, size = 0x9000, scoped, tag = 'internal scratch']
  #allocation2 [shape = 'f32[64,96]{1,0:T(8,128)}', space=vmem, size = 0x8000, scoped, tag = 'scratch operand']
  #allocation3 [shape = 'f32[64,32]{1,0:T(8,128)}', space=vmem, size = 0x8000, scoped, tag = 'scratch operand']
  %s0 = inlined_call_operand.hbm [shape: f32[8,8], index: 0, kind: input, shape index: {}]
  %s1 = inlined_call_operand.vmem [shape: s32[64,1], index: 1, kind: input, shape index: {}]
  %s2 = inlined_call_operand.hbm [shape: f32[8,16], index: 2, kind: input, shape index: {}]
  %s3 = inlined_call_operand.hbm [shape: f32[1,16], index: 3, kind: input, shape index: {}]
  %s4 = inlined_call_operand.hbm [shape: f32[1,16], index: 4, kind: input, shape index: {}]
  %s5 = inlined_call_operand.hbm [shape: f32[1,16], index: 5, kind: input, shape index: {}]
  %s6 = inlined_call_operand.vmem [shape: f32[16,32], index: 6, kind: input, shape index: {}]
  %s7 = inlined_call_operand.hbm [shape: f32[1,32], index: 7, kind: input, shape index: {}]
  %s8 = inlined_call_operand.hbm [shape: f32[1,32], index: 8, kind: input, shape index: {}]
  %s9 = inlined_call_operand.hbm [shape: f32[1,32], index: 9, kind: input, shape index: {}]
  %s10 = inlined_call_operand.vmem [shape: f32[32,32], index: 10, kind: input, shape index: {}]
  %s11 = inlined_call_operand.hbm [shape: f32[1,32], index: 11, kind: input, shape index: {}]
  %s12 = inlined_call_operand.hbm [shape: f32[16,32], index: 12, kind: input, shape index: {}]
  %s13 = inlined_call_operand.vmem [shape: f32[2,32,96], index: 13, kind: input, shape index: {}]
  %s14 = inlined_call_operand.hbm [shape: f32[2,32,96], index: 14, kind: input, shape index: {}]
  %s15 = inlined_call_operand.hbm [shape: f32[2,1,96], index: 15, kind: input, shape index: {}]
  %s16 = inlined_call_operand.hbm [shape: f32[2,1,32], index: 16, kind: input, shape index: {}]
  %s17 = inlined_call_operand.vmem [shape: f32[32,16], index: 17, kind: input, shape index: {}]
  %s18 = inlined_call_operand.vmem [shape: f32[1,16], index: 18, kind: input, shape index: {}]
  %s19 = inlined_call_operand.vmem [shape: f32[64,16], index: 19, kind: output, shape index: {}]
  %s20 = sld [smem:[#allocation0]]
  $region138: #{tpu_custom_call.1} parent=0
    _
  %s22 = ssub.s32 1, %s20
  %s23 = scalar_select 0, %s22, %s20
  $region1: #{tpu_custom_call.1} parent=0
    #allocation4 [shape = 'u8[4096]{0}', space=vmem, size = 0x1000, scoped, tag = 'input window, operand 0, single buffered']
    #allocation5 [shape = 's32[1]{0}', space=sflag, size = 0x4, scoped, tag = 'scoped memory for tpu_custom_call.1']
    #allocation6 [shape = 'u8[4096]{0}', space=vmem, size = 0x1000, scoped, tag = 'input window, operand 2, single buffered']
    #allocation7 [shape = 's32[1]{0}', space=sflag, size = 0x4, scoped, tag = 'scoped memory for tpu_custom_call.1']
    #allocation8 [shape = 'u8[512]{0}', space=vmem, size = 0x400, scoped, tag = 'input window, operand 3, single buffered']
    #allocation9 [shape = 'u8[512]{0}', space=vmem, size = 0x400, scoped, tag = 'input window, operand 4, single buffered']
    #allocation10 [shape = 's32[1]{0}', space=sflag, size = 0x4, scoped, tag = 'scoped memory for tpu_custom_call.1']
    #allocation11 [shape = 'u8[512]{0}', space=vmem, size = 0x400, scoped, tag = 'input window, operand 5, single buffered']
    #allocation12 [shape = 'u8[512]{0}', space=vmem, size = 0x400, scoped, tag = 'input window, operand 7, single buffered']
    #allocation13 [shape = 's32[1]{0}', space=sflag, size = 0x4, scoped, tag = 'scoped memory for tpu_custom_call.1']
    #allocation14 [shape = 'u8[512]{0}', space=vmem, size = 0x400, scoped, tag = 'input window, operand 8, single buffered']
    #allocation15 [shape = 'u8[512]{0}', space=vmem, size = 0x400, scoped, tag = 'input window, operand 9, single buffered']
    #allocation16 [shape = 's32[1]{0}', space=sflag, size = 0x4, scoped, tag = 'scoped memory for tpu_custom_call.1']
    #allocation17 [shape = 'u8[512]{0}', space=vmem, size = 0x400, scoped, tag = 'input window, operand 11, single buffered']
    #allocation18 [shape = 'u8[8192]{0}', space=vmem, size = 0x2000, scoped, tag = 'input window, operand 12, single buffered']
    #allocation19 [shape = 's32[1]{0}', space=sflag, size = 0x4, scoped, tag = 'scoped memory for tpu_custom_call.1']
    #allocation20 [shape = 'u8[32768]{0}', space=vmem, size = 0x8000, scoped, tag = 'input window, operand 14, single buffered']
    #allocation21 [shape = 'u8[1024]{0}', space=vmem, size = 0x400, scoped, tag = 'input window, operand 15, single buffered']
    #allocation22 [shape = 's32[1]{0}', space=sflag, size = 0x4, scoped, tag = 'scoped memory for tpu_custom_call.1']
    #allocation23 [shape = 'u8[1024]{0}', space=vmem, size = 0x400, scoped, tag = 'input window, operand 16, single buffered']
    %24 = vsyncpa [#allocation5], 0
    %25 = vsyncpa [#allocation7], 0
    %26 = vsyncpa [#allocation10], 0
    %27 = vsyncpa [#allocation13], 0
    %28 = vsyncpa [#allocation16], 0
    %29 = vsyncpa [#allocation19], 0
    %30 = vsyncpa [#allocation22], 0
    // Predicated region
    $region2: #{tpu_custom_call.1} parent=1 // pred_check
      _
    $region3: #{tpu_custom_call.1} parent=1 // pred_check_branch
      %32 = sbr.rel (0) target = $region5
    $region4: #{tpu_custom_call.1} parent=1 // pred_region
      %34 = vsyncadd [#allocation5], 0
      %s36 = sshll.u32 %s0, 4
      %s37 = int_to_ptr.hbm [resolvable:$true] %s36
      %s38 = sshll.u32 [#allocation4], 4
      %s39 = int_to_ptr.vmem [resolvable:$true] %s38
      %41 = dma.hbm_to_vmem [thread:$0]  %s37, 128, %s39, [#allocation5]
    $region5: #{tpu_custom_call.1} parent=1 // pred_fallthru
      _
    // Predicated region
    $region6: #{tpu_custom_call.1} parent=1 // pred_check
      _
    $region7: #{tpu_custom_call.1} parent=1 // pred_check_branch
      %43 = sbr.rel (0) target = $region9
    $region8: #{tpu_custom_call.1} parent=1 // pred_region
      _
    $region9: #{tpu_custom_call.1} parent=1 // pred_fallthru
      _
    // Predicated region
    $region10: #{tpu_custom_call.1} parent=1 // pred_check
      _
    $region11: #{tpu_custom_call.1} parent=1 // pred_check_branch
      %45 = sbr.rel (0) target = $region13
    $region12: #{tpu_custom_call.1} parent=1 // pred_region
      %47 = vsyncadd [#allocation7], 0
      %s49 = sshll.u32 %s2, 4
      %s50 = int_to_ptr.hbm [resolvable:$true] %s49
      %s51 = sshll.u32 [#allocation6], 4
      %s52 = int_to_ptr.vmem [resolvable:$true] %s51
      %54 = dma.hbm_to_vmem [thread:$0]  %s50, 128, %s52, [#allocation7]
    $region13: #{tpu_custom_call.1} parent=1 // pred_fallthru
      _
    // Predicated region
    $region14: #{tpu_custom_call.1} parent=1 // pred_check
      _
    $region15: #{tpu_custom_call.1} parent=1 // pred_check_branch
      %56 = sbr.rel (0) target = $region17
    $region16: #{tpu_custom_call.1} parent=1 // pred_region
      %58 = vsyncadd [#allocation7], 0
      %s60 = sshll.u32 %s3, 4
      %s61 = int_to_ptr.hbm [resolvable:$true] %s60
      %s62 = sshll.u32 [#allocation8], 4
      %s63 = int_to_ptr.vmem [resolvable:$true] %s62
      %65 = dma.hbm_to_vmem [thread:$0]  %s61, 16, %s63, [#allocation7]
    $region17: #{tpu_custom_call.1} parent=1 // pred_fallthru
      _
    // Predicated region
    $region18: #{tpu_custom_call.1} parent=1 // pred_check
      _
    $region19: #{tpu_custom_call.1} parent=1 // pred_check_branch
      %67 = sbr.rel (0) target = $region21
    $region20: #{tpu_custom_call.1} parent=1 // pred_region
      %69 = vsyncadd [#allocation10], 0
      %s71 = sshll.u32 %s4, 4
      %s72 = int_to_ptr.hbm [resolvable:$true] %s71
      %s73 = sshll.u32 [#allocation9], 4
      %s74 = int_to_ptr.vmem [resolvable:$true] %s73
      %76 = dma.hbm_to_vmem [thread:$0]  %s72, 16, %s74, [#allocation10]
    $region21: #{tpu_custom_call.1} parent=1 // pred_fallthru
      _
    // Predicated region
    $region22: #{tpu_custom_call.1} parent=1 // pred_check
      _
    $region23: #{tpu_custom_call.1} parent=1 // pred_check_branch
      %78 = sbr.rel (0) target = $region25
    $region24: #{tpu_custom_call.1} parent=1 // pred_region
      %80 = vsyncadd [#allocation10], 0
      %s82 = sshll.u32 %s5, 4
      %s83 = int_to_ptr.hbm [resolvable:$true] %s82
      %s84 = sshll.u32 [#allocation11], 4
      %s85 = int_to_ptr.vmem [resolvable:$true] %s84
      %87 = dma.hbm_to_vmem [thread:$0]  %s83, 16, %s85, [#allocation10]
    $region25: #{tpu_custom_call.1} parent=1 // pred_fallthru
      _
    // Predicated region
    $region26: #{tpu_custom_call.1} parent=1 // pred_check
      _
    $region27: #{tpu_custom_call.1} parent=1 // pred_check_branch
      %89 = sbr.rel (0) target = $region29
    $region28: #{tpu_custom_call.1} parent=1 // pred_region
      _
    $region29: #{tpu_custom_call.1} parent=1 // pred_fallthru
      _
    // Predicated region
    $region30: #{tpu_custom_call.1} parent=1 // pred_check
      _
    $region31: #{tpu_custom_call.1} parent=1 // pred_check_branch
      %91 = sbr.rel (0) target = $region33
    $region32: #{tpu_custom_call.1} parent=1 // pred_region
      %93 = vsyncadd [#allocation13], 0
      %s95 = sshll.u32 %s7, 4
      %s96 = int_to_ptr.hbm [resolvable:$true] %s95
      %s97 = sshll.u32 [#allocation12], 4
      %s98 = int_to_ptr.vmem [resolvable:$true] %s97
      %100 = dma.hbm_to_vmem [thread:$0]  %s96, 16, %s98, [#allocation13]
    $region33: #{tpu_custom_call.1} parent=1 // pred_fallthru
      _
    // Predicated region
    $region34: #{tpu_custom_call.1} parent=1 // pred_check
      _
    $region35: #{tpu_custom_call.1} parent=1 // pred_check_branch
      %102 = sbr.rel (0) target = $region37
    $region36: #{tpu_custom_call.1} parent=1 // pred_region
      %104 = vsyncadd [#allocation13], 0
      %s106 = sshll.u32 %s8, 4
      %s107 = int_to_ptr.hbm [resolvable:$true] %s106
      %s108 = sshll.u32 [#allocation14], 4
      %s109 = int_to_ptr.vmem [resolvable:$true] %s108
      %111 = dma.hbm_to_vmem [thread:$0]  %s107, 16, %s109, [#allocation13]
    $region37: #{tpu_custom_call.1} parent=1 // pred_fallthru
      _
    // Predicated region
    $region38: #{tpu_custom_call.1} parent=1 // pred_check
      _
    $region39: #{tpu_custom_call.1} parent=1 // pred_check_branch
      %113 = sbr.rel (0) target = $region41
    $region40: #{tpu_custom_call.1} parent=1 // pred_region
      %115 = vsyncadd [#allocation16], 0
      %s117 = sshll.u32 %s9, 4
      %s118 = int_to_ptr.hbm [resolvable:$true] %s117
      %s119 = sshll.u32 [#allocation15], 4
      %s120 = int_to_ptr.vmem [resolvable:$true] %s119
      %122 = dma.hbm_to_vmem [thread:$0]  %s118, 16, %s120, [#allocation16]
    $region41: #{tpu_custom_call.1} parent=1 // pred_fallthru
      _
    // Predicated region
    $region42: #{tpu_custom_call.1} parent=1 // pred_check
      _
    $region43: #{tpu_custom_call.1} parent=1 // pred_check_branch
      %124 = sbr.rel (0) target = $region45
    $region44: #{tpu_custom_call.1} parent=1 // pred_region
      _
    $region45: #{tpu_custom_call.1} parent=1 // pred_fallthru
      _
    // Predicated region
    $region46: #{tpu_custom_call.1} parent=1 // pred_check
      _
    $region47: #{tpu_custom_call.1} parent=1 // pred_check_branch
      %126 = sbr.rel (0) target = $region49
    $region48: #{tpu_custom_call.1} parent=1 // pred_region
      %128 = vsyncadd [#allocation16], 0
      %s130 = sshll.u32 %s11, 4
      %s131 = int_to_ptr.hbm [resolvable:$true] %s130
      %s132 = sshll.u32 [#allocation17], 4
      %s133 = int_to_ptr.vmem [resolvable:$true] %s132
      %135 = dma.hbm_to_vmem [thread:$0]  %s131, 16, %s133, [#allocation16]
    $region49: #{tpu_custom_call.1} parent=1 // pred_fallthru
      _
    // Predicated region
    $region50: #{tpu_custom_call.1} parent=1 // pred_check
      _
    $region51: #{tpu_custom_call.1} parent=1 // pred_check_branch
      %137 = sbr.rel (0) target = $region53
    $region52: #{tpu_custom_call.1} parent=1 // pred_region
      %139 = vsyncadd [#allocation19], 0
      %s140 = sshll.u32 %s12, 4
      %s141 = int_to_ptr.hbm [resolvable:$true] %s140
      %s142 = sshll.u32 [#allocation18], 4
      %s143 = int_to_ptr.vmem [resolvable:$true] %s142
      %148 = dma.hbm_to_vmem [thread:$0]  %s141, 256, %s143, [#allocation19], 128, 128, 8
    $region53: #{tpu_custom_call.1} parent=1 // pred_fallthru
      _
    // Predicated region
    $region54: #{tpu_custom_call.1} parent=1 // pred_check
      _
    $region55: #{tpu_custom_call.1} parent=1 // pred_check_branch
      %150 = sbr.rel (0) target = $region57
    $region56: #{tpu_custom_call.1} parent=1 // pred_region
      _
    $region57: #{tpu_custom_call.1} parent=1 // pred_fallthru
      _
    // Predicated region
    $region58: #{tpu_custom_call.1} parent=1 // pred_check
      _
    $region59: #{tpu_custom_call.1} parent=1 // pred_check_branch
      %152 = sbr.rel (0) target = $region61
    $region60: #{tpu_custom_call.1} parent=1 // pred_region
      %154 = vsyncadd [#allocation19], 0
      %s155 = sshll.u32 %s14, 4
      %s156 = int_to_ptr.hbm [resolvable:$true] %s155
      %s157 = sshll.u32 [#allocation20], 4
      %s158 = int_to_ptr.vmem [resolvable:$true] %s157
      %163 = dma.hbm_to_vmem [thread:$0]  %s156, 1024, %s158, [#allocation19], 128, 128, 8
    $region61: #{tpu_custom_call.1} parent=1 // pred_fallthru
      _
    // Predicated region
    $region62: #{tpu_custom_call.1} parent=1 // pred_check
      _
    $region63: #{tpu_custom_call.1} parent=1 // pred_check_branch
      %165 = sbr.rel (0) target = $region65
    $region64: #{tpu_custom_call.1} parent=1 // pred_region
      %167 = vsyncadd [#allocation22], 0
      %s168 = sshll.u32 %s15, 4
      %s169 = int_to_ptr.hbm [resolvable:$true] %s168
      %s170 = sshll.u32 [#allocation21], 4
      %s171 = int_to_ptr.vmem [resolvable:$true] %s170
      %176 = dma.hbm_to_vmem [thread:$0]  %s169, 32, %s171, [#allocation22], 16, 16, 1
    $region65: #{tpu_custom_call.1} parent=1 // pred_fallthru
      _
    // Predicated region
    $region66: #{tpu_custom_call.1} parent=1 // pred_check
      _
    $region67: #{tpu_custom_call.1} parent=1 // pred_check_branch
      %178 = sbr.rel (0) target = $region69
    $region68: #{tpu_custom_call.1} parent=1 // pred_region
      %180 = vsyncadd [#allocation22], 0
      %s181 = sshll.u32 %s16, 4
      %s182 = int_to_ptr.hbm [resolvable:$true] %s181
      %s183 = sshll.u32 [#allocation23], 4
      %s184 = int_to_ptr.vmem [resolvable:$true] %s183
      %189 = dma.hbm_to_vmem [thread:$0]  %s182, 32, %s184, [#allocation22], 16, 16, 1
    $region69: #{tpu_custom_call.1} parent=1 // pred_fallthru
      _
    // Predicated region
    $region70: #{tpu_custom_call.1} parent=1 // pred_check
      _
    $region71: #{tpu_custom_call.1} parent=1 // pred_check_branch
      %191 = sbr.rel (0) target = $region73
    $region72: #{tpu_custom_call.1} parent=1 // pred_region
      _
    $region73: #{tpu_custom_call.1} parent=1 // pred_fallthru
      _
    // Predicated region
    $region74: #{tpu_custom_call.1} parent=1 // pred_check
      _
    $region75: #{tpu_custom_call.1} parent=1 // pred_check_branch
      %193 = sbr.rel (0) target = $region77
    $region76: #{tpu_custom_call.1} parent=1 // pred_region
      _
    $region77: #{tpu_custom_call.1} parent=1 // pred_fallthru
      _
    // Predicated region
    $region78: #{tpu_custom_call.1} parent=1 // pred_check
      _
    $region79: #{tpu_custom_call.1} parent=1 // pred_check_branch
      %195 = sbr.rel (0) target = $region81
    $region80: #{tpu_custom_call.1} parent=1 // pred_region
      %197 = dma.done [#allocation5], 128
    $region81: #{tpu_custom_call.1} parent=1 // pred_fallthru
      _
    // Predicated region
    $region82: #{tpu_custom_call.1} parent=1 // pred_check
      _
    $region83: #{tpu_custom_call.1} parent=1 // pred_check_branch
      %199 = sbr.rel (0) target = $region85
    $region84: #{tpu_custom_call.1} parent=1 // pred_region
      %201 = dma.done [#allocation7], 128
    $region85: #{tpu_custom_call.1} parent=1 // pred_fallthru
      _
    // Predicated region
    $region86: #{tpu_custom_call.1} parent=1 // pred_check
      _
    $region87: #{tpu_custom_call.1} parent=1 // pred_check_branch
      %203 = sbr.rel (0) target = $region89
    $region88: #{tpu_custom_call.1} parent=1 // pred_region
      %205 = dma.done [#allocation7], 16
    $region89: #{tpu_custom_call.1} parent=1 // pred_fallthru
      _
    // Predicated region
    $region90: #{tpu_custom_call.1} parent=1 // pred_check
      _
    $region91: #{tpu_custom_call.1} parent=1 // pred_check_branch
      %207 = sbr.rel (0) target = $region93
    $region92: #{tpu_custom_call.1} parent=1 // pred_region
      %209 = dma.done [#allocation10], 16
    $region93: #{tpu_custom_call.1} parent=1 // pred_fallthru
      _
    // Predicated region
    $region94: #{tpu_custom_call.1} parent=1 // pred_check
      _
    $region95: #{tpu_custom_call.1} parent=1 // pred_check_branch
      %211 = sbr.rel (0) target = $region97
    $region96: #{tpu_custom_call.1} parent=1 // pred_region
      %213 = dma.done [#allocation10], 16
    $region97: #{tpu_custom_call.1} parent=1 // pred_fallthru
      _
    // Predicated region
    $region98: #{tpu_custom_call.1} parent=1 // pred_check
      _
    $region99: #{tpu_custom_call.1} parent=1 // pred_check_branch
      %215 = sbr.rel (0) target = $region101
    $region100: #{tpu_custom_call.1} parent=1 // pred_region
      %217 = dma.done [#allocation13], 16
    $region101: #{tpu_custom_call.1} parent=1 // pred_fallthru
      _
    // Predicated region
    $region102: #{tpu_custom_call.1} parent=1 // pred_check
      _
    $region103: #{tpu_custom_call.1} parent=1 // pred_check_branch
      %219 = sbr.rel (0) target = $region105
    $region104: #{tpu_custom_call.1} parent=1 // pred_region
      %221 = dma.done [#allocation13], 16
    $region105: #{tpu_custom_call.1} parent=1 // pred_fallthru
      _
    // Predicated region
    $region106: #{tpu_custom_call.1} parent=1 // pred_check
      _
    $region107: #{tpu_custom_call.1} parent=1 // pred_check_branch
      %223 = sbr.rel (0) target = $region109
    $region108: #{tpu_custom_call.1} parent=1 // pred_region
      %225 = dma.done [#allocation16], 16
    $region109: #{tpu_custom_call.1} parent=1 // pred_fallthru
      _
    // Predicated region
    $region110: #{tpu_custom_call.1} parent=1 // pred_check
      _
    $region111: #{tpu_custom_call.1} parent=1 // pred_check_branch
      %227 = sbr.rel (0) target = $region113
    $region112: #{tpu_custom_call.1} parent=1 // pred_region
      %229 = dma.done [#allocation16], 16
    $region113: #{tpu_custom_call.1} parent=1 // pred_fallthru
      _
    // Predicated region
    $region114: #{tpu_custom_call.1} parent=1 // pred_check
      _
    $region115: #{tpu_custom_call.1} parent=1 // pred_check_branch
      %231 = sbr.rel (0) target = $region117
    $region116: #{tpu_custom_call.1} parent=1 // pred_region
      %233 = dma.done [#allocation19], 256
    $region117: #{tpu_custom_call.1} parent=1 // pred_fallthru
      _
    // Predicated region
    $region118: #{tpu_custom_call.1} parent=1 // pred_check
      _
    $region119: #{tpu_custom_call.1} parent=1 // pred_check_branch
      %235 = sbr.rel (0) target = $region121
    $region120: #{tpu_custom_call.1} parent=1 // pred_region
      %237 = dma.done [#allocation19], 1024
    $region121: #{tpu_custom_call.1} parent=1 // pred_fallthru
      _
    // Predicated region
    $region122: #{tpu_custom_call.1} parent=1 // pred_check
      _
    $region123: #{tpu_custom_call.1} parent=1 // pred_check_branch
      %239 = sbr.rel (0) target = $region125
    $region124: #{tpu_custom_call.1} parent=1 // pred_region
      %241 = dma.done [#allocation22], 32
    $region125: #{tpu_custom_call.1} parent=1 // pred_fallthru
      _
    // Predicated region
    $region126: #{tpu_custom_call.1} parent=1 // pred_check
      _
    $region127: #{tpu_custom_call.1} parent=1 // pred_check_branch
      %243 = sbr.rel (0) target = $region129
    $region128: #{tpu_custom_call.1} parent=1 // pred_region
      %245 = dma.done [#allocation22], 32
    $region129: #{tpu_custom_call.1} parent=1 // pred_fallthru
      _
    %v246 = vlaneseq
    %v247 = vshrl.u32 %v246, 7
    %vm248 = vcmp.lt.s32.totalorder %v247, 4
    %v249 = vsel %vm248, 1, 0
    %v250 = vcvt.s32.f32 %v249
    %v251 = vld [vmem:[#allocation4] sm:$0xff]
    %v252 = vld [vmem:[#allocation6] sm:$0xff]
    %v253 = vld [vmem:[#allocation8] sm:$0x1]
    %v255 = vperm.slane %v253, 0
    %vm257 = vcmask 64512
    %v259 = vsel %vm257, %v251, 0
    %261 = vmatpush.msra.mxu0 0.0
    %262 = vmatpush.msra.mxu0 0.0
    %263 = vmatpush.msra.mxu0 0.0
    %264 = vmatpush.msra.mxu0 0.0
    %265 = vmatpush.msra.mxu0 0.0
    %266 = vmatpush.msra.mxu0 0.0
    %267 = vmatpush.msra.mxu0 0.0
    %268 = vmatpush.msra.mxu0 0.0
    %269 = vmatpush.msra.mxu0 0.0
    %270 = vmatpush.msra.mxu0 0.0
    %271 = vmatpush.msra.mxu0 0.0
    %272 = vmatpush.msra.mxu0 0.0
    %273 = vmatpush.msra.mxu0 0.0
    %274 = vmatpush.msra.mxu0 0.0
    %275 = vmatpush.msra.mxu0 0.0
    %276 = vmatpush.msra.mxu0 %v252
    %277 = vmatmul.f32.gmra.mxu0 %v259
    %v278 = vpop.f32.mrf.mxu0
    %v279 = vadd.f32 %v255, %v278
    %280 = vdwg.mxu0
    %v281 = vmul.f32 %v279, %v250
    %vm282 = vcmask 130048
    %v283 = vsel %vm282, %v281, 0.0
    %v284 = vrot.slane %v283, 4
    %v285 = vadd.f32 %v283, %v284
    %v286 = vrot.slane %v285, 2
    %v287 = vadd.f32 %v285, %v286
    %v288 = vrot.slane %v287, 1
    %v289 = vadd.f32 %v287, %v288
    %v290 = vmul.f32 %v289, 0.25
    %v291 = vsub.f32 %v279, %v290
    %v292 = vmul.f32 %v291, %v250
    %v293 = vmul.f32 %v292, %v292
    %v294 = vsel %vm282, %v293, 0.0
    %v295 = vrot.slane %v294, 4
    %v296 = vadd.f32 %v294, %v295
    %v297 = vrot.slane %v296, 2
    %v298 = vadd.f32 %v296, %v297
    %v299 = vrot.slane %v298, 1
    %v300 = vadd.f32 %v298, %v299
    %v301 = vmul.f32 %v300, 0.25
    %v302 = vadd.f32 %v301, 1e-05
    %v303 = vrsqrt.pop %v302
    %v304 = vmul.f32 %v303, %v302
    %v305 = vmul.f32 %v304, %v303
    %v306 = vmul.f32 0.5, %v305
    %v307 = vsub.f32 1.5, %v306
    %v308 = vmul.f32 %v303, %v307
    %vm309 = vweird.f32 %v302
    %vm310 = vweird.f32 %v303
    %vm311 = vmor %vm309, %vm310
    %v312 = vsel %vm311, %v303, %v308
    %v313 = vmul.f32 %v291, %v312
    %v314 = vld [vmem:[#allocation9] sm:$0x1]
    %v316 = vperm.slane %v314, 0
    %v318 = vmul.f32 %v313, %v316
    %v319 = vld [vmem:[#allocation11] sm:$0x1]
    %v321 = vperm.slane %v319, 0
    %v323 = vadd.f32 %v318, %v321
    %v324 = vmax.f32 %v323, 0.0
    %v325 = vld [vmem:[%s6] sm:$0xff]
    %v326 = vld [vmem:[%s6 + $0x8] sm:$0xff]
    %v327 = vld [vmem:[#allocation12] sm:$0x1]
    %v329 = vperm.slane %v327, 0
    %v332 = vsel %vm282, %v324, 0
    %334 = vmatpush.msra.mxu0 0.0
    %335 = vmatpush.msra.mxu0 0.0
    %336 = vmatpush.msra.mxu0 0.0
    %337 = vmatpush.msra.mxu0 0.0
    %338 = vmatpush.msra.mxu0 0.0
    %339 = vmatpush.msra.mxu0 0.0
    %340 = vmatpush.msra.mxu0 0.0
    %341 = vmatpush.msra.mxu0 0.0
    %342 = vmatpush.msra.mxu0 0.0
    %343 = vmatpush.msra.mxu0 0.0
    %344 = vmatpush.msra.mxu0 0.0
    %345 = vmatpush.msra.mxu0 0.0
    %346 = vmatpush.msra.mxu0 0.0
    %347 = vmatpush.msra.mxu0 0.0
    %348 = vmatpush.msra.mxu0 %v326
    %349 = vmatpush.msra.mxu0 %v325
    %350 = vmatmul.f32.gmra.mxu0 %v332
    %v351 = vpop.f32.mrf.mxu0
    %v352 = vadd.f32 %v329, %v351
    %353 = vdwg.mxu0
    %v354 = vmul.f32 %v352, %v250
    %vm355 = vcmask 261120
    %v356 = vsel %vm355, %v354, 0.0
    %v357 = vrot.slane %v356, 4
    %v358 = vadd.f32 %v356, %v357
    %v359 = vrot.slane %v358, 2
    %v360 = vadd.f32 %v358, %v359
    %v361 = vrot.slane %v360, 1
    %v362 = vadd.f32 %v360, %v361
    %v363 = vmul.f32 %v362, 0.25
    %v364 = vsub.f32 %v352, %v363
    %v365 = vmul.f32 %v364, %v250
    %v366 = vmul.f32 %v365, %v365
    %v367 = vsel %vm355, %v366, 0.0
    %v368 = vrot.slane %v367, 4
    %v369 = vadd.f32 %v367, %v368
    %v370 = vrot.slane %v369, 2
    %v371 = vadd.f32 %v369, %v370
    %v372 = vrot.slane %v371, 1
    %v373 = vadd.f32 %v371, %v372
    %v374 = vmul.f32 %v373, 0.25
    %v375 = vadd.f32 %v374, 1e-05
    %v376 = vrsqrt.pop %v375
    %v377 = vmul.f32 %v376, %v375
    %v378 = vmul.f32 %v377, %v376
    %v379 = vmul.f32 0.5, %v378
    %v380 = vsub.f32 1.5, %v379
    %v381 = vmul.f32 %v376, %v380
    %vm382 = vweird.f32 %v375
    %vm383 = vweird.f32 %v376
    %vm384 = vmor %vm382, %vm383
    %v385 = vsel %vm384, %v376, %v381
    %v386 = vmul.f32 %v364, %v385
    %v387 = vld [vmem:[#allocation14] sm:$0x1]
    %v389 = vperm.slane %v387, 0
    %v391 = vmul.f32 %v386, %v389
    %v392 = vld [vmem:[#allocation15] sm:$0x1]
    %v394 = vperm.slane %v392, 0
    %v396 = vadd.f32 %v391, %v394
    %v397 = vmax.f32 %v396, 0.0
    %v398 = vld [vmem:[%s10] sm:$0xff]
    %v399 = vld [vmem:[%s10 + $0x8] sm:$0xff]
    %v400 = vld [vmem:[%s10 + $0x10] sm:$0xff]
    %v401 = vld [vmem:[%s10 + $0x18] sm:$0xff]
    %v402 = vld [vmem:[#allocation17] sm:$0x1]
    %v404 = vperm.slane %v402, 0
    %v407 = vsel %vm355, %v397, 0
    %409 = vmatpush.msra.mxu0 0.0
    %410 = vmatpush.msra.mxu0 0.0
    %411 = vmatpush.msra.mxu0 0.0
    %412 = vmatpush.msra.mxu0 0.0
    %413 = vmatpush.msra.mxu0 0.0
    %414 = vmatpush.msra.mxu0 0.0
    %415 = vmatpush.msra.mxu0 0.0
    %416 = vmatpush.msra.mxu0 0.0
    %417 = vmatpush.msra.mxu0 0.0
    %418 = vmatpush.msra.mxu0 0.0
    %419 = vmatpush.msra.mxu0 0.0
    %420 = vmatpush.msra.mxu0 0.0
    %421 = vmatpush.msra.mxu0 %v401
    %422 = vmatpush.msra.mxu0 %v400
    %423 = vmatpush.msra.mxu0 %v399
    %424 = vmatpush.msra.mxu0 %v398
    %425 = vmatmul.f32.gmra.mxu0 %v407
    %v426 = vpop.f32.mrf.mxu0
    %v427 = vadd.f32 %v404, %v426
    %428 = vdwg.mxu0
    %v429 = vld [vmem:[%s1] sm:$0xff]
    %v430 = vld [vmem:[%s1 + $0x8] sm:$0xff]
    %v431 = vld [vmem:[%s1 + $0x10] sm:$0xff]
    %v432 = vld [vmem:[%s1 + $0x18] sm:$0xff]
    %v433 = vld [vmem:[%s1 + $0x20] sm:$0xff]
    %v434 = vld [vmem:[%s1 + $0x28] sm:$0xff]
    %v435 = vld [vmem:[%s1 + $0x30] sm:$0xff]
    %v436 = vld [vmem:[%s1 + $0x38] sm:$0xff]
    %v437 = vlaneseq
    %v438 = vand.u32 %v437, 127
    %439 = vset.pattern.permute.xlu0 0
    %440 = vperm.xlu0 %439, %v429
    %v441 = vpop.permute.xlu0 %440
    %442 = vset.pattern.permute.xlu0 0
    %443 = vperm.xlu0 %442, %v430
    %v444 = vpop.permute.xlu0 %443
    %445 = vset.pattern.permute.xlu0 0
    %446 = vperm.xlu0 %445, %v431
    %v447 = vpop.permute.xlu0 %446
    %448 = vset.pattern.permute.xlu0 0
    %449 = vperm.xlu0 %448, %v432
    %v450 = vpop.permute.xlu0 %449
    %451 = vset.pattern.permute.xlu0 0
    %452 = vperm.xlu0 %451, %v433
    %v453 = vpop.permute.xlu0 %452
    %454 = vset.pattern.permute.xlu0 0
    %455 = vperm.xlu0 %454, %v434
    %v456 = vpop.permute.xlu0 %455
    %457 = vset.pattern.permute.xlu0 0
    %458 = vperm.xlu0 %457, %v435
    %v459 = vpop.permute.xlu0 %458
    %460 = vset.pattern.permute.xlu0 0
    %461 = vperm.xlu0 %460, %v436
    %v462 = vpop.permute.xlu0 %461
    %vm463 = vcmp.eq.s32.totalorder %v441, %v438
    %vm464 = vcmp.eq.s32.totalorder %v444, %v438
    %vm465 = vcmp.eq.s32.totalorder %v447, %v438
    %vm466 = vcmp.eq.s32.totalorder %v450, %v438
    %vm467 = vcmp.eq.s32.totalorder %v453, %v438
    %vm468 = vcmp.eq.s32.totalorder %v456, %v438
    %vm469 = vcmp.eq.s32.totalorder %v459, %v438
    %vm470 = vcmp.eq.s32.totalorder %v462, %v438
    %v471 = vsel %vm463, 1, 0
    %v472 = vsel %vm464, 1, 0
    %v473 = vsel %vm465, 1, 0
    %v474 = vsel %vm466, 1, 0
    %v475 = vsel %vm467, 1, 0
    %v476 = vsel %vm468, 1, 0
    %v477 = vsel %vm469, 1, 0
    %v478 = vsel %vm470, 1, 0
    %v479 = vcvt.s32.f32 %v471
    %v480 = vcvt.s32.f32 %v472
    %v481 = vcvt.s32.f32 %v473
    %v482 = vcvt.s32.f32 %v474
    %v483 = vcvt.s32.f32 %v475
    %v484 = vcvt.s32.f32 %v476
    %v485 = vcvt.s32.f32 %v477
    %v486 = vcvt.s32.f32 %v478
    %v487 = vld [vmem:[#allocation18] sm:$0xff]
    %v488 = vld [vmem:[#allocation18 + $0x8] sm:$0xff]
    %v490 = vsel %vm282, %v479, 0
    %v493 = vsel %vm282, %v480, 0
    %v496 = vsel %vm282, %v481, 0
    %v499 = vsel %vm282, %v482, 0
    %v502 = vsel %vm282, %v483, 0
    %v505 = vsel %vm282, %v484, 0
    %v508 = vsel %vm282, %v485, 0
    %v511 = vsel %vm282, %v486, 0
    %513 = vmatpush.msra.mxu0 0.0
    %514 = vmatpush.msra.mxu0 0.0
    %515 = vmatpush.msra.mxu0 0.0
    %516 = vmatpush.msra.mxu0 0.0
    %517 = vmatpush.msra.mxu0 0.0
    %518 = vmatpush.msra.mxu0 0.0
    %519 = vmatpush.msra.mxu0 0.0
    %520 = vmatpush.msra.mxu0 0.0
    %521 = vmatpush.msra.mxu0 0.0
    %522 = vmatpush.msra.mxu0 0.0
    %523 = vmatpush.msra.mxu0 0.0
    %524 = vmatpush.msra.mxu0 0.0
    %525 = vmatpush.msra.mxu0 0.0
    %526 = vmatpush.msra.mxu0 0.0
    %527 = vmatpush.msra.mxu0 %v488
    %528 = vmatpush.msra.mxu0 %v487
    %529 = vmatmul.f32.gmra.mxu0 %v490
    %v530 = vpop.f32.mrf.mxu0
    %v531 = vadd.f32 0.0, %v530
    %532 = vmatmul.f32.gmra.mxu0 %v493
    %v533 = vpop.f32.mrf.mxu0
    %v534 = vadd.f32 0.0, %v533
    %535 = vmatmul.f32.gmra.mxu0 %v496
    %v536 = vpop.f32.mrf.mxu0
    %v537 = vadd.f32 0.0, %v536
    %538 = vmatmul.f32.gmra.mxu0 %v499
    %v539 = vpop.f32.mrf.mxu0
    %v540 = vadd.f32 0.0, %v539
    %541 = vmatmul.f32.gmra.mxu0 %v502
    %v542 = vpop.f32.mrf.mxu0
    %v543 = vadd.f32 0.0, %v542
    %544 = vmatmul.f32.gmra.mxu0 %v505
    %v545 = vpop.f32.mrf.mxu0
    %v546 = vadd.f32 0.0, %v545
    %547 = vmatmul.f32.gmra.mxu0 %v508
    %v548 = vpop.f32.mrf.mxu0
    %v549 = vadd.f32 0.0, %v548
    %550 = vmatmul.f32.gmra.mxu0 %v511
    %v551 = vpop.f32.mrf.mxu0
    %v552 = vadd.f32 0.0, %v551
    %553 = vdwg.mxu0
    %v554 = vld [vmem:[%s13] sm:$0xff]
    %v555 = vld [vmem:[%s13 + $0x8] sm:$0xff]
    %v556 = vld [vmem:[%s13 + $0x10] sm:$0xff]
    %v557 = vld [vmem:[%s13 + $0x18] sm:$0xff]
    %v558 = vld [vmem:[#allocation21] sm:$0x1]
    %v560 = vperm.slane %v558, 0
    %v563 = vsel %vm355, %v531, 0
    %v566 = vsel %vm355, %v534, 0
    %v569 = vsel %vm355, %v537, 0
    %v572 = vsel %vm355, %v540, 0
    %v575 = vsel %vm355, %v543, 0
    %v578 = vsel %vm355, %v546, 0
    %v581 = vsel %vm355, %v549, 0
    %v584 = vsel %vm355, %v552, 0
    %586 = vmatpush.msra.mxu0 0.0
    %587 = vmatpush.msra.mxu0 0.0
    %588 = vmatpush.msra.mxu0 0.0
    %589 = vmatpush.msra.mxu0 0.0
    %590 = vmatpush.msra.mxu0 0.0
    %591 = vmatpush.msra.mxu0 0.0
    %592 = vmatpush.msra.mxu0 0.0
    %593 = vmatpush.msra.mxu0 0.0
    %594 = vmatpush.msra.mxu0 0.0
    %595 = vmatpush.msra.mxu0 0.0
    %596 = vmatpush.msra.mxu0 0.0
    %597 = vmatpush.msra.mxu0 0.0
    %598 = vmatpush.msra.mxu0 %v557
    %599 = vmatpush.msra.mxu0 %v556
    %600 = vmatpush.msra.mxu0 %v555
    %601 = vmatpush.msra.mxu0 %v554
    %602 = vmatmul.f32.gmra.mxu0 %v563
    %v603 = vpop.f32.mrf.mxu0
    %v604 = vadd.f32 %v560, %v603
    %605 = vmatmul.f32.gmra.mxu0 %v566
    %v606 = vpop.f32.mrf.mxu0
    %v607 = vadd.f32 %v560, %v606
    %608 = vmatmul.f32.gmra.mxu0 %v569
    %v609 = vpop.f32.mrf.mxu0
    %v610 = vadd.f32 %v560, %v609
    %611 = vmatmul.f32.gmra.mxu0 %v572
    %v612 = vpop.f32.mrf.mxu0
    %v613 = vadd.f32 %v560, %v612
    %614 = vmatmul.f32.gmra.mxu0 %v575
    %v615 = vpop.f32.mrf.mxu0
    %v616 = vadd.f32 %v560, %v615
    %617 = vmatmul.f32.gmra.mxu0 %v578
    %v618 = vpop.f32.mrf.mxu0
    %v619 = vadd.f32 %v560, %v618
    %620 = vmatmul.f32.gmra.mxu0 %v581
    %v621 = vpop.f32.mrf.mxu0
    %v622 = vadd.f32 %v560, %v621
    %623 = vmatmul.f32.gmra.mxu0 %v584
    %v624 = vpop.f32.mrf.mxu0
    %v625 = vadd.f32 %v560, %v624
    %626 = vdwg.mxu0
    %vm627 = vcmask 785408
    %628 = vst.msk [vmem:[#allocation2] sm:$0xff] %vm627, %v604
    %629 = vst.msk [vmem:[#allocation2 + $0x8] sm:$0xff] %vm627, %v607
    %630 = vst.msk [vmem:[#allocation2 + $0x10] sm:$0xff] %vm627, %v610
    %631 = vst.msk [vmem:[#allocation2 + $0x18] sm:$0xff] %vm627, %v613
    %632 = vst.msk [vmem:[#allocation2 + $0x20] sm:$0xff] %vm627, %v616
    %633 = vst.msk [vmem:[#allocation2 + $0x28] sm:$0xff] %vm627, %v619
    %634 = vst.msk [vmem:[#allocation2 + $0x30] sm:$0xff] %vm627, %v622
    %635 = vst.msk [vmem:[#allocation2 + $0x38] sm:$0xff] %vm627, %v625
    %v636 = vld [vmem:[#allocation20] sm:$0xff]
    %v637 = vld [vmem:[#allocation20 + $0x8] sm:$0xff]
    %v638 = vld [vmem:[#allocation20 + $0x10] sm:$0xff]
    %v639 = vld [vmem:[#allocation20 + $0x18] sm:$0xff]
    %v640 = vld [vmem:[#allocation23] sm:$0x1]
    %v642 = vperm.slane %v640, 0
    %v643 = vld [vmem:[#allocation2] sm:$0xff]
    %v645 = vsel %vm355, %v427, 0
    %647 = vmatpush.msra.mxu0 0.0
    %648 = vmatpush.msra.mxu0 0.0
    %649 = vmatpush.msra.mxu0 0.0
    %650 = vmatpush.msra.mxu0 0.0
    %651 = vmatpush.msra.mxu0 0.0
    %652 = vmatpush.msra.mxu0 0.0
    %653 = vmatpush.msra.mxu0 0.0
    %654 = vmatpush.msra.mxu0 0.0
    %655 = vmatpush.msra.mxu0 0.0
    %656 = vmatpush.msra.mxu0 0.0
    %657 = vmatpush.msra.mxu0 0.0
    %658 = vmatpush.msra.mxu0 0.0
    %659 = vmatpush.msra.mxu0 %v639
    %660 = vmatpush.msra.mxu0 %v638
    %661 = vmatpush.msra.mxu0 %v637
    %662 = vmatpush.msra.mxu0 %v636
    %663 = vmatmul.f32.gmra.mxu0 %v645
    %v664 = vpop.f32.mrf.mxu0
    %v665 = vadd.f32 0.0, %v664
    %666 = vdwg.mxu0
    %v667 = vadd.f32 %v643, %v665
    %v668 = vxor.u32 %v667, 2147483648
    %v669 = vmul.f32 %v668, 1.442695
    %v670 = vpow.pop %v669
    %v671 = vadd.f32 %v670, 1.0
    %v672 = vrcp.pop %v671
    %v673 = vmul.f32 %v671, %v672
    %v674 = vsub.f32 1.0, %v673
    %v675 = vmul.f32 %v672, %v674
    %v676 = vadd.f32 %v672, %v675
    %vm677 = vweird.f32 %v671
    %vm678 = vweird.f32 %v672
    %vm679 = vmor %vm677, %vm678
    %v680 = vsel %vm679, %v672, %v676
    %v681 = vand.u32 2147483647, %v671
    %vm682 = vcmp.eq.f32.partialorder %v681, 8.507059e+37
    %v683 = vand.u32 %v671, 2147483648
    %v684 = vor.u32 1.1754944e-38, %v683
    %v685 = vsel %vm682, %v684, %v680
    %v686 = vmul.f32 1.0, %v685
    %687 = vrot.lane.b32.xlu0 %v642, 64
    %v688 = vpop.permute.xlu0 %687
    %v690 = vadd.f32 %v665, %v688
    %692 = vrot.lane.b32.xlu0 %v690, 64
    %v693 = vpop.permute.xlu0 %692
    %v695 = vmul.f32 %v686, %v693
    %697 = vrot.lane.b32.xlu0 %v695, 64
    %v698 = vpop.permute.xlu0 %697
    %v700 = vadd.f32 %v643, %v698
    %v701 = vtanh.pop %v700
    %v702 = vsub.f32 1.0, %v686
    %704 = vrot.lane.b32.xlu0 %v701, 96
    %v705 = vpop.permute.xlu0 %704
    %v707 = vmul.f32 %v702, %v705
    %708 = vrot.lane.b32.xlu0 %v427, 32
    %v709 = vpop.permute.xlu0 %708
    %v711 = vmul.f32 %v686, %v709
    %v712 = vadd.f32 %v707, %v711
    %714 = vrot.lane.b32.xlu0 %v712, 96
    %v715 = vpop.permute.xlu0 %714
    %717 = vst.msk [vmem:[#allocation3] sm:$0xff] %vm355, %v715
    %s718 = scalar_lea.vmem [#allocation2], 8
    %v719 = vld [vmem:[%s718] sm:$0xff]
    %v720 = vsel %vm355, %v715, 0
    %722 = vmatpush.msra.mxu0 0.0
    %723 = vmatpush.msra.mxu0 0.0
    %724 = vmatpush.msra.mxu0 0.0
    %725 = vmatpush.msra.mxu0 0.0
    %726 = vmatpush.msra.mxu0 0.0
    %727 = vmatpush.msra.mxu0 0.0
    %728 = vmatpush.msra.mxu0 0.0
    %729 = vmatpush.msra.mxu0 0.0
    %730 = vmatpush.msra.mxu0 0.0
    %731 = vmatpush.msra.mxu0 0.0
    %732 = vmatpush.msra.mxu0 0.0
    %733 = vmatpush.msra.mxu0 0.0
    %734 = vmatpush.msra.mxu0 %v639
    %735 = vmatpush.msra.mxu0 %v638
    %736 = vmatpush.msra.mxu0 %v637
    %737 = vmatpush.msra.mxu0 %v636
    %738 = vmatmul.f32.gmra.mxu0 %v720
    %v739 = vpop.f32.mrf.mxu0
    %v740 = vadd.f32 0.0, %v739
    %741 = vdwg.mxu0
    %v742 = vadd.f32 %v719, %v740
    %v743 = vxor.u32 %v742, 2147483648
    %v744 = vmul.f32 %v743, 1.442695
    %v745 = vpow.pop %v744
    %v746 = vadd.f32 %v745, 1.0
    %v747 = vrcp.pop %v746
    %v748 = vmul.f32 %v746, %v747
    %v749 = vsub.f32 1.0, %v748
    %v750 = vmul.f32 %v747, %v749
    %v751 = vadd.f32 %v747, %v750
    %vm752 = vweird.f32 %v746
    %vm753 = vweird.f32 %v747
    %vm754 = vmor %vm752, %vm753
    %v755 = vsel %vm754, %v747, %v751
    %v756 = vand.u32 2147483647, %v746
    %vm757 = vcmp.eq.f32.partialorder %v756, 8.507059e+37
    %v758 = vand.u32 %v746, 2147483648
    %v759 = vor.u32 1.1754944e-38, %v758
    %v760 = vsel %vm757, %v759, %v755
    %v761 = vmul.f32 1.0, %v760
    %v762 = vadd.f32 %v740, %v688
    %764 = vrot.lane.b32.xlu0 %v762, 64
    %v765 = vpop.permute.xlu0 %764
    %v767 = vmul.f32 %v761, %v765
    %769 = vrot.lane.b32.xlu0 %v767, 64
    %v770 = vpop.permute.xlu0 %769
    %v772 = vadd.f32 %v719, %v770
    %v773 = vtanh.pop %v772
    %v774 = vsub.f32 1.0, %v761
    %776 = vrot.lane.b32.xlu0 %v773, 96
    %v777 = vpop.permute.xlu0 %776
    %v779 = vmul.f32 %v774, %v777
    %v780 = vmul.f32 %v761, %v712
    %v781 = vadd.f32 %v779, %v780
    %783 = vrot.lane.b32.xlu0 %v781, 96
    %v784 = vpop.permute.xlu0 %783
    %s786 = scalar_lea.vmem [#allocation3], 8
    %787 = vst.msk [vmem:[%s786] sm:$0xff] %vm355, %v784
    %s788 = scalar_lea.vmem [#allocation2], 16
    %v789 = vld [vmem:[%s788] sm:$0xff]
    %v790 = vsel %vm355, %v784, 0
    %792 = vmatpush.msra.mxu0 0.0
    %793 = vmatpush.msra.mxu0 0.0
    %794 = vmatpush.msra.mxu0 0.0
    %795 = vmatpush.msra.mxu0 0.0
    %796 = vmatpush.msra.mxu0 0.0
    %797 = vmatpush.msra.mxu0 0.0
    %798 = vmatpush.msra.mxu0 0.0
    %799 = vmatpush.msra.mxu0 0.0
    %800 = vmatpush.msra.mxu0 0.0
    %801 = vmatpush.msra.mxu0 0.0
    %802 = vmatpush.msra.mxu0 0.0
    %803 = vmatpush.msra.mxu0 0.0
    %804 = vmatpush.msra.mxu0 %v639
    %805 = vmatpush.msra.mxu0 %v638
    %806 = vmatpush.msra.mxu0 %v637
    %807 = vmatpush.msra.mxu0 %v636
    %808 = vmatmul.f32.gmra.mxu0 %v790
    %v809 = vpop.f32.mrf.mxu0
    %v810 = vadd.f32 0.0, %v809
    %811 = vdwg.mxu0
    %v812 = vadd.f32 %v789, %v810
    %v813 = vxor.u32 %v812, 2147483648
    %v814 = vmul.f32 %v813, 1.442695
    %v815 = vpow.pop %v814
    %v816 = vadd.f32 %v815, 1.0
    %v817 = vrcp.pop %v816
    %v818 = vmul.f32 %v816, %v817
    %v819 = vsub.f32 1.0, %v818
    %v820 = vmul.f32 %v817, %v819
    %v821 = vadd.f32 %v817, %v820
    %vm822 = vweird.f32 %v816
    %vm823 = vweird.f32 %v817
    %vm824 = vmor %vm822, %vm823
    %v825 = vsel %vm824, %v817, %v821
    %v826 = vand.u32 2147483647, %v816
    %vm827 = vcmp.eq.f32.partialorder %v826, 8.507059e+37
    %v828 = vand.u32 %v816, 2147483648
    %v829 = vor.u32 1.1754944e-38, %v828
    %v830 = vsel %vm827, %v829, %v825
    %v831 = vmul.f32 1.0, %v830
    %v832 = vadd.f32 %v810, %v688
    %834 = vrot.lane.b32.xlu0 %v832, 64
    %v835 = vpop.permute.xlu0 %834
    %v837 = vmul.f32 %v831, %v835
    %839 = vrot.lane.b32.xlu0 %v837, 64
    %v840 = vpop.permute.xlu0 %839
    %v842 = vadd.f32 %v789, %v840
    %v843 = vtanh.pop %v842
    %v844 = vsub.f32 1.0, %v831
    %846 = vrot.lane.b32.xlu0 %v843, 96
    %v847 = vpop.permute.xlu0 %846
    %v849 = vmul.f32 %v844, %v847
    %v850 = vmul.f32 %v831, %v781
    %v851 = vadd.f32 %v849, %v850
    %853 = vrot.lane.b32.xlu0 %v851, 96
    %v854 = vpop.permute.xlu0 %853
    %s856 = scalar_lea.vmem [#allocation3], 16
    %857 = vst.msk [vmem:[%s856] sm:$0xff] %vm355, %v854
    %s858 = scalar_lea.vmem [#allocation2], 24
    %v859 = vld [vmem:[%s858] sm:$0xff]
    %v860 = vsel %vm355, %v854, 0
    %862 = vmatpush.msra.mxu0 0.0
    %863 = vmatpush.msra.mxu0 0.0
    %864 = vmatpush.msra.mxu0 0.0
    %865 = vmatpush.msra.mxu0 0.0
    %866 = vmatpush.msra.mxu0 0.0
    %867 = vmatpush.msra.mxu0 0.0
    %868 = vmatpush.msra.mxu0 0.0
    %869 = vmatpush.msra.mxu0 0.0
    %870 = vmatpush.msra.mxu0 0.0
    %871 = vmatpush.msra.mxu0 0.0
    %872 = vmatpush.msra.mxu0 0.0
    %873 = vmatpush.msra.mxu0 0.0
    %874 = vmatpush.msra.mxu0 %v639
    %875 = vmatpush.msra.mxu0 %v638
    %876 = vmatpush.msra.mxu0 %v637
    %877 = vmatpush.msra.mxu0 %v636
    %878 = vmatmul.f32.gmra.mxu0 %v860
    %v879 = vpop.f32.mrf.mxu0
    %v880 = vadd.f32 0.0, %v879
    %881 = vdwg.mxu0
    %v882 = vadd.f32 %v859, %v880
    %v883 = vxor.u32 %v882, 2147483648
    %v884 = vmul.f32 %v883, 1.442695
    %v885 = vpow.pop %v884
    %v886 = vadd.f32 %v885, 1.0
    %v887 = vrcp.pop %v886
    %v888 = vmul.f32 %v886, %v887
    %v889 = vsub.f32 1.0, %v888
    %v890 = vmul.f32 %v887, %v889
    %v891 = vadd.f32 %v887, %v890
    %vm892 = vweird.f32 %v886
    %vm893 = vweird.f32 %v887
    %vm894 = vmor %vm892, %vm893
    %v895 = vsel %vm894, %v887, %v891
    %v896 = vand.u32 2147483647, %v886
    %vm897 = vcmp.eq.f32.partialorder %v896, 8.507059e+37
    %v898 = vand.u32 %v886, 2147483648
    %v899 = vor.u32 1.1754944e-38, %v898
    %v900 = vsel %vm897, %v899, %v895
    %v901 = vmul.f32 1.0, %v900
    %v902 = vadd.f32 %v880, %v688
    %904 = vrot.lane.b32.xlu0 %v902, 64
    %v905 = vpop.permute.xlu0 %904
    %v907 = vmul.f32 %v901, %v905
    %909 = vrot.lane.b32.xlu0 %v907, 64
    %v910 = vpop.permute.xlu0 %909
    %v912 = vadd.f32 %v859, %v910
    %v913 = vtanh.pop %v912
    %v914 = vsub.f32 1.0, %v901
    %916 = vrot.lane.b32.xlu0 %v913, 96
    %v917 = vpop.permute.xlu0 %916
    %v919 = vmul.f32 %v914, %v917
    %v920 = vmul.f32 %v901, %v851
    %v921 = vadd.f32 %v919, %v920
    %923 = vrot.lane.b32.xlu0 %v921, 96
    %v924 = vpop.permute.xlu0 %923
    %s926 = scalar_lea.vmem [#allocation3], 24
    %927 = vst.msk [vmem:[%s926] sm:$0xff] %vm355, %v924
    %s928 = scalar_lea.vmem [#allocation2], 32
    %v929 = vld [vmem:[%s928] sm:$0xff]
    %v930 = vsel %vm355, %v924, 0
    %932 = vmatpush.msra.mxu0 0.0
    %933 = vmatpush.msra.mxu0 0.0
    %934 = vmatpush.msra.mxu0 0.0
    %935 = vmatpush.msra.mxu0 0.0
    %936 = vmatpush.msra.mxu0 0.0
    %937 = vmatpush.msra.mxu0 0.0
    %938 = vmatpush.msra.mxu0 0.0
    %939 = vmatpush.msra.mxu0 0.0
    %940 = vmatpush.msra.mxu0 0.0
    %941 = vmatpush.msra.mxu0 0.0
    %942 = vmatpush.msra.mxu0 0.0
    %943 = vmatpush.msra.mxu0 0.0
    %944 = vmatpush.msra.mxu0 %v639
    %945 = vmatpush.msra.mxu0 %v638
    %946 = vmatpush.msra.mxu0 %v637
    %947 = vmatpush.msra.mxu0 %v636
    %948 = vmatmul.f32.gmra.mxu0 %v930
    %v949 = vpop.f32.mrf.mxu0
    %v950 = vadd.f32 0.0, %v949
    %951 = vdwg.mxu0
    %v952 = vadd.f32 %v929, %v950
    %v953 = vxor.u32 %v952, 2147483648
    %v954 = vmul.f32 %v953, 1.442695
    %v955 = vpow.pop %v954
    %v956 = vadd.f32 %v955, 1.0
    %v957 = vrcp.pop %v956
    %v958 = vmul.f32 %v956, %v957
    %v959 = vsub.f32 1.0, %v958
    %v960 = vmul.f32 %v957, %v959
    %v961 = vadd.f32 %v957, %v960
    %vm962 = vweird.f32 %v956
    %vm963 = vweird.f32 %v957
    %vm964 = vmor %vm962, %vm963
    %v965 = vsel %vm964, %v957, %v961
    %v966 = vand.u32 2147483647, %v956
    %vm967 = vcmp.eq.f32.partialorder %v966, 8.507059e+37
    %v968 = vand.u32 %v956, 2147483648
    %v969 = vor.u32 1.1754944e-38, %v968
    %v970 = vsel %vm967, %v969, %v965
    %v971 = vmul.f32 1.0, %v970
    %v972 = vadd.f32 %v950, %v688
    %974 = vrot.lane.b32.xlu0 %v972, 64
    %v975 = vpop.permute.xlu0 %974
    %v977 = vmul.f32 %v971, %v975
    %979 = vrot.lane.b32.xlu0 %v977, 64
    %v980 = vpop.permute.xlu0 %979
    %v982 = vadd.f32 %v929, %v980
    %v983 = vtanh.pop %v982
    %v984 = vsub.f32 1.0, %v971
    %986 = vrot.lane.b32.xlu0 %v983, 96
    %v987 = vpop.permute.xlu0 %986
    %v989 = vmul.f32 %v984, %v987
    %v990 = vmul.f32 %v971, %v921
    %v991 = vadd.f32 %v989, %v990
    %993 = vrot.lane.b32.xlu0 %v991, 96
    %v994 = vpop.permute.xlu0 %993
    %s996 = scalar_lea.vmem [#allocation3], 32
    %997 = vst.msk [vmem:[%s996] sm:$0xff] %vm355, %v994
    %s998 = scalar_lea.vmem [#allocation2], 40
    %v999 = vld [vmem:[%s998] sm:$0xff]
    %v1000 = vsel %vm355, %v994, 0
    %1002 = vmatpush.msra.mxu0 0.0
    %1003 = vmatpush.msra.mxu0 0.0
    %1004 = vmatpush.msra.mxu0 0.0
    %1005 = vmatpush.msra.mxu0 0.0
    %1006 = vmatpush.msra.mxu0 0.0
    %1007 = vmatpush.msra.mxu0 0.0
    %1008 = vmatpush.msra.mxu0 0.0
    %1009 = vmatpush.msra.mxu0 0.0
    %1010 = vmatpush.msra.mxu0 0.0
    %1011 = vmatpush.msra.mxu0 0.0
    %1012 = vmatpush.msra.mxu0 0.0
    %1013 = vmatpush.msra.mxu0 0.0
    %1014 = vmatpush.msra.mxu0 %v639
    %1015 = vmatpush.msra.mxu0 %v638
    %1016 = vmatpush.msra.mxu0 %v637
    %1017 = vmatpush.msra.mxu0 %v636
    %1018 = vmatmul.f32.gmra.mxu0 %v1000
    %v1019 = vpop.f32.mrf.mxu0
    %v1020 = vadd.f32 0.0, %v1019
    %1021 = vdwg.mxu0
    %v1022 = vadd.f32 %v999, %v1020
    %v1023 = vxor.u32 %v1022, 2147483648
    %v1024 = vmul.f32 %v1023, 1.442695
    %v1025 = vpow.pop %v1024
    %v1026 = vadd.f32 %v1025, 1.0
    %v1027 = vrcp.pop %v1026
    %v1028 = vmul.f32 %v1026, %v1027
    %v1029 = vsub.f32 1.0, %v1028
    %v1030 = vmul.f32 %v1027, %v1029
    %v1031 = vadd.f32 %v1027, %v1030
    %vm1032 = vweird.f32 %v1026
    %vm1033 = vweird.f32 %v1027
    %vm1034 = vmor %vm1032, %vm1033
    %v1035 = vsel %vm1034, %v1027, %v1031
    %v1036 = vand.u32 2147483647, %v1026
    %vm1037 = vcmp.eq.f32.partialorder %v1036, 8.507059e+37
    %v1038 = vand.u32 %v1026, 2147483648
    %v1039 = vor.u32 1.1754944e-38, %v1038
    %v1040 = vsel %vm1037, %v1039, %v1035
    %v1041 = vmul.f32 1.0, %v1040
    %v1042 = vadd.f32 %v1020, %v688
    %1044 = vrot.lane.b32.xlu0 %v1042, 64
    %v1045 = vpop.permute.xlu0 %1044
    %v1047 = vmul.f32 %v1041, %v1045
    %1049 = vrot.lane.b32.xlu0 %v1047, 64
    %v1050 = vpop.permute.xlu0 %1049
    %v1052 = vadd.f32 %v999, %v1050
    %v1053 = vtanh.pop %v1052
    %v1054 = vsub.f32 1.0, %v1041
    %1056 = vrot.lane.b32.xlu0 %v1053, 96
    %v1057 = vpop.permute.xlu0 %1056
    %v1059 = vmul.f32 %v1054, %v1057
    %v1060 = vmul.f32 %v1041, %v991
    %v1061 = vadd.f32 %v1059, %v1060
    %1063 = vrot.lane.b32.xlu0 %v1061, 96
    %v1064 = vpop.permute.xlu0 %1063
    %s1066 = scalar_lea.vmem [#allocation3], 40
    %1067 = vst.msk [vmem:[%s1066] sm:$0xff] %vm355, %v1064
    %s1068 = scalar_lea.vmem [#allocation2], 48
    %v1069 = vld [vmem:[%s1068] sm:$0xff]
    %v1070 = vsel %vm355, %v1064, 0
    %1072 = vmatpush.msra.mxu0 0.0
    %1073 = vmatpush.msra.mxu0 0.0
    %1074 = vmatpush.msra.mxu0 0.0
    %1075 = vmatpush.msra.mxu0 0.0
    %1076 = vmatpush.msra.mxu0 0.0
    %1077 = vmatpush.msra.mxu0 0.0
    %1078 = vmatpush.msra.mxu0 0.0
    %1079 = vmatpush.msra.mxu0 0.0
    %1080 = vmatpush.msra.mxu0 0.0
    %1081 = vmatpush.msra.mxu0 0.0
    %1082 = vmatpush.msra.mxu0 0.0
    %1083 = vmatpush.msra.mxu0 0.0
    %1084 = vmatpush.msra.mxu0 %v639
    %1085 = vmatpush.msra.mxu0 %v638
    %1086 = vmatpush.msra.mxu0 %v637
    %1087 = vmatpush.msra.mxu0 %v636
    %1088 = vmatmul.f32.gmra.mxu0 %v1070
    %v1089 = vpop.f32.mrf.mxu0
    %v1090 = vadd.f32 0.0, %v1089
    %1091 = vdwg.mxu0
    %v1092 = vadd.f32 %v1069, %v1090
    %v1093 = vxor.u32 %v1092, 2147483648
    %v1094 = vmul.f32 %v1093, 1.442695
    %v1095 = vpow.pop %v1094
    %v1096 = vadd.f32 %v1095, 1.0
    %v1097 = vrcp.pop %v1096
    %v1098 = vmul.f32 %v1096, %v1097
    %v1099 = vsub.f32 1.0, %v1098
    %v1100 = vmul.f32 %v1097, %v1099
    %v1101 = vadd.f32 %v1097, %v1100
    %vm1102 = vweird.f32 %v1096
    %vm1103 = vweird.f32 %v1097
    %vm1104 = vmor %vm1102, %vm1103
    %v1105 = vsel %vm1104, %v1097, %v1101
    %v1106 = vand.u32 2147483647, %v1096
    %vm1107 = vcmp.eq.f32.partialorder %v1106, 8.507059e+37
    %v1108 = vand.u32 %v1096, 2147483648
    %v1109 = vor.u32 1.1754944e-38, %v1108
    %v1110 = vsel %vm1107, %v1109, %v1105
    %v1111 = vmul.f32 1.0, %v1110
    %v1112 = vadd.f32 %v1090, %v688
    %1114 = vrot.lane.b32.xlu0 %v1112, 64
    %v1115 = vpop.permute.xlu0 %1114
    %v1117 = vmul.f32 %v1111, %v1115
    %1119 = vrot.lane.b32.xlu0 %v1117, 64
    %v1120 = vpop.permute.xlu0 %1119
    %v1122 = vadd.f32 %v1069, %v1120
    %v1123 = vtanh.pop %v1122
    %v1124 = vsub.f32 1.0, %v1111
    %1126 = vrot.lane.b32.xlu0 %v1123, 96
    %v1127 = vpop.permute.xlu0 %1126
    %v1129 = vmul.f32 %v1124, %v1127
    %v1130 = vmul.f32 %v1111, %v1061
    %v1131 = vadd.f32 %v1129, %v1130
    %1133 = vrot.lane.b32.xlu0 %v1131, 96
    %v1134 = vpop.permute.xlu0 %1133
    %s1136 = scalar_lea.vmem [#allocation3], 48
    %1137 = vst.msk [vmem:[%s1136] sm:$0xff] %vm355, %v1134
    %s1138 = scalar_lea.vmem [#allocation2], 56
    %v1139 = vld [vmem:[%s1138] sm:$0xff]
    %v1140 = vsel %vm355, %v1134, 0
    %1142 = vmatpush.msra.mxu0 0.0
    %1143 = vmatpush.msra.mxu0 0.0
    %1144 = vmatpush.msra.mxu0 0.0
    %1145 = vmatpush.msra.mxu0 0.0
    %1146 = vmatpush.msra.mxu0 0.0
    %1147 = vmatpush.msra.mxu0 0.0
    %1148 = vmatpush.msra.mxu0 0.0
    %1149 = vmatpush.msra.mxu0 0.0
    %1150 = vmatpush.msra.mxu0 0.0
    %1151 = vmatpush.msra.mxu0 0.0
    %1152 = vmatpush.msra.mxu0 0.0
    %1153 = vmatpush.msra.mxu0 0.0
    %1154 = vmatpush.msra.mxu0 %v639
    %1155 = vmatpush.msra.mxu0 %v638
    %1156 = vmatpush.msra.mxu0 %v637
    %1157 = vmatpush.msra.mxu0 %v636
    %1158 = vmatmul.f32.gmra.mxu0 %v1140
    %v1159 = vpop.f32.mrf.mxu0
    %v1160 = vadd.f32 0.0, %v1159
    %1161 = vdwg.mxu0
    %v1162 = vadd.f32 %v1139, %v1160
    %v1163 = vxor.u32 %v1162, 2147483648
    %v1164 = vmul.f32 %v1163, 1.442695
    %v1165 = vpow.pop %v1164
    %v1166 = vadd.f32 %v1165, 1.0
    %v1167 = vrcp.pop %v1166
    %v1168 = vmul.f32 %v1166, %v1167
    %v1169 = vsub.f32 1.0, %v1168
    %v1170 = vmul.f32 %v1167, %v1169
    %v1171 = vadd.f32 %v1167, %v1170
    %vm1172 = vweird.f32 %v1166
    %vm1173 = vweird.f32 %v1167
    %vm1174 = vmor %vm1172, %vm1173
    %v1175 = vsel %vm1174, %v1167, %v1171
    %v1176 = vand.u32 2147483647, %v1166
    %vm1177 = vcmp.eq.f32.partialorder %v1176, 8.507059e+37
    %v1178 = vand.u32 %v1166, 2147483648
    %v1179 = vor.u32 1.1754944e-38, %v1178
    %v1180 = vsel %vm1177, %v1179, %v1175
    %v1181 = vmul.f32 1.0, %v1180
    %v1182 = vadd.f32 %v1160, %v688
    %1184 = vrot.lane.b32.xlu0 %v1182, 64
    %v1185 = vpop.permute.xlu0 %1184
    %v1187 = vmul.f32 %v1181, %v1185
    %1189 = vrot.lane.b32.xlu0 %v1187, 64
    %v1190 = vpop.permute.xlu0 %1189
    %v1192 = vadd.f32 %v1139, %v1190
    %v1193 = vtanh.pop %v1192
    %v1194 = vsub.f32 1.0, %v1181
    %1196 = vrot.lane.b32.xlu0 %v1193, 96
    %v1197 = vpop.permute.xlu0 %1196
    %v1199 = vmul.f32 %v1194, %v1197
    %v1200 = vmul.f32 %v1181, %v1131
    %v1201 = vadd.f32 %v1199, %v1200
    %1203 = vrot.lane.b32.xlu0 %v1201, 96
    %v1204 = vpop.permute.xlu0 %1203
    %s1206 = scalar_lea.vmem [#allocation3], 56
    %1207 = vst.msk [vmem:[%s1206] sm:$0xff] %vm355, %v1204
    %v1208 = vld [vmem:[#allocation3] sm:$0xff]
    %v1209 = vld [vmem:[#allocation3 + $0x8] sm:$0xff]
    %v1210 = vld [vmem:[#allocation3 + $0x10] sm:$0xff]
    %v1211 = vld [vmem:[#allocation3 + $0x18] sm:$0xff]
    %v1212 = vld [vmem:[#allocation3 + $0x20] sm:$0xff]
    %v1213 = vld [vmem:[#allocation3 + $0x28] sm:$0xff]
    %v1214 = vld [vmem:[#allocation3 + $0x30] sm:$0xff]
    %v1215 = vld [vmem:[#allocation3 + $0x38] sm:$0xff]
    %s1216 = scalar_lea.vmem %s13, 32
    %v1217 = vld [vmem:[%s1216] sm:$0xff]
    %v1218 = vld [vmem:[%s1216 + $0x8] sm:$0xff]
    %v1219 = vld [vmem:[%s1216 + $0x10] sm:$0xff]
    %v1220 = vld [vmem:[%s1216 + $0x18] sm:$0xff]
    %s1221 = scalar_lea.vmem [#allocation21], 1
    %v1222 = vld [vmem:[%s1221] sm:$0x1]
    %v1224 = vperm.slane %v1222, 0
    %v1227 = vsel %vm355, %v1208, 0
    %v1230 = vsel %vm355, %v1209, 0
    %v1233 = vsel %vm355, %v1210, 0
    %v1236 = vsel %vm355, %v1211, 0
    %v1239 = vsel %vm355, %v1212, 0
    %v1242 = vsel %vm355, %v1213, 0
    %v1245 = vsel %vm355, %v1214, 0
    %v1248 = vsel %vm355, %v1215, 0
    %1250 = vmatpush.msra.mxu0 0.0
    %1251 = vmatpush.msra.mxu0 0.0
    %1252 = vmatpush.msra.mxu0 0.0
    %1253 = vmatpush.msra.mxu0 0.0
    %1254 = vmatpush.msra.mxu0 0.0
    %1255 = vmatpush.msra.mxu0 0.0
    %1256 = vmatpush.msra.mxu0 0.0
    %1257 = vmatpush.msra.mxu0 0.0
    %1258 = vmatpush.msra.mxu0 0.0
    %1259 = vmatpush.msra.mxu0 0.0
    %1260 = vmatpush.msra.mxu0 0.0
    %1261 = vmatpush.msra.mxu0 0.0
    %1262 = vmatpush.msra.mxu0 %v1220
    %1263 = vmatpush.msra.mxu0 %v1219
    %1264 = vmatpush.msra.mxu0 %v1218
    %1265 = vmatpush.msra.mxu0 %v1217
    %1266 = vmatmul.f32.gmra.mxu0 %v1227
    %v1267 = vpop.f32.mrf.mxu0
    %v1268 = vadd.f32 %v1224, %v1267
    %1269 = vmatmul.f32.gmra.mxu0 %v1230
    %v1270 = vpop.f32.mrf.mxu0
    %v1271 = vadd.f32 %v1224, %v1270
    %1272 = vmatmul.f32.gmra.mxu0 %v1233
    %v1273 = vpop.f32.mrf.mxu0
    %v1274 = vadd.f32 %v1224, %v1273
    %1275 = vmatmul.f32.gmra.mxu0 %v1236
    %v1276 = vpop.f32.mrf.mxu0
    %v1277 = vadd.f32 %v1224, %v1276
    %1278 = vmatmul.f32.gmra.mxu0 %v1239
    %v1279 = vpop.f32.mrf.mxu0
    %v1280 = vadd.f32 %v1224, %v1279
    %1281 = vmatmul.f32.gmra.mxu0 %v1242
    %v1282 = vpop.f32.mrf.mxu0
    %v1283 = vadd.f32 %v1224, %v1282
    %1284 = vmatmul.f32.gmra.mxu0 %v1245
    %v1285 = vpop.f32.mrf.mxu0
    %v1286 = vadd.f32 %v1224, %v1285
    %1287 = vmatmul.f32.gmra.mxu0 %v1248
    %v1288 = vpop.f32.mrf.mxu0
    %v1289 = vadd.f32 %v1224, %v1288
    %1290 = vdwg.mxu0
    %1291 = vst.msk [vmem:[#allocation2] sm:$0xff] %vm627, %v1268
    %1292 = vst.msk [vmem:[#allocation2 + $0x8] sm:$0xff] %vm627, %v1271
    %1293 = vst.msk [vmem:[#allocation2 + $0x10] sm:$0xff] %vm627, %v1274
    %1294 = vst.msk [vmem:[#allocation2 + $0x18] sm:$0xff] %vm627, %v1277
    %1295 = vst.msk [vmem:[#allocation2 + $0x20] sm:$0xff] %vm627, %v1280
    %1296 = vst.msk [vmem:[#allocation2 + $0x28] sm:$0xff] %vm627, %v1283
    %1297 = vst.msk [vmem:[#allocation2 + $0x30] sm:$0xff] %vm627, %v1286
    %1298 = vst.msk [vmem:[#allocation2 + $0x38] sm:$0xff] %vm627, %v1289
    %s1299 = scalar_lea.vmem [#allocation20], 32
    %v1300 = vld [vmem:[%s1299] sm:$0xff]
    %v1301 = vld [vmem:[%s1299 + $0x8] sm:$0xff]
    %v1302 = vld [vmem:[%s1299 + $0x10] sm:$0xff]
    %v1303 = vld [vmem:[%s1299 + $0x18] sm:$0xff]
    %s1304 = scalar_lea.vmem [#allocation23], 1
    %v1305 = vld [vmem:[%s1304] sm:$0x1]
    %v1307 = vperm.slane %v1305, 0
    %v1308 = vld [vmem:[#allocation2] sm:$0xff]
    %1309 = vmatpush.msra.mxu0 0.0
    %1310 = vmatpush.msra.mxu0 0.0
    %1311 = vmatpush.msra.mxu0 0.0
    %1312 = vmatpush.msra.mxu0 0.0
    %1313 = vmatpush.msra.mxu0 0.0
    %1314 = vmatpush.msra.mxu0 0.0
    %1315 = vmatpush.msra.mxu0 0.0
    %1316 = vmatpush.msra.mxu0 0.0
    %1317 = vmatpush.msra.mxu0 0.0
    %1318 = vmatpush.msra.mxu0 0.0
    %1319 = vmatpush.msra.mxu0 0.0
    %1320 = vmatpush.msra.mxu0 0.0
    %1321 = vmatpush.msra.mxu0 %v1303
    %1322 = vmatpush.msra.mxu0 %v1302
    %1323 = vmatpush.msra.mxu0 %v1301
    %1324 = vmatpush.msra.mxu0 %v1300
    %1325 = vmatmul.f32.gmra.mxu0 %v645
    %v1326 = vpop.f32.mrf.mxu0
    %v1327 = vadd.f32 0.0, %v1326
    %1328 = vdwg.mxu0
    %v1329 = vadd.f32 %v1308, %v1327
    %v1330 = vxor.u32 %v1329, 2147483648
    %v1331 = vmul.f32 %v1330, 1.442695
    %v1332 = vpow.pop %v1331
    %v1333 = vadd.f32 %v1332, 1.0
    %v1334 = vrcp.pop %v1333
    %v1335 = vmul.f32 %v1333, %v1334
    %v1336 = vsub.f32 1.0, %v1335
    %v1337 = vmul.f32 %v1334, %v1336
    %v1338 = vadd.f32 %v1334, %v1337
    %vm1339 = vweird.f32 %v1333
    %vm1340 = vweird.f32 %v1334
    %vm1341 = vmor %vm1339, %vm1340
    %v1342 = vsel %vm1341, %v1334, %v1338
    %v1343 = vand.u32 2147483647, %v1333
    %vm1344 = vcmp.eq.f32.partialorder %v1343, 8.507059e+37
    %v1345 = vand.u32 %v1333, 2147483648
    %v1346 = vor.u32 1.1754944e-38, %v1345
    %v1347 = vsel %vm1344, %v1346, %v1342
    %v1348 = vmul.f32 1.0, %v1347
    %1349 = vrot.lane.b32.xlu0 %v1307, 64
    %v1350 = vpop.permute.xlu0 %1349
    %v1352 = vadd.f32 %v1327, %v1350
    %1354 = vrot.lane.b32.xlu0 %v1352, 64
    %v1355 = vpop.permute.xlu0 %1354
    %v1357 = vmul.f32 %v1348, %v1355
    %1359 = vrot.lane.b32.xlu0 %v1357, 64
    %v1360 = vpop.permute.xlu0 %1359
    %v1362 = vadd.f32 %v1308, %v1360
    %v1363 = vtanh.pop %v1362
    %v1364 = vsub.f32 1.0, %v1348
    %1366 = vrot.lane.b32.xlu0 %v1363, 96
    %v1367 = vpop.permute.xlu0 %1366
    %v1369 = vmul.f32 %v1364, %v1367
    %v1370 = vmul.f32 %v1348, %v709
    %v1371 = vadd.f32 %v1369, %v1370
    %1373 = vrot.lane.b32.xlu0 %v1371, 96
    %v1374 = vpop.permute.xlu0 %1373
    %1376 = vst.msk [vmem:[#allocation3] sm:$0xff] %vm355, %v1374
    %v1377 = vld [vmem:[%s718] sm:$0xff]
    %v1378 = vsel %vm355, %v1374, 0
    %1380 = vmatpush.msra.mxu0 0.0
    %1381 = vmatpush.msra.mxu0 0.0
    %1382 = vmatpush.msra.mxu0 0.0
    %1383 = vmatpush.msra.mxu0 0.0
    %1384 = vmatpush.msra.mxu0 0.0
    %1385 = vmatpush.msra.mxu0 0.0
    %1386 = vmatpush.msra.mxu0 0.0
    %1387 = vmatpush.msra.mxu0 0.0
    %1388 = vmatpush.msra.mxu0 0.0
    %1389 = vmatpush.msra.mxu0 0.0
    %1390 = vmatpush.msra.mxu0 0.0
    %1391 = vmatpush.msra.mxu0 0.0
    %1392 = vmatpush.msra.mxu0 %v1303
    %1393 = vmatpush.msra.mxu0 %v1302
    %1394 = vmatpush.msra.mxu0 %v1301
    %1395 = vmatpush.msra.mxu0 %v1300
    %1396 = vmatmul.f32.gmra.mxu0 %v1378
    %v1397 = vpop.f32.mrf.mxu0
    %v1398 = vadd.f32 0.0, %v1397
    %1399 = vdwg.mxu0
    %v1400 = vadd.f32 %v1377, %v1398
    %v1401 = vxor.u32 %v1400, 2147483648
    %v1402 = vmul.f32 %v1401, 1.442695
    %v1403 = vpow.pop %v1402
    %v1404 = vadd.f32 %v1403, 1.0
    %v1405 = vrcp.pop %v1404
    %v1406 = vmul.f32 %v1404, %v1405
    %v1407 = vsub.f32 1.0, %v1406
    %v1408 = vmul.f32 %v1405, %v1407
    %v1409 = vadd.f32 %v1405, %v1408
    %vm1410 = vweird.f32 %v1404
    %vm1411 = vweird.f32 %v1405
    %vm1412 = vmor %vm1410, %vm1411
    %v1413 = vsel %vm1412, %v1405, %v1409
    %v1414 = vand.u32 2147483647, %v1404
    %vm1415 = vcmp.eq.f32.partialorder %v1414, 8.507059e+37
    %v1416 = vand.u32 %v1404, 2147483648
    %v1417 = vor.u32 1.1754944e-38, %v1416
    %v1418 = vsel %vm1415, %v1417, %v1413
    %v1419 = vmul.f32 1.0, %v1418
    %v1420 = vadd.f32 %v1398, %v1350
    %1422 = vrot.lane.b32.xlu0 %v1420, 64
    %v1423 = vpop.permute.xlu0 %1422
    %v1425 = vmul.f32 %v1419, %v1423
    %1427 = vrot.lane.b32.xlu0 %v1425, 64
    %v1428 = vpop.permute.xlu0 %1427
    %v1430 = vadd.f32 %v1377, %v1428
    %v1431 = vtanh.pop %v1430
    %v1432 = vsub.f32 1.0, %v1419
    %1434 = vrot.lane.b32.xlu0 %v1431, 96
    %v1435 = vpop.permute.xlu0 %1434
    %v1437 = vmul.f32 %v1432, %v1435
    %v1438 = vmul.f32 %v1419, %v1371
    %v1439 = vadd.f32 %v1437, %v1438
    %1441 = vrot.lane.b32.xlu0 %v1439, 96
    %v1442 = vpop.permute.xlu0 %1441
    %1444 = vst.msk [vmem:[%s786] sm:$0xff] %vm355, %v1442
    %v1445 = vld [vmem:[%s788] sm:$0xff]
    %v1446 = vsel %vm355, %v1442, 0
    %1448 = vmatpush.msra.mxu0 0.0
    %1449 = vmatpush.msra.mxu0 0.0
    %1450 = vmatpush.msra.mxu0 0.0
    %1451 = vmatpush.msra.mxu0 0.0
    %1452 = vmatpush.msra.mxu0 0.0
    %1453 = vmatpush.msra.mxu0 0.0
    %1454 = vmatpush.msra.mxu0 0.0
    %1455 = vmatpush.msra.mxu0 0.0
    %1456 = vmatpush.msra.mxu0 0.0
    %1457 = vmatpush.msra.mxu0 0.0
    %1458 = vmatpush.msra.mxu0 0.0
    %1459 = vmatpush.msra.mxu0 0.0
    %1460 = vmatpush.msra.mxu0 %v1303
    %1461 = vmatpush.msra.mxu0 %v1302
    %1462 = vmatpush.msra.mxu0 %v1301
    %1463 = vmatpush.msra.mxu0 %v1300
    %1464 = vmatmul.f32.gmra.mxu0 %v1446
    %v1465 = vpop.f32.mrf.mxu0
    %v1466 = vadd.f32 0.0, %v1465
    %1467 = vdwg.mxu0
    %v1468 = vadd.f32 %v1445, %v1466
    %v1469 = vxor.u32 %v1468, 2147483648
    %v1470 = vmul.f32 %v1469, 1.442695
    %v1471 = vpow.pop %v1470
    %v1472 = vadd.f32 %v1471, 1.0
    %v1473 = vrcp.pop %v1472
    %v1474 = vmul.f32 %v1472, %v1473
    %v1475 = vsub.f32 1.0, %v1474
    %v1476 = vmul.f32 %v1473, %v1475
    %v1477 = vadd.f32 %v1473, %v1476
    %vm1478 = vweird.f32 %v1472
    %vm1479 = vweird.f32 %v1473
    %vm1480 = vmor %vm1478, %vm1479
    %v1481 = vsel %vm1480, %v1473, %v1477
    %v1482 = vand.u32 2147483647, %v1472
    %vm1483 = vcmp.eq.f32.partialorder %v1482, 8.507059e+37
    %v1484 = vand.u32 %v1472, 2147483648
    %v1485 = vor.u32 1.1754944e-38, %v1484
    %v1486 = vsel %vm1483, %v1485, %v1481
    %v1487 = vmul.f32 1.0, %v1486
    %v1488 = vadd.f32 %v1466, %v1350
    %1490 = vrot.lane.b32.xlu0 %v1488, 64
    %v1491 = vpop.permute.xlu0 %1490
    %v1493 = vmul.f32 %v1487, %v1491
    %1495 = vrot.lane.b32.xlu0 %v1493, 64
    %v1496 = vpop.permute.xlu0 %1495
    %v1498 = vadd.f32 %v1445, %v1496
    %v1499 = vtanh.pop %v1498
    %v1500 = vsub.f32 1.0, %v1487
    %1502 = vrot.lane.b32.xlu0 %v1499, 96
    %v1503 = vpop.permute.xlu0 %1502
    %v1505 = vmul.f32 %v1500, %v1503
    %v1506 = vmul.f32 %v1487, %v1439
    %v1507 = vadd.f32 %v1505, %v1506
    %1509 = vrot.lane.b32.xlu0 %v1507, 96
    %v1510 = vpop.permute.xlu0 %1509
    %1512 = vst.msk [vmem:[%s856] sm:$0xff] %vm355, %v1510
    %v1513 = vld [vmem:[%s858] sm:$0xff]
    %v1514 = vsel %vm355, %v1510, 0
    %1516 = vmatpush.msra.mxu0 0.0
    %1517 = vmatpush.msra.mxu0 0.0
    %1518 = vmatpush.msra.mxu0 0.0
    %1519 = vmatpush.msra.mxu0 0.0
    %1520 = vmatpush.msra.mxu0 0.0
    %1521 = vmatpush.msra.mxu0 0.0
    %1522 = vmatpush.msra.mxu0 0.0
    %1523 = vmatpush.msra.mxu0 0.0
    %1524 = vmatpush.msra.mxu0 0.0
    %1525 = vmatpush.msra.mxu0 0.0
    %1526 = vmatpush.msra.mxu0 0.0
    %1527 = vmatpush.msra.mxu0 0.0
    %1528 = vmatpush.msra.mxu0 %v1303
    %1529 = vmatpush.msra.mxu0 %v1302
    %1530 = vmatpush.msra.mxu0 %v1301
    %1531 = vmatpush.msra.mxu0 %v1300
    %1532 = vmatmul.f32.gmra.mxu0 %v1514
    %v1533 = vpop.f32.mrf.mxu0
    %v1534 = vadd.f32 0.0, %v1533
    %1535 = vdwg.mxu0
    %v1536 = vadd.f32 %v1513, %v1534
    %v1537 = vxor.u32 %v1536, 2147483648
    %v1538 = vmul.f32 %v1537, 1.442695
    %v1539 = vpow.pop %v1538
    %v1540 = vadd.f32 %v1539, 1.0
    %v1541 = vrcp.pop %v1540
    %v1542 = vmul.f32 %v1540, %v1541
    %v1543 = vsub.f32 1.0, %v1542
    %v1544 = vmul.f32 %v1541, %v1543
    %v1545 = vadd.f32 %v1541, %v1544
    %vm1546 = vweird.f32 %v1540
    %vm1547 = vweird.f32 %v1541
    %vm1548 = vmor %vm1546, %vm1547
    %v1549 = vsel %vm1548, %v1541, %v1545
    %v1550 = vand.u32 2147483647, %v1540
    %vm1551 = vcmp.eq.f32.partialorder %v1550, 8.507059e+37
    %v1552 = vand.u32 %v1540, 2147483648
    %v1553 = vor.u32 1.1754944e-38, %v1552
    %v1554 = vsel %vm1551, %v1553, %v1549
    %v1555 = vmul.f32 1.0, %v1554
    %v1556 = vadd.f32 %v1534, %v1350
    %1558 = vrot.lane.b32.xlu0 %v1556, 64
    %v1559 = vpop.permute.xlu0 %1558
    %v1561 = vmul.f32 %v1555, %v1559
    %1563 = vrot.lane.b32.xlu0 %v1561, 64
    %v1564 = vpop.permute.xlu0 %1563
    %v1566 = vadd.f32 %v1513, %v1564
    %v1567 = vtanh.pop %v1566
    %v1568 = vsub.f32 1.0, %v1555
    %1570 = vrot.lane.b32.xlu0 %v1567, 96
    %v1571 = vpop.permute.xlu0 %1570
    %v1573 = vmul.f32 %v1568, %v1571
    %v1574 = vmul.f32 %v1555, %v1507
    %v1575 = vadd.f32 %v1573, %v1574
    %1577 = vrot.lane.b32.xlu0 %v1575, 96
    %v1578 = vpop.permute.xlu0 %1577
    %1580 = vst.msk [vmem:[%s926] sm:$0xff] %vm355, %v1578
    %v1581 = vld [vmem:[%s928] sm:$0xff]
    %v1582 = vsel %vm355, %v1578, 0
    %1584 = vmatpush.msra.mxu0 0.0
    %1585 = vmatpush.msra.mxu0 0.0
    %1586 = vmatpush.msra.mxu0 0.0
    %1587 = vmatpush.msra.mxu0 0.0
    %1588 = vmatpush.msra.mxu0 0.0
    %1589 = vmatpush.msra.mxu0 0.0
    %1590 = vmatpush.msra.mxu0 0.0
    %1591 = vmatpush.msra.mxu0 0.0
    %1592 = vmatpush.msra.mxu0 0.0
    %1593 = vmatpush.msra.mxu0 0.0
    %1594 = vmatpush.msra.mxu0 0.0
    %1595 = vmatpush.msra.mxu0 0.0
    %1596 = vmatpush.msra.mxu0 %v1303
    %1597 = vmatpush.msra.mxu0 %v1302
    %1598 = vmatpush.msra.mxu0 %v1301
    %1599 = vmatpush.msra.mxu0 %v1300
    %1600 = vmatmul.f32.gmra.mxu0 %v1582
    %v1601 = vpop.f32.mrf.mxu0
    %v1602 = vadd.f32 0.0, %v1601
    %1603 = vdwg.mxu0
    %v1604 = vadd.f32 %v1581, %v1602
    %v1605 = vxor.u32 %v1604, 2147483648
    %v1606 = vmul.f32 %v1605, 1.442695
    %v1607 = vpow.pop %v1606
    %v1608 = vadd.f32 %v1607, 1.0
    %v1609 = vrcp.pop %v1608
    %v1610 = vmul.f32 %v1608, %v1609
    %v1611 = vsub.f32 1.0, %v1610
    %v1612 = vmul.f32 %v1609, %v1611
    %v1613 = vadd.f32 %v1609, %v1612
    %vm1614 = vweird.f32 %v1608
    %vm1615 = vweird.f32 %v1609
    %vm1616 = vmor %vm1614, %vm1615
    %v1617 = vsel %vm1616, %v1609, %v1613
    %v1618 = vand.u32 2147483647, %v1608
    %vm1619 = vcmp.eq.f32.partialorder %v1618, 8.507059e+37
    %v1620 = vand.u32 %v1608, 2147483648
    %v1621 = vor.u32 1.1754944e-38, %v1620
    %v1622 = vsel %vm1619, %v1621, %v1617
    %v1623 = vmul.f32 1.0, %v1622
    %v1624 = vadd.f32 %v1602, %v1350
    %1626 = vrot.lane.b32.xlu0 %v1624, 64
    %v1627 = vpop.permute.xlu0 %1626
    %v1629 = vmul.f32 %v1623, %v1627
    %1631 = vrot.lane.b32.xlu0 %v1629, 64
    %v1632 = vpop.permute.xlu0 %1631
    %v1634 = vadd.f32 %v1581, %v1632
    %v1635 = vtanh.pop %v1634
    %v1636 = vsub.f32 1.0, %v1623
    %1638 = vrot.lane.b32.xlu0 %v1635, 96
    %v1639 = vpop.permute.xlu0 %1638
    %v1641 = vmul.f32 %v1636, %v1639
    %v1642 = vmul.f32 %v1623, %v1575
    %v1643 = vadd.f32 %v1641, %v1642
    %1645 = vrot.lane.b32.xlu0 %v1643, 96
    %v1646 = vpop.permute.xlu0 %1645
    %1648 = vst.msk [vmem:[%s996] sm:$0xff] %vm355, %v1646
    %v1649 = vld [vmem:[%s998] sm:$0xff]
    %v1650 = vsel %vm355, %v1646, 0
    %1652 = vmatpush.msra.mxu0 0.0
    %1653 = vmatpush.msra.mxu0 0.0
    %1654 = vmatpush.msra.mxu0 0.0
    %1655 = vmatpush.msra.mxu0 0.0
    %1656 = vmatpush.msra.mxu0 0.0
    %1657 = vmatpush.msra.mxu0 0.0
    %1658 = vmatpush.msra.mxu0 0.0
    %1659 = vmatpush.msra.mxu0 0.0
    %1660 = vmatpush.msra.mxu0 0.0
    %1661 = vmatpush.msra.mxu0 0.0
    %1662 = vmatpush.msra.mxu0 0.0
    %1663 = vmatpush.msra.mxu0 0.0
    %1664 = vmatpush.msra.mxu0 %v1303
    %1665 = vmatpush.msra.mxu0 %v1302
    %1666 = vmatpush.msra.mxu0 %v1301
    %1667 = vmatpush.msra.mxu0 %v1300
    %1668 = vmatmul.f32.gmra.mxu0 %v1650
    %v1669 = vpop.f32.mrf.mxu0
    %v1670 = vadd.f32 0.0, %v1669
    %1671 = vdwg.mxu0
    %v1672 = vadd.f32 %v1649, %v1670
    %v1673 = vxor.u32 %v1672, 2147483648
    %v1674 = vmul.f32 %v1673, 1.442695
    %v1675 = vpow.pop %v1674
    %v1676 = vadd.f32 %v1675, 1.0
    %v1677 = vrcp.pop %v1676
    %v1678 = vmul.f32 %v1676, %v1677
    %v1679 = vsub.f32 1.0, %v1678
    %v1680 = vmul.f32 %v1677, %v1679
    %v1681 = vadd.f32 %v1677, %v1680
    %vm1682 = vweird.f32 %v1676
    %vm1683 = vweird.f32 %v1677
    %vm1684 = vmor %vm1682, %vm1683
    %v1685 = vsel %vm1684, %v1677, %v1681
    %v1686 = vand.u32 2147483647, %v1676
    %vm1687 = vcmp.eq.f32.partialorder %v1686, 8.507059e+37
    %v1688 = vand.u32 %v1676, 2147483648
    %v1689 = vor.u32 1.1754944e-38, %v1688
    %v1690 = vsel %vm1687, %v1689, %v1685
    %v1691 = vmul.f32 1.0, %v1690
    %v1692 = vadd.f32 %v1670, %v1350
    %1694 = vrot.lane.b32.xlu0 %v1692, 64
    %v1695 = vpop.permute.xlu0 %1694
    %v1697 = vmul.f32 %v1691, %v1695
    %1699 = vrot.lane.b32.xlu0 %v1697, 64
    %v1700 = vpop.permute.xlu0 %1699
    %v1702 = vadd.f32 %v1649, %v1700
    %v1703 = vtanh.pop %v1702
    %v1704 = vsub.f32 1.0, %v1691
    %1706 = vrot.lane.b32.xlu0 %v1703, 96
    %v1707 = vpop.permute.xlu0 %1706
    %v1709 = vmul.f32 %v1704, %v1707
    %v1710 = vmul.f32 %v1691, %v1643
    %v1711 = vadd.f32 %v1709, %v1710
    %1713 = vrot.lane.b32.xlu0 %v1711, 96
    %v1714 = vpop.permute.xlu0 %1713
    %1716 = vst.msk [vmem:[%s1066] sm:$0xff] %vm355, %v1714
    %v1717 = vld [vmem:[%s1068] sm:$0xff]
    %v1718 = vsel %vm355, %v1714, 0
    %1720 = vmatpush.msra.mxu0 0.0
    %1721 = vmatpush.msra.mxu0 0.0
    %1722 = vmatpush.msra.mxu0 0.0
    %1723 = vmatpush.msra.mxu0 0.0
    %1724 = vmatpush.msra.mxu0 0.0
    %1725 = vmatpush.msra.mxu0 0.0
    %1726 = vmatpush.msra.mxu0 0.0
    %1727 = vmatpush.msra.mxu0 0.0
    %1728 = vmatpush.msra.mxu0 0.0
    %1729 = vmatpush.msra.mxu0 0.0
    %1730 = vmatpush.msra.mxu0 0.0
    %1731 = vmatpush.msra.mxu0 0.0
    %1732 = vmatpush.msra.mxu0 %v1303
    %1733 = vmatpush.msra.mxu0 %v1302
    %1734 = vmatpush.msra.mxu0 %v1301
    %1735 = vmatpush.msra.mxu0 %v1300
    %1736 = vmatmul.f32.gmra.mxu0 %v1718
    %v1737 = vpop.f32.mrf.mxu0
    %v1738 = vadd.f32 0.0, %v1737
    %1739 = vdwg.mxu0
    %v1740 = vadd.f32 %v1717, %v1738
    %v1741 = vxor.u32 %v1740, 2147483648
    %v1742 = vmul.f32 %v1741, 1.442695
    %v1743 = vpow.pop %v1742
    %v1744 = vadd.f32 %v1743, 1.0
    %v1745 = vrcp.pop %v1744
    %v1746 = vmul.f32 %v1744, %v1745
    %v1747 = vsub.f32 1.0, %v1746
    %v1748 = vmul.f32 %v1745, %v1747
    %v1749 = vadd.f32 %v1745, %v1748
    %vm1750 = vweird.f32 %v1744
    %vm1751 = vweird.f32 %v1745
    %vm1752 = vmor %vm1750, %vm1751
    %v1753 = vsel %vm1752, %v1745, %v1749
    %v1754 = vand.u32 2147483647, %v1744
    %vm1755 = vcmp.eq.f32.partialorder %v1754, 8.507059e+37
    %v1756 = vand.u32 %v1744, 2147483648
    %v1757 = vor.u32 1.1754944e-38, %v1756
    %v1758 = vsel %vm1755, %v1757, %v1753
    %v1759 = vmul.f32 1.0, %v1758
    %v1760 = vadd.f32 %v1738, %v1350
    %1762 = vrot.lane.b32.xlu0 %v1760, 64
    %v1763 = vpop.permute.xlu0 %1762
    %v1765 = vmul.f32 %v1759, %v1763
    %1767 = vrot.lane.b32.xlu0 %v1765, 64
    %v1768 = vpop.permute.xlu0 %1767
    %v1770 = vadd.f32 %v1717, %v1768
    %v1771 = vtanh.pop %v1770
    %v1772 = vsub.f32 1.0, %v1759
    %1774 = vrot.lane.b32.xlu0 %v1771, 96
    %v1775 = vpop.permute.xlu0 %1774
    %v1777 = vmul.f32 %v1772, %v1775
    %v1778 = vmul.f32 %v1759, %v1711
    %v1779 = vadd.f32 %v1777, %v1778
    %1781 = vrot.lane.b32.xlu0 %v1779, 96
    %v1782 = vpop.permute.xlu0 %1781
    %1784 = vst.msk [vmem:[%s1136] sm:$0xff] %vm355, %v1782
    %v1785 = vld [vmem:[%s1138] sm:$0xff]
    %v1786 = vsel %vm355, %v1782, 0
    %1788 = vmatpush.msra.mxu0 0.0
    %1789 = vmatpush.msra.mxu0 0.0
    %1790 = vmatpush.msra.mxu0 0.0
    %1791 = vmatpush.msra.mxu0 0.0
    %1792 = vmatpush.msra.mxu0 0.0
    %1793 = vmatpush.msra.mxu0 0.0
    %1794 = vmatpush.msra.mxu0 0.0
    %1795 = vmatpush.msra.mxu0 0.0
    %1796 = vmatpush.msra.mxu0 0.0
    %1797 = vmatpush.msra.mxu0 0.0
    %1798 = vmatpush.msra.mxu0 0.0
    %1799 = vmatpush.msra.mxu0 0.0
    %1800 = vmatpush.msra.mxu0 %v1303
    %1801 = vmatpush.msra.mxu0 %v1302
    %1802 = vmatpush.msra.mxu0 %v1301
    %1803 = vmatpush.msra.mxu0 %v1300
    %1804 = vmatmul.f32.gmra.mxu0 %v1786
    %v1805 = vpop.f32.mrf.mxu0
    %v1806 = vadd.f32 0.0, %v1805
    %1807 = vdwg.mxu0
    %v1808 = vadd.f32 %v1785, %v1806
    %v1809 = vxor.u32 %v1808, 2147483648
    %v1810 = vmul.f32 %v1809, 1.442695
    %v1811 = vpow.pop %v1810
    %v1812 = vadd.f32 %v1811, 1.0
    %v1813 = vrcp.pop %v1812
    %v1814 = vmul.f32 %v1812, %v1813
    %v1815 = vsub.f32 1.0, %v1814
    %v1816 = vmul.f32 %v1813, %v1815
    %v1817 = vadd.f32 %v1813, %v1816
    %vm1818 = vweird.f32 %v1812
    %vm1819 = vweird.f32 %v1813
    %vm1820 = vmor %vm1818, %vm1819
    %v1821 = vsel %vm1820, %v1813, %v1817
    %v1822 = vand.u32 2147483647, %v1812
    %vm1823 = vcmp.eq.f32.partialorder %v1822, 8.507059e+37
    %v1824 = vand.u32 %v1812, 2147483648
    %v1825 = vor.u32 1.1754944e-38, %v1824
    %v1826 = vsel %vm1823, %v1825, %v1821
    %v1827 = vmul.f32 1.0, %v1826
    %v1828 = vadd.f32 %v1806, %v1350
    %1830 = vrot.lane.b32.xlu0 %v1828, 64
    %v1831 = vpop.permute.xlu0 %1830
    %v1833 = vmul.f32 %v1827, %v1831
    %1835 = vrot.lane.b32.xlu0 %v1833, 64
    %v1836 = vpop.permute.xlu0 %1835
    %v1838 = vadd.f32 %v1785, %v1836
    %v1839 = vtanh.pop %v1838
    %v1840 = vsub.f32 1.0, %v1827
    %1842 = vrot.lane.b32.xlu0 %v1839, 96
    %v1843 = vpop.permute.xlu0 %1842
    %v1845 = vmul.f32 %v1840, %v1843
    %v1846 = vmul.f32 %v1827, %v1779
    %v1847 = vadd.f32 %v1845, %v1846
    %1849 = vrot.lane.b32.xlu0 %v1847, 96
    %v1850 = vpop.permute.xlu0 %1849
    %1852 = vst.msk [vmem:[%s1206] sm:$0xff] %vm355, %v1850
    %v1853 = vld [vmem:[#allocation3] sm:$0xff]
    %v1854 = vld [vmem:[#allocation3 + $0x8] sm:$0xff]
    %v1855 = vld [vmem:[#allocation3 + $0x10] sm:$0xff]
    %v1856 = vld [vmem:[#allocation3 + $0x18] sm:$0xff]
    %v1857 = vld [vmem:[#allocation3 + $0x20] sm:$0xff]
    %v1858 = vld [vmem:[#allocation3 + $0x28] sm:$0xff]
    %v1859 = vld [vmem:[#allocation3 + $0x30] sm:$0xff]
    %v1860 = vld [vmem:[#allocation3 + $0x38] sm:$0xff]
    %v1861 = vmax.f32 %v1853, 0.0
    %v1862 = vmax.f32 %v1854, 0.0
    %v1863 = vmax.f32 %v1855, 0.0
    %v1864 = vmax.f32 %v1856, 0.0
    %v1865 = vmax.f32 %v1857, 0.0
    %v1866 = vmax.f32 %v1858, 0.0
    %v1867 = vmax.f32 %v1859, 0.0
    %v1868 = vmax.f32 %v1860, 0.0
    %v1869 = vld [vmem:[%s17] sm:$0xff]
    %v1870 = vld [vmem:[%s17 + $0x8] sm:$0xff]
    %v1871 = vld [vmem:[%s17 + $0x10] sm:$0xff]
    %v1872 = vld [vmem:[%s17 + $0x18] sm:$0xff]
    %v1873 = vld [vmem:[%s18] sm:$0x1]
    %v1875 = vperm.slane %v1873, 0
    %v1878 = vsel %vm355, %v1861, 0
    %v1881 = vsel %vm355, %v1862, 0
    %v1884 = vsel %vm355, %v1863, 0
    %v1887 = vsel %vm355, %v1864, 0
    %v1890 = vsel %vm355, %v1865, 0
    %v1893 = vsel %vm355, %v1866, 0
    %v1896 = vsel %vm355, %v1867, 0
    %v1899 = vsel %vm355, %v1868, 0
    %1901 = vmatpush.msra.mxu0 0.0
    %1902 = vmatpush.msra.mxu0 0.0
    %1903 = vmatpush.msra.mxu0 0.0
    %1904 = vmatpush.msra.mxu0 0.0
    %1905 = vmatpush.msra.mxu0 0.0
    %1906 = vmatpush.msra.mxu0 0.0
    %1907 = vmatpush.msra.mxu0 0.0
    %1908 = vmatpush.msra.mxu0 0.0
    %1909 = vmatpush.msra.mxu0 0.0
    %1910 = vmatpush.msra.mxu0 0.0
    %1911 = vmatpush.msra.mxu0 0.0
    %1912 = vmatpush.msra.mxu0 0.0
    %1913 = vmatpush.msra.mxu0 %v1872
    %1914 = vmatpush.msra.mxu0 %v1871
    %1915 = vmatpush.msra.mxu0 %v1870
    %1916 = vmatpush.msra.mxu0 %v1869
    %1917 = vmatmul.f32.gmra.mxu0 %v1878
    %v1918 = vpop.f32.mrf.mxu0
    %v1919 = vadd.f32 %v1875, %v1918
    %1920 = vmatmul.f32.gmra.mxu0 %v1881
    %v1921 = vpop.f32.mrf.mxu0
    %v1922 = vadd.f32 %v1875, %v1921
    %1923 = vmatmul.f32.gmra.mxu0 %v1884
    %v1924 = vpop.f32.mrf.mxu0
    %v1925 = vadd.f32 %v1875, %v1924
    %1926 = vmatmul.f32.gmra.mxu0 %v1887
    %v1927 = vpop.f32.mrf.mxu0
    %v1928 = vadd.f32 %v1875, %v1927
    %1929 = vmatmul.f32.gmra.mxu0 %v1890
    %v1930 = vpop.f32.mrf.mxu0
    %v1931 = vadd.f32 %v1875, %v1930
    %1932 = vmatmul.f32.gmra.mxu0 %v1893
    %v1933 = vpop.f32.mrf.mxu0
    %v1934 = vadd.f32 %v1875, %v1933
    %1935 = vmatmul.f32.gmra.mxu0 %v1896
    %v1936 = vpop.f32.mrf.mxu0
    %v1937 = vadd.f32 %v1875, %v1936
    %1938 = vmatmul.f32.gmra.mxu0 %v1899
    %v1939 = vpop.f32.mrf.mxu0
    %v1940 = vadd.f32 %v1875, %v1939
    %1941 = vdwg.mxu0
    %v1942 = vsel %vm282, %v1919, -inf
    %1943 = vmax.xlane.f32.xlu0 %v1942
    %v1944 = vpop.xlane.xlu0 %1943
    %v1945 = vsel %vm282, %v1922, -inf
    %1946 = vmax.xlane.f32.xlu0 %v1945
    %v1947 = vpop.xlane.xlu0 %1946
    %v1948 = vsel %vm282, %v1925, -inf
    %1949 = vmax.xlane.f32.xlu0 %v1948
    %v1950 = vpop.xlane.xlu0 %1949
    %v1951 = vsel %vm282, %v1928, -inf
    %1952 = vmax.xlane.f32.xlu0 %v1951
    %v1953 = vpop.xlane.xlu0 %1952
    %v1954 = vsel %vm282, %v1931, -inf
    %1955 = vmax.xlane.f32.xlu0 %v1954
    %v1956 = vpop.xlane.xlu0 %1955
    %v1957 = vsel %vm282, %v1934, -inf
    %1958 = vmax.xlane.f32.xlu0 %v1957
    %v1959 = vpop.xlane.xlu0 %1958
    %v1960 = vsel %vm282, %v1937, -inf
    %1961 = vmax.xlane.f32.xlu0 %v1960
    %v1962 = vpop.xlane.xlu0 %1961
    %v1963 = vsel %vm282, %v1940, -inf
    %1964 = vmax.xlane.f32.xlu0 %v1963
    %v1965 = vpop.xlane.xlu0 %1964
    %v1966 = vsub.f32 %v1919, %v1944
    %v1967 = vsub.f32 %v1922, %v1947
    %v1968 = vsub.f32 %v1925, %v1950
    %v1969 = vsub.f32 %v1928, %v1953
    %v1970 = vsub.f32 %v1931, %v1956
    %v1971 = vsub.f32 %v1934, %v1959
    %v1972 = vsub.f32 %v1937, %v1962
    %v1973 = vsub.f32 %v1940, %v1965
    %v1974 = vmul.f32 %v1966, 1.442695
    %v1975 = vpow.pop %v1974
    %v1976 = vmul.f32 %v1967, 1.442695
    %v1977 = vpow.pop %v1976
    %v1978 = vmul.f32 %v1968, 1.442695
    %v1979 = vpow.pop %v1978
    %v1980 = vmul.f32 %v1969, 1.442695
    %v1981 = vpow.pop %v1980
    %v1982 = vmul.f32 %v1970, 1.442695
    %v1983 = vpow.pop %v1982
    %v1984 = vmul.f32 %v1971, 1.442695
    %v1985 = vpow.pop %v1984
    %v1986 = vmul.f32 %v1972, 1.442695
    %v1987 = vpow.pop %v1986
    %v1988 = vmul.f32 %v1973, 1.442695
    %v1989 = vpow.pop %v1988
    %v1990 = vsel %vm282, %v1975, 0.0
    %1991 = vadd.xlane.f32.xlu0 %v1990
    %v1992 = vpop.xlane.xlu0 %1991
    %v1993 = vsel %vm282, %v1977, 0.0
    %1994 = vadd.xlane.f32.xlu0 %v1993
    %v1995 = vpop.xlane.xlu0 %1994
    %v1996 = vsel %vm282, %v1979, 0.0
    %1997 = vadd.xlane.f32.xlu0 %v1996
    %v1998 = vpop.xlane.xlu0 %1997
    %v1999 = vsel %vm282, %v1981, 0.0
    %2000 = vadd.xlane.f32.xlu0 %v1999
    %v2001 = vpop.xlane.xlu0 %2000
    %v2002 = vsel %vm282, %v1983, 0.0
    %2003 = vadd.xlane.f32.xlu0 %v2002
    %v2004 = vpop.xlane.xlu0 %2003
    %v2005 = vsel %vm282, %v1985, 0.0
    %2006 = vadd.xlane.f32.xlu0 %v2005
    %v2007 = vpop.xlane.xlu0 %2006
    %v2008 = vsel %vm282, %v1987, 0.0
    %2009 = vadd.xlane.f32.xlu0 %v2008
    %v2010 = vpop.xlane.xlu0 %2009
    %v2011 = vsel %vm282, %v1989, 0.0
    %2012 = vadd.xlane.f32.xlu0 %v2011
    %v2013 = vpop.xlane.xlu0 %2012
    %v2014 = vlog2.pop %v1992
    %v2015 = vmul.f32 %v2014, 0.6931472
    %v2016 = vlog2.pop %v1995
    %v2017 = vmul.f32 %v2016, 0.6931472
    %v2018 = vlog2.pop %v1998
    %v2019 = vmul.f32 %v2018, 0.6931472
    %v2020 = vlog2.pop %v2001
    %v2021 = vmul.f32 %v2020, 0.6931472
    %v2022 = vlog2.pop %v2004
    %v2023 = vmul.f32 %v2022, 0.6931472
    %v2024 = vlog2.pop %v2007
    %v2025 = vmul.f32 %v2024, 0.6931472
    %v2026 = vlog2.pop %v2010
    %v2027 = vmul.f32 %v2026, 0.6931472
    %v2028 = vlog2.pop %v2013
    %v2029 = vmul.f32 %v2028, 0.6931472
    %v2030 = vadd.f32 %v1944, %v2015
    %v2031 = vadd.f32 %v1947, %v2017
    %v2032 = vadd.f32 %v1950, %v2019
    %v2033 = vadd.f32 %v1953, %v2021
    %v2034 = vadd.f32 %v1956, %v2023
    %v2035 = vadd.f32 %v1959, %v2025
    %v2036 = vadd.f32 %v1962, %v2027
    %v2037 = vadd.f32 %v1965, %v2029
    %v2038 = vsub.f32 %v1919, %v2030
    %v2039 = vsub.f32 %v1922, %v2031
    %v2040 = vsub.f32 %v1925, %v2032
    %v2041 = vsub.f32 %v1928, %v2033
    %v2042 = vsub.f32 %v1931, %v2034
    %v2043 = vsub.f32 %v1934, %v2035
    %v2044 = vsub.f32 %v1937, %v2036
    %v2045 = vsub.f32 %v1940, %v2037
    %2046 = vst.msk [vmem:[%s19] sm:$0xff] %vm282, %v2038
    %2047 = vst.msk [vmem:[%s19 + $0x8] sm:$0xff] %vm282, %v2039
    %2048 = vst.msk [vmem:[%s19 + $0x10] sm:$0xff] %vm282, %v2040
    %2049 = vst.msk [vmem:[%s19 + $0x18] sm:$0xff] %vm282, %v2041
    %2050 = vst.msk [vmem:[%s19 + $0x20] sm:$0xff] %vm282, %v2042
    %2051 = vst.msk [vmem:[%s19 + $0x28] sm:$0xff] %vm282, %v2043
    %2052 = vst.msk [vmem:[%s19 + $0x30] sm:$0xff] %vm282, %v2044
    %2053 = vst.msk [vmem:[%s19 + $0x38] sm:$0xff] %vm282, %v2045
    // Predicated region
    $region130: #{tpu_custom_call.1} parent=1 // pred_check
      _
    $region131: #{tpu_custom_call.1} parent=1 // pred_check_branch
      %2055 = sbr.rel (0) target = $region133
    $region132: #{tpu_custom_call.1} parent=1 // pred_region
      _
    $region133: #{tpu_custom_call.1} parent=1 // pred_fallthru
      _
    // Predicated region
    $region134: #{tpu_custom_call.1} parent=1 // pred_check
      _
    $region135: #{tpu_custom_call.1} parent=1 // pred_check_branch
      %2057 = sbr.rel (0) target = $region137
    $region136: #{tpu_custom_call.1} parent=1 // pred_region
      _
    $region137: #{tpu_custom_call.1} parent=1 // pred_fallthru
      _
    %2058 = vsyncpa [#allocation5], 1
    %2059 = vsyncpa [#allocation7], 1
    %2060 = vsyncpa [#allocation10], 1
    %2061 = vsyncpa [#allocation13], 1
    %2062 = vsyncpa [#allocation16], 1
    %2063 = vsyncpa [#allocation19], 1
    %2064 = vsyncpa [#allocation22], 1

</llo_original>
